<compile_context>
chip_gen: v5e
topology: v5e:2x2
jax: 0.10.0
libtpu: 0.0.40
codegen_flags: <defaults>
</compile_context>

<pallas_src>
import math

import jax
import jax.numpy as jnp
from jax.experimental import pallas as pl
from jax.experimental.pallas import tpu as pltpu

HEAD = 128        # fixed in the module (self.head = 128)
EPS = 1e-5        # nn.LayerNorm default eps


def block_kernel(x_ref, gamma_ref, win_ref, wout_ref, o_ref, act_ref):
    b_blk, s, dim = x_ref.shape
    m_rows = b_blk * s
    num_heads = dim // HEAD
    w_dtype = win_ref.dtype            # bf16 for all MXU operands

    # ---- LayerNorm(dim, bias=False), f32 math on the folded (M, dim) slab ----
    x = x_ref[...].astype(jnp.float32).reshape(m_rows, dim)
    mean = jnp.mean(x, axis=-1, keepdims=True)
    xc = x - mean
    var = jnp.mean(xc * xc, axis=-1, keepdims=True)
    xn = (xc * jax.lax.rsqrt(var + EPS) * gamma_ref[0]).astype(w_dtype)

    # ---- input projection, one dot per quadrant (no (M, 4*dim) intermediate).
    #      q already carries the 1/sqrt(head) scale (folded into the weights).
    q = jnp.dot(xn, win_ref[:, 0 * dim:1 * dim], preferred_element_type=jnp.float32)
    k = jnp.dot(xn, win_ref[:, 1 * dim:2 * dim], preferred_element_type=jnp.float32)
    i = jnp.dot(xn, win_ref[:, 2 * dim:3 * dim], preferred_element_type=jnp.float32)
    t = jnp.dot(xn, win_ref[:, 3 * dim:4 * dim], preferred_element_type=jnp.float32)

    # ---- gated value: v = sigmoid(i) * i * t  (SiLU(i) * t), f32 VPU/EUP ----
    v = jax.nn.sigmoid(i) * i * t                              # (M, dim) f32

    # v occupies the first `dim` lanes of the fused activation slab.
    act_ref[:, 0:dim] = v.astype(w_dtype)

    # ---- multi-head attention (non-causal), batched over the B_blk fold.
    #      bf16 MXU operands, f32 softmax math.  Each head writes its output
    #      into its lane-aligned slice of the activation slab.
    for hh in range(num_heads):                                # static, small loop
        cols = slice(hh * HEAD, (hh + 1) * HEAD)
        qh = q[:, cols].astype(w_dtype).reshape(b_blk, s, HEAD)
        kh = k[:, cols].astype(w_dtype).reshape(b_blk, s, HEAD)
        vh = v[:, cols].astype(w_dtype).reshape(b_blk, s, HEAD)
        sc = jnp.einsum("bqd,bkd->bqk", qh, kh,
                        preferred_element_type=jnp.float32)    # (B_blk, S, S) f32
        mx = jnp.max(sc, axis=-1, keepdims=True)
        p = jnp.exp(sc - mx)
        denom = jnp.sum(p, axis=-1, keepdims=True)
        p = (p * pl.reciprocal(denom, approx=True)).astype(w_dtype)   # EUP slot
        h_bh = jnp.einsum("bqk,bkd->bqd", p, vh,
                          preferred_element_type=jnp.float32)  # (B_blk, S, HEAD)
        act_ref[:, dim + hh * HEAD: dim + (hh + 1) * HEAD] = (
            h_bh.reshape(m_rows, HEAD).astype(w_dtype))

    # ---- single fused output projection: (M, 2*dim) @ (2*dim, dim) ----
    y = jnp.dot(act_ref[...], wout_ref[...], preferred_element_type=jnp.float32)
    o_ref[...] = y.reshape(b_blk, s, dim).astype(o_ref.dtype)


def _pick_b_blk(N, S, target_rows=256, min_rows=128):
    """Largest divisor of N with b_blk*S <= target_rows; prefer an even grid
    (v7x dual TensorCore) as long as each step still has >= min_rows rows."""
    divs = [d for d in range(1, N + 1) if N % d == 0]
    cands = [d for d in divs if d * S <= target_rows] or [1]
    b = max(cands)
    if (N // b) % 2 != 0:
        alts = [d for d in cands
                if (N // d) % 2 == 0 and d * S >= min(min_rows, b * S)]
        if alts:
            b = max(alts)
    return b


def block_forward(x, gamma, w_in_t, w_out_t, *, b_blk=None):
    """x: (N, S, dim) bf16 (or f32); gamma: (1, dim) f32;
    w_in_t: (dim, 4*dim) bf16 with 1/sqrt(head) folded into the q columns;
    w_out_t: (2*dim, dim) bf16.  Returns (N, S, dim) in x.dtype."""
    N, S, dim = x.shape
    assert dim % HEAD == 0

    if b_blk is None:
        b_blk = _pick_b_blk(N, S)
    assert N % b_blk == 0
    grid = N // b_blk
    m_rows = b_blk * S

    return pl.pallas_call(
        block_kernel,
        out_shape=jax.ShapeDtypeStruct((N, S, dim), x.dtype),
        grid_spec=pltpu.PrefetchScalarGridSpec(
            num_scalar_prefetch=0,
            grid=(grid,),
            in_specs=[
                pl.BlockSpec((b_blk, S, dim), lambda n: (n, 0, 0)),
                pl.BlockSpec((1, dim), lambda n: (0, 0)),
                pl.BlockSpec((dim, 4 * dim), lambda n: (0, 0)),
                pl.BlockSpec((2 * dim, dim), lambda n: (0, 0)),
            ],
            out_specs=pl.BlockSpec((b_blk, S, dim), lambda n: (n, 0, 0)),
            scratch_shapes=[pltpu.VMEM((m_rows, 2 * dim), jnp.bfloat16)],
        ),
        compiler_params=pltpu.CompilerParams(
            dimension_semantics=("parallel",)),
        # TODO(synk): when scaling dim (>=1024) or S (>=128): single-buffer the
        # constant-index weight BlockSpecs (pipeline_mode=pl.Buffered(1)), set
        # vmem_limit_bytes explicitly, and switch the attention section to a
        # query-tiled online-softmax (flash) loop instead of the full (B,S,S)
        # score tensor; at these shapes everything fits the scoped VMEM.
    )(x, gamma, w_in_t, w_out_t)


def reference(x, gamma, w_in_t, w_out_t):
    """Pure-JAX (f32) reference matching the PyTorch forward (unscaled Win)."""
    N, S, dim = x.shape
    mean = jnp.mean(x, -1, keepdims=True)
    xc = x - mean
    var = jnp.mean(xc * xc, -1, keepdims=True)
    xn = xc * jax.lax.rsqrt(var + EPS) * gamma[0]
    qkit = xn @ w_in_t
    q, k, i, t = jnp.split(qkit, 4, axis=-1)
    v = jax.nn.sigmoid(i) * i * t
    nh = dim // HEAD
    qh = q.reshape(N, S, nh, HEAD)
    kh = k.reshape(N, S, nh, HEAD)
    vh = v.reshape(N, S, nh, HEAD)
    s = jnp.einsum("bqhd,bkhd->bhqk", qh, kh) / math.sqrt(HEAD)
    p = jax.nn.softmax(s, axis=-1)
    h = jnp.einsum("bhqk,bkhd->bqhd", p, vh).reshape(N, S, dim)
    return jnp.concatenate([v, h], -1) @ w_out_t


if __name__ == "__main__":
    # head=128 is fixed in the module, so dim must be a multiple of 128 ->
    # dim=256 (2 heads).  N=16, S=16 gives b_blk=8 (M=128 rows/step) with an
    # even 2-step grid (v7x-friendly); on a single step it would be M=256.
    N, S, dim = 16, 16, 256
    num_blocks = 1

    key = jax.random.PRNGKey(0)
    kx, kin, kout = jax.random.split(key, 3)

    x = jax.random.normal(kx, (N, S, dim), dtype=jnp.float32)
    x_bf = x.astype(jnp.bfloat16)                    # bf16 activation I/O

    # LayerNorm weight init (ones), no bias.
    gamma = jnp.ones((1, dim), dtype=jnp.float32)

    # nn.Linear weights are (out, in); initialized with the module's std,
    # transposed for the kernel and cast to bf16 for the MXU.
    w_in = jax.random.normal(kin, (4 * dim, dim), dtype=jnp.float32) * dim ** (-0.5)
    w_out = (jax.random.normal(kout, (dim, 2 * dim), dtype=jnp.float32)
             * (2 * dim) ** (-0.5) * num_blocks ** (-0.5))

    w_in_t_bf = w_in.T.astype(jnp.bfloat16)          # (dim, 4*dim) reference weights
    w_out_t_bf = w_out.T.astype(jnp.bfloat16)        # (2*dim, dim)

    # One-time host-side weight prep: fold 1/sqrt(head) into the q columns so
    # the kernel skips the per-step (M, dim) VPU multiply.
    w_in_kern = (w_in_t_bf.astype(jnp.float32)
                 .at[:, :dim].multiply(HEAD ** (-0.5))
                 .astype(jnp.bfloat16))

    y = block_forward(x_bf, gamma, w_in_kern, w_out_t_bf)
    y = jax.block_until_ready(y)

    # Reference runs in f32 on the same bf16-rounded inputs/weights, so the
    # check measures kernel error: bf16 MXU operands (projections + attention),
    # bf16 activation slab/output, and the approximate softmax reciprocal.
    y_ref = reference(x_bf.astype(jnp.float32), gamma,
                      w_in_t_bf.astype(jnp.float32),
                      w_out_t_bf.astype(jnp.float32))
    err = float(jnp.max(jnp.abs(y.astype(jnp.float32) - y_ref)))
    assert err < 1e-1, f"max abs error {err}"

    print("KERNEL_OK")
</pallas_src>

<mosaic_0001>
module attributes {stable_mosaic.version = 11 : i64} {
  func.func @block_kernel(%arg0: i32, %arg1: memref<8x16x256xbf16, #tpu.memory_space<vmem>>, %arg2: memref<1x256xf32, #tpu.memory_space<vmem>>, %arg3: memref<256x1024xbf16, #tpu.memory_space<vmem>>, %arg4: memref<512x256xbf16, #tpu.memory_space<vmem>>, %arg5: memref<8x16x256xbf16, #tpu.memory_space<vmem>>, %arg6: memref<128x512xbf16, #tpu.memory_space<vmem>>) attributes {dimension_semantics = [#tpu.dimension_semantics<parallel>], iteration_bounds = array<i64: 2>, scalar_prefetch = 0 : i64, scratch_operands = 1 : i64, tpu.core_type = #tpu.core_type<tc>, window_params = [{transform_indices = @transform_0, window_bounds = array<i64: 8, 16, 256>}, {pipeline_mode = #tpu.pipeline_mode<synchronous>, transform_indices = @transform_1, window_bounds = array<i64: 1, 256>}, {pipeline_mode = #tpu.pipeline_mode<synchronous>, transform_indices = @transform_2, window_bounds = array<i64: 256, 1024>}, {pipeline_mode = #tpu.pipeline_mode<synchronous>, transform_indices = @transform_3, window_bounds = array<i64: 512, 256>}, {transform_indices = @transform_4, window_bounds = array<i64: 8, 16, 256>}]} {
    %c0 = arith.constant 0 : index
    %c0_0 = arith.constant 0 : index
    %c0_1 = arith.constant 0 : index
    %0 = vector.load %arg1[%c0, %c0_0, %c0_1] : memref<8x16x256xbf16, #tpu.memory_space<vmem>>, vector<8x16x256xbf16>
    %1 = arith.extf %0 : vector<8x16x256xbf16> to vector<8x16x256xf32>
    %2 = vector.shape_cast %1 : vector<8x16x256xf32> to vector<128x256xf32>
    %cst = arith.constant dense<0.000000e+00> : vector<128xf32>
    %3 = vector.multi_reduction <add>, %2, %cst [1] : vector<128x256xf32> to vector<128xf32>
    %4 = vector.shape_cast %3 : vector<128xf32> to vector<128x1xf32>
    %cst_2 = arith.constant 2.560000e+02 : f32
    %5 = vector.broadcast %cst_2 : f32 to vector<128x1xf32>
    %6 = arith.divf %4, %5 : vector<128x1xf32>
    %7 = vector.broadcast %6 : vector<128x1xf32> to vector<128x256xf32>
    %8 = arith.subf %2, %7 : vector<128x256xf32>
    %9 = arith.mulf %8, %8 : vector<128x256xf32>
    %cst_3 = arith.constant dense<0.000000e+00> : vector<128xf32>
    %10 = vector.multi_reduction <add>, %9, %cst_3 [1] : vector<128x256xf32> to vector<128xf32>
    %11 = vector.shape_cast %10 : vector<128xf32> to vector<128x1xf32>
    %cst_4 = arith.constant 2.560000e+02 : f32
    %12 = vector.broadcast %cst_4 : f32 to vector<128x1xf32>
    %13 = arith.divf %11, %12 : vector<128x1xf32>
    %cst_5 = arith.constant 9.99999974E-6 : f32
    %14 = vector.broadcast %cst_5 : f32 to vector<128x1xf32>
    %15 = arith.addf %13, %14 : vector<128x1xf32>
    %16 = math.rsqrt %15 : vector<128x1xf32>
    %17 = vector.broadcast %16 : vector<128x1xf32> to vector<128x256xf32>
    %18 = arith.mulf %8, %17 : vector<128x256xf32>
    %c0_6 = arith.constant 0 : index
    %c0_7 = arith.constant 0 : index
    %19 = vector.load %arg2[%c0_6, %c0_7] : memref<1x256xf32, #tpu.memory_space<vmem>>, vector<1x256xf32>
    %20 = vector.shape_cast %19 : vector<1x256xf32> to vector<256xf32>
    %21 = vector.shape_cast %20 : vector<256xf32> to vector<1x256xf32>
    %22 = vector.broadcast %21 : vector<1x256xf32> to vector<128x256xf32>
    %23 = arith.mulf %18, %22 : vector<128x256xf32>
    %24 = arith.truncf %23 : vector<128x256xf32> to vector<128x256xbf16>
    %c0_8 = arith.constant 0 : index
    %c0_9 = arith.constant 0 : index
    %25 = vector.load %arg3[%c0_8, %c0_9] : memref<256x1024xbf16, #tpu.memory_space<vmem>>, vector<256x256xbf16>
    %cst_10 = arith.constant dense<0.000000e+00> : vector<128x256xf32>
    %26 = tpu.matmul %24, %25, %cst_10 {dimension_numbers = #tpu.dot_dimension_numbers<[1], [0], [0], [1], [0, 0, 1, 1], [], []>} : vector<128x256xbf16>, vector<256x256xbf16>, vector<128x256xf32> -> vector<128x256xf32>
    %c0_11 = arith.constant 0 : index
    %c256 = arith.constant 256 : index
    %27 = vector.load %arg3[%c0_11, %c256] : memref<256x1024xbf16, #tpu.memory_space<vmem>>, vector<256x256xbf16>
    %cst_12 = arith.constant dense<0.000000e+00> : vector<128x256xf32>
    %28 = tpu.matmul %24, %27, %cst_12 {dimension_numbers = #tpu.dot_dimension_numbers<[1], [0], [0], [1], [0, 0, 1, 1], [], []>} : vector<128x256xbf16>, vector<256x256xbf16>, vector<128x256xf32> -> vector<128x256xf32>
    %c0_13 = arith.constant 0 : index
    %c512 = arith.constant 512 : index
    %29 = vector.load %arg3[%c0_13, %c512] : memref<256x1024xbf16, #tpu.memory_space<vmem>>, vector<256x256xbf16>
    %cst_14 = arith.constant dense<0.000000e+00> : vector<128x256xf32>
    %30 = tpu.matmul %24, %29, %cst_14 {dimension_numbers = #tpu.dot_dimension_numbers<[1], [0], [0], [1], [0, 0, 1, 1], [], []>} : vector<128x256xbf16>, vector<256x256xbf16>, vector<128x256xf32> -> vector<128x256xf32>
    %c0_15 = arith.constant 0 : index
    %c768 = arith.constant 768 : index
    %31 = vector.load %arg3[%c0_15, %c768] : memref<256x1024xbf16, #tpu.memory_space<vmem>>, vector<256x256xbf16>
    %cst_16 = arith.constant dense<0.000000e+00> : vector<128x256xf32>
    %32 = tpu.matmul %24, %31, %cst_16 {dimension_numbers = #tpu.dot_dimension_numbers<[1], [0], [0], [1], [0, 0, 1, 1], [], []>} : vector<128x256xbf16>, vector<256x256xbf16>, vector<128x256xf32> -> vector<128x256xf32>
    %33 = arith.negf %30 : vector<128x256xf32>
    %34 = math.exp %33 : vector<128x256xf32>
    %cst_17 = arith.constant 1.000000e+00 : f32
    %35 = vector.broadcast %cst_17 : f32 to vector<128x256xf32>
    %36 = arith.addf %35, %34 : vector<128x256xf32>
    %37 = arith.divf %35, %36 : vector<128x256xf32>
    %38 = arith.mulf %37, %30 : vector<128x256xf32>
    %39 = arith.mulf %38, %32 : vector<128x256xf32>
    %40 = arith.truncf %39 : vector<128x256xf32> to vector<128x256xbf16>
    %c0_18 = arith.constant 0 : index
    %c0_19 = arith.constant 0 : index
    %41 = vector.load %arg6[%c0_18, %c0_19] : memref<128x512xbf16, #tpu.memory_space<vmem>>, vector<128x256xbf16>
    tpu.vector_store %arg6[%c0_18, %c0_19], %40 {strides = array<i32>} : memref<128x512xbf16, #tpu.memory_space<vmem>>, vector<128x256xbf16>,
    %42 = vector.extract_strided_slice %26 {offsets = [0, 0], sizes = [128, 128], strides = [1, 1]} : vector<128x256xf32> to vector<128x128xf32>
    %43 = arith.truncf %42 : vector<128x128xf32> to vector<128x128xbf16>
    %44 = vector.shape_cast %43 : vector<128x128xbf16> to vector<8x16x128xbf16>
    %45 = vector.extract_strided_slice %28 {offsets = [0, 0], sizes = [128, 128], strides = [1, 1]} : vector<128x256xf32> to vector<128x128xf32>
    %46 = arith.truncf %45 : vector<128x128xf32> to vector<128x128xbf16>
    %47 = vector.shape_cast %46 : vector<128x128xbf16> to vector<8x16x128xbf16>
    %48 = vector.extract_strided_slice %39 {offsets = [0, 0], sizes = [128, 128], strides = [1, 1]} : vector<128x256xf32> to vector<128x128xf32>
    %49 = arith.truncf %48 : vector<128x128xf32> to vector<128x128xbf16>
    %50 = vector.shape_cast %49 : vector<128x128xbf16> to vector<8x16x128xbf16>
    "tpu.trace_start"() <{level = 10 : i32, message = "bqd,bkd->bqk"}> : () -> ()
    %cst_20 = arith.constant dense<0.000000e+00> : vector<8x16x16xf32>
    %51 = tpu.matmul %44, %47, %cst_20 {dimension_numbers = #tpu.dot_dimension_numbers<[2], [2], [1], [1], [0, 0, 0, 1, 1, 1], [0], [0]>} : vector<8x16x128xbf16>, vector<8x16x128xbf16>, vector<8x16x16xf32> -> vector<8x16x16xf32>
    "tpu.trace_stop"() : () -> ()
    %cst_21 = arith.constant dense<0xFF800000> : vector<8x16xf32>
    %52 = vector.multi_reduction <maximumf>, %51, %cst_21 [2] : vector<8x16x16xf32> to vector<8x16xf32>
    %53 = vector.shape_cast %52 : vector<8x16xf32> to vector<8x16x1xf32>
    %54 = vector.broadcast %53 : vector<8x16x1xf32> to vector<8x16x16xf32>
    %55 = arith.subf %51, %54 : vector<8x16x16xf32>
    %56 = math.exp %55 : vector<8x16x16xf32>
    %cst_22 = arith.constant dense<0.000000e+00> : vector<8x16xf32>
    %57 = vector.multi_reduction <add>, %56, %cst_22 [2] : vector<8x16x16xf32> to vector<8x16xf32>
    %58 = vector.shape_cast %57 : vector<8x16xf32> to vector<8x16x1xf32>
    %59 = tpu.reciprocal %58 {approx = true} : vector<8x16x1xf32> -> vector<8x16x1xf32>
    %60 = vector.broadcast %59 : vector<8x16x1xf32> to vector<8x16x16xf32>
    %61 = arith.mulf %56, %60 : vector<8x16x16xf32>
    %62 = arith.truncf %61 : vector<8x16x16xf32> to vector<8x16x16xbf16>
    "tpu.trace_start"() <{level = 10 : i32, message = "bqk,bkd->bqd"}> : () -> ()
    %cst_23 = arith.constant dense<0.000000e+00> : vector<8x16x128xf32>
    %63 = tpu.matmul %62, %50, %cst_23 {dimension_numbers = #tpu.dot_dimension_numbers<[2], [1], [1], [2], [0, 0, 0, 1, 1, 2], [0], [0]>} : vector<8x16x16xbf16>, vector<8x16x128xbf16>, vector<8x16x128xf32> -> vector<8x16x128xf32>
    "tpu.trace_stop"() : () -> ()
    %64 = vector.shape_cast %63 : vector<8x16x128xf32> to vector<128x128xf32>
    %65 = arith.truncf %64 : vector<128x128xf32> to vector<128x128xbf16>
    %c0_24 = arith.constant 0 : index
    %c256_25 = arith.constant 256 : index
    %66 = vector.load %arg6[%c0_24, %c256_25] : memref<128x512xbf16, #tpu.memory_space<vmem>>, vector<128x128xbf16>
    tpu.vector_store %arg6[%c0_24, %c256_25], %65 {strides = array<i32>} : memref<128x512xbf16, #tpu.memory_space<vmem>>, vector<128x128xbf16>,
    %67 = vector.extract_strided_slice %26 {offsets = [0, 128], sizes = [128, 128], strides = [1, 1]} : vector<128x256xf32> to vector<128x128xf32>
    %68 = arith.truncf %67 : vector<128x128xf32> to vector<128x128xbf16>
    %69 = vector.shape_cast %68 : vector<128x128xbf16> to vector<8x16x128xbf16>
    %70 = vector.extract_strided_slice %28 {offsets = [0, 128], sizes = [128, 128], strides = [1, 1]} : vector<128x256xf32> to vector<128x128xf32>
    %71 = arith.truncf %70 : vector<128x128xf32> to vector<128x128xbf16>
    %72 = vector.shape_cast %71 : vector<128x128xbf16> to vector<8x16x128xbf16>
    %73 = vector.extract_strided_slice %39 {offsets = [0, 128], sizes = [128, 128], strides = [1, 1]} : vector<128x256xf32> to vector<128x128xf32>
    %74 = arith.truncf %73 : vector<128x128xf32> to vector<128x128xbf16>
    %75 = vector.shape_cast %74 : vector<128x128xbf16> to vector<8x16x128xbf16>
    "tpu.trace_start"() <{level = 10 : i32, message = "bqd,bkd->bqk"}> : () -> ()
    %cst_26 = arith.constant dense<0.000000e+00> : vector<8x16x16xf32>
    %76 = tpu.matmul %69, %72, %cst_26 {dimension_numbers = #tpu.dot_dimension_numbers<[2], [2], [1], [1], [0, 0, 0, 1, 1, 1], [0], [0]>} : vector<8x16x128xbf16>, vector<8x16x128xbf16>, vector<8x16x16xf32> -> vector<8x16x16xf32>
    "tpu.trace_stop"() : () -> ()
    %cst_27 = arith.constant dense<0xFF800000> : vector<8x16xf32>
    %77 = vector.multi_reduction <maximumf>, %76, %cst_27 [2] : vector<8x16x16xf32> to vector<8x16xf32>
    %78 = vector.shape_cast %77 : vector<8x16xf32> to vector<8x16x1xf32>
    %79 = vector.broadcast %78 : vector<8x16x1xf32> to vector<8x16x16xf32>
    %80 = arith.subf %76, %79 : vector<8x16x16xf32>
    %81 = math.exp %80 : vector<8x16x16xf32>
    %cst_28 = arith.constant dense<0.000000e+00> : vector<8x16xf32>
    %82 = vector.multi_reduction <add>, %81, %cst_28 [2] : vector<8x16x16xf32> to vector<8x16xf32>
    %83 = vector.shape_cast %82 : vector<8x16xf32> to vector<8x16x1xf32>
    %84 = tpu.reciprocal %83 {approx = true} : vector<8x16x1xf32> -> vector<8x16x1xf32>
    %85 = vector.broadcast %84 : vector<8x16x1xf32> to vector<8x16x16xf32>
    %86 = arith.mulf %81, %85 : vector<8x16x16xf32>
    %87 = arith.truncf %86 : vector<8x16x16xf32> to vector<8x16x16xbf16>
    "tpu.trace_start"() <{level = 10 : i32, message = "bqk,bkd->bqd"}> : () -> ()
    %cst_29 = arith.constant dense<0.000000e+00> : vector<8x16x128xf32>
    %88 = tpu.matmul %87, %75, %cst_29 {dimension_numbers = #tpu.dot_dimension_numbers<[2], [1], [1], [2], [0, 0, 0, 1, 1, 2], [0], [0]>} : vector<8x16x16xbf16>, vector<8x16x128xbf16>, vector<8x16x128xf32> -> vector<8x16x128xf32>
    "tpu.trace_stop"() : () -> ()
    %89 = vector.shape_cast %88 : vector<8x16x128xf32> to vector<128x128xf32>
    %90 = arith.truncf %89 : vector<128x128xf32> to vector<128x128xbf16>
    %c0_30 = arith.constant 0 : index
    %c384 = arith.constant 384 : index
    %91 = vector.load %arg6[%c0_30, %c384] : memref<128x512xbf16, #tpu.memory_space<vmem>>, vector<128x128xbf16>
    tpu.vector_store %arg6[%c0_30, %c384], %90 {strides = array<i32>} : memref<128x512xbf16, #tpu.memory_space<vmem>>, vector<128x128xbf16>,
    %c0_31 = arith.constant 0 : index
    %c0_32 = arith.constant 0 : index
    %92 = vector.load %arg6[%c0_31, %c0_32] : memref<128x512xbf16, #tpu.memory_space<vmem>>, vector<128x512xbf16>
    %c0_33 = arith.constant 0 : index
    %c0_34 = arith.constant 0 : index
    %93 = vector.load %arg4[%c0_33, %c0_34] : memref<512x256xbf16, #tpu.memory_space<vmem>>, vector<512x256xbf16>
    %cst_35 = arith.constant dense<0.000000e+00> : vector<128x256xf32>
    %94 = tpu.matmul %92, %93, %cst_35 {dimension_numbers = #tpu.dot_dimension_numbers<[1], [0], [0], [1], [0, 0, 1, 1], [], []>} : vector<128x512xbf16>, vector<512x256xbf16>, vector<128x256xf32> -> vector<128x256xf32>
    %95 = vector.shape_cast %94 : vector<128x256xf32> to vector<8x16x256xf32>
    %96 = arith.truncf %95 : vector<8x16x256xf32> to vector<8x16x256xbf16>
    %c0_36 = arith.constant 0 : index
    %c0_37 = arith.constant 0 : index
    %c0_38 = arith.constant 0 : index
    %97 = vector.load %arg5[%c0_36, %c0_37, %c0_38] : memref<8x16x256xbf16, #tpu.memory_space<vmem>>, vector<8x16x256xbf16>
    tpu.vector_store %arg5[%c0_36, %c0_37, %c0_38], %96 {strides = array<i32>} : memref<8x16x256xbf16, #tpu.memory_space<vmem>>, vector<8x16x256xbf16>,
    return
  }
  func.func @transform_0(%arg0: i32) -> (i32, i32, i32) {
    %c0_i32 = arith.constant 0 : i32
    %c0_i32_0 = arith.constant 0 : i32
    %c0_i32_1 = arith.constant 0 : i32
    return %arg0, %c0_i32, %c0_i32_0 : i32, i32, i32
  }
  func.func @transform_1(%arg0: i32) -> (i32, i32) {
    %c0_i32 = arith.constant 0 : i32
    %c0_i32_0 = arith.constant 0 : i32
    %c0_i32_1 = arith.constant 0 : i32
    return %c0_i32, %c0_i32_0 : i32, i32
  }
  func.func @transform_2(%arg0: i32) -> (i32, i32) {
    %c0_i32 = arith.constant 0 : i32
    %c0_i32_0 = arith.constant 0 : i32
    %c0_i32_1 = arith.constant 0 : i32
    return %c0_i32, %c0_i32_0 : i32, i32
  }
  func.func @transform_3(%arg0: i32) -> (i32, i32) {
    %c0_i32 = arith.constant 0 : i32
    %c0_i32_0 = arith.constant 0 : i32
    %c0_i32_1 = arith.constant 0 : i32
    return %c0_i32, %c0_i32_0 : i32, i32
  }
  func.func @transform_4(%arg0: i32) -> (i32, i32, i32) {
    %c0_i32 = arith.constant 0 : i32
    %c0_i32_0 = arith.constant 0 : i32
    %c0_i32_1 = arith.constant 0 : i32
    return %arg0, %c0_i32, %c0_i32_0 : i32, i32, i32
  }
}

</mosaic_0001>

<llo_original>
// kernel: tpu_custom_call.1
$region0: #{tpu_custom_call.1}
  #allocation0 [shape = 'u32[]', space=smem, size = 0x4, offset = 0x4, fixed_abs, tag = 'smem constant byte address 0x4 - core index']
  #allocation1 [shape = 'u32[72,128]{1,0:T(1,128)}', space=vmem, size = 0x9000, scoped, tag = 'internal scratch']
  #allocation2 [shape = 'bf16[128,512]{1,0:T(8,128)(2,1)}', space=vmem, size = 0x20000, scoped, tag = 'scratch operand']
  %s0 = inlined_call_operand.hbm [shape: bf16[16,16,256], index: 0, kind: input, shape index: {}]
  %s1 = inlined_call_operand.hbm [shape: f32[1,256], index: 1, kind: input, shape index: {}]
  %s2 = inlined_call_operand.hbm [shape: bf16[256,1024], index: 2, kind: input, shape index: {}]
  %s3 = inlined_call_operand.hbm [shape: bf16[512,256], index: 3, kind: input, shape index: {}]
  %s4 = inlined_call_operand.hbm [shape: bf16[16,16,256], index: 4, kind: output, shape index: {}]
  %s5 = sld [smem:[#allocation0]]
  $region65: #{tpu_custom_call.1} parent=0
    _
  %s7 = ssub.s32 1, %s5
  %s8 = scalar_select 0, %s7, %s5
  $region1: #{tpu_custom_call.1} parent=0
    #allocation3 [shape = 'u8[131072]{0}', space=vmem, size = 0x20000, scoped, tag = 'input window, operand 0']
    #allocation4 [shape = 's32[2]{0}', space=sflag, size = 0x8, scoped, tag = 'scoped memory for tpu_custom_call.1']
    #allocation5 [shape = 's32[2]{0}', space=sflag, size = 0x8, scoped, tag = 'scoped memory for tpu_custom_call.1']
    #allocation6 [shape = 'u8[1024]{0}', space=vmem, size = 0x400, scoped, tag = 'input window, operand 1, single buffered']
    #allocation7 [shape = 's32[1]{0}', space=sflag, size = 0x4, scoped, tag = 'scoped memory for tpu_custom_call.1']
    #allocation8 [shape = 'u8[524288]{0}', space=vmem, size = 0x80000, scoped, tag = 'input window, operand 2, single buffered']
    #allocation9 [shape = 'u8[262144]{0}', space=vmem, size = 0x40000, scoped, tag = 'input window, operand 3, single buffered']
    #allocation10 [shape = 's32[1]{0}', space=sflag, size = 0x4, scoped, tag = 'scoped memory for tpu_custom_call.1']
    #allocation11 [shape = 'u8[131072]{0}', space=vmem, size = 0x20000, scoped, tag = 'output window, operand 0']
    %9 = vsyncpa [#allocation4], 0
    %s10 = scalar_lea.sflag [#allocation4], 1
    %11 = vsyncpa %s10, 0
    %12 = vsyncpa [#allocation7], 0
    %13 = vsyncpa [#allocation10], 0
    %14 = vsyncpa [#allocation5], 0
    %s15 = scalar_lea.sflag [#allocation5], 1
    %16 = vsyncpa %s15, 0
    loop: start=0, step=1, limit=4
    $region2: #{tpu_custom_call.1} parent=1 // loop_pre_header
      _
    $region3: #{tpu_custom_call.1} parent=1 // loop_header
      %s18 = sphi 0, %s22
      %p19 = scmp.ge.s32.totalorder %s18, 4
      %s28 = sphi 0, %s30
      %s31 = sphi 0, %s28
      %s32 = sphi 0, %s31
      %s48 = sphi 0, %s32
      %s52 = sphi 0, %s52
      %s54 = sphi 0, %s52
      %s55 = sphi 0, %s54
      %s69 = sphi 0, %s55
      %s73 = sphi 0, %s73
      %s75 = sphi 0, %s73
      %s76 = sphi 0, %s75
      %s90 = sphi 0, %s76
      %s94 = sphi 0, %s94
      %s96 = sphi 0, %s94
      %s97 = sphi 0, %s96
      %s111 = sphi 0, %s97
      %s117 = sphi 0, %s119
      %s120 = sphi 0, %s117
      %s121 = sphi 0, %s120
      %s137 = sphi 0, %s121
    $region4: #{tpu_custom_call.1} parent=1 // loop_header_branch
      %21 = sbr.rel (%p19) target = $region8
    $region5: #{tpu_custom_call.1} parent=1 // loop_body
      %s23 = ssub.s32 %s18, 1
      %s24 = ssub.s32 %s18, 2
      %s25 = sadd.s32 %s18, 1
      %s26 = ssub.s32 %s18, %s25
      %p27 = scmp.eq.s32.totalorder %s26, 0
      %s29 = sadd.s32 %s28, 1
      %s30 = scalar_select %p27, %s28, %s29
      %p33 = pneg %p27
      %p34 = scmp.eq.s32.totalorder %s18, 1
      %p35 = por %p33, %p34
      %p36 = scmp.ne.s32.totalorder %s28, %s31
      %p37 = scmp.eq.s32.totalorder %s18, 0
      %p38 = por %p36, %p37
      %p39 = scmp.ne.s32.totalorder %s28, %s31
      %p40 = scmp.eq.s32.totalorder %s23, 1
      %p41 = por %p39, %p40
      %p42 = scmp.ne.s32.totalorder %s31, %s32
      %p43 = scmp.eq.s32.totalorder %s23, 0
      %p44 = por %p42, %p43
      %p45 = scmp.ne.s32.totalorder %s31, %s32
      %p46 = scmp.eq.s32.totalorder %s24, 1
      %p47 = por %p45, %p46
      %p49 = scmp.ne.s32.totalorder %s32, %s48
      %p50 = scmp.eq.s32.totalorder %s24, 0
      %p51 = por %p49, %p50
      %s53 = sadd.s32 %s52, 1
      %p56 = scmp.eq.s32.totalorder %s18, 1
      %p57 = scmp.ne.s32.totalorder %s52, %s54
      %p58 = scmp.eq.s32.totalorder %s18, 0
      %p59 = por %p57, %p58
      %p60 = scmp.ne.s32.totalorder %s52, %s54
      %p61 = scmp.eq.s32.totalorder %s23, 1
      %p62 = por %p60, %p61
      %p63 = scmp.ne.s32.totalorder %s54, %s55
      %p64 = scmp.eq.s32.totalorder %s23, 0
      %p65 = por %p63, %p64
      %p66 = scmp.ne.s32.totalorder %s54, %s55
      %p67 = scmp.eq.s32.totalorder %s24, 1
      %p68 = por %p66, %p67
      %p70 = scmp.ne.s32.totalorder %s55, %s69
      %p71 = scmp.eq.s32.totalorder %s24, 0
      %p72 = por %p70, %p71
      %s74 = sadd.s32 %s73, 1
      %p77 = scmp.eq.s32.totalorder %s18, 1
      %p78 = scmp.ne.s32.totalorder %s73, %s75
      %p79 = scmp.eq.s32.totalorder %s18, 0
      %p80 = por %p78, %p79
      %p81 = scmp.ne.s32.totalorder %s73, %s75
      %p82 = scmp.eq.s32.totalorder %s23, 1
      %p83 = por %p81, %p82
      %p84 = scmp.ne.s32.totalorder %s75, %s76
      %p85 = scmp.eq.s32.totalorder %s23, 0
      %p86 = por %p84, %p85
      %p87 = scmp.ne.s32.totalorder %s75, %s76
      %p88 = scmp.eq.s32.totalorder %s24, 1
      %p89 = por %p87, %p88
      %p91 = scmp.ne.s32.totalorder %s76, %s90
      %p92 = scmp.eq.s32.totalorder %s24, 0
      %p93 = por %p91, %p92
      %s95 = sadd.s32 %s94, 1
      %p98 = scmp.eq.s32.totalorder %s18, 1
      %p99 = scmp.ne.s32.totalorder %s94, %s96
      %p100 = scmp.eq.s32.totalorder %s18, 0
      %p101 = por %p99, %p100
      %p102 = scmp.ne.s32.totalorder %s94, %s96
      %p103 = scmp.eq.s32.totalorder %s23, 1
      %p104 = por %p102, %p103
      %p105 = scmp.ne.s32.totalorder %s96, %s97
      %p106 = scmp.eq.s32.totalorder %s23, 0
      %p107 = por %p105, %p106
      %p108 = scmp.ne.s32.totalorder %s96, %s97
      %p109 = scmp.eq.s32.totalorder %s24, 1
      %p110 = por %p108, %p109
      %p112 = scmp.ne.s32.totalorder %s97, %s111
      %p113 = scmp.eq.s32.totalorder %s24, 0
      %p114 = por %p112, %p113
      %s115 = ssub.s32 %s18, %s25
      %p116 = scmp.eq.s32.totalorder %s115, 0
      %s118 = sadd.s32 %s117, 1
      %s119 = scalar_select %p116, %s117, %s118
      %p122 = pneg %p116
      %p123 = scmp.eq.s32.totalorder %s18, 1
      %p124 = por %p122, %p123
      %p125 = scmp.ne.s32.totalorder %s117, %s120
      %p126 = scmp.eq.s32.totalorder %s18, 0
      %p127 = por %p125, %p126
      %p128 = scmp.ne.s32.totalorder %s117, %s120
      %p129 = scmp.eq.s32.totalorder %s23, 1
      %p130 = por %p128, %p129
      %p131 = scmp.ne.s32.totalorder %s120, %s121
      %p132 = scmp.eq.s32.totalorder %s23, 0
      %p133 = por %p131, %p132
      %p134 = scmp.ne.s32.totalorder %s120, %s121
      %p135 = scmp.eq.s32.totalorder %s24, 1
      %p136 = por %p134, %p135
      %p138 = scmp.ne.s32.totalorder %s121, %s137
      %p139 = scmp.eq.s32.totalorder %s24, 0
      %p140 = por %p138, %p139
      %p141 = scmp.le.s32.totalorder 1, %s18
      %p142 = scmp.lt.s32.totalorder %s18, 3
      %p143 = pnand %p141, %p142
      %p144 = pneg %p143
      // Predicated region
      $region9: #{tpu_custom_call.1} parent=5 // pred_check
        _
      $region10: #{tpu_custom_call.1} parent=5 // pred_check_branch
        %146 = sbr.rel (%p143) target = $region12
      $region11: #{tpu_custom_call.1} parent=5 // pred_region
        %s147 = ssub.s32 %s18, 1
        // Predicated region
        $region13: #{tpu_custom_call.1} parent=11 // pred_check
          %p148 = pneg %p65
        $region14: #{tpu_custom_call.1} parent=11 // pred_check_branch
          %150 = sbr.rel (%p148) target = $region16
        $region15: #{tpu_custom_call.1} parent=11 // pred_region
          %152 = vsyncadd [#allocation7], 0
          %s154 = sshll.u32 %s1, 4
          %s155 = int_to_ptr.hbm [resolvable:$true] %s154
          %s156 = sshll.u32 [#allocation6], 4
          %s157 = int_to_ptr.vmem [resolvable:$true] %s156
          %159 = dma.hbm_to_vmem [thread:$0]  %s155, 32, %s157, [#allocation7]
        $region16: #{tpu_custom_call.1} parent=11 // pred_fallthru
          _
        // Predicated region
        $region17: #{tpu_custom_call.1} parent=11 // pred_check
          %p160 = pneg %p86
        $region18: #{tpu_custom_call.1} parent=11 // pred_check_branch
          %162 = sbr.rel (%p160) target = $region20
        $region19: #{tpu_custom_call.1} parent=11 // pred_region
          %164 = vsyncadd [#allocation7], 0
          %s165 = sshll.u32 %s2, 4
          %s166 = int_to_ptr.hbm [resolvable:$true] %s165
          %s167 = sshll.u32 [#allocation8], 4
          %s168 = int_to_ptr.vmem [resolvable:$true] %s167
          %173 = dma.hbm_to_vmem [thread:$0]  %s166, 16384, %s168, [#allocation7], 512, 512, 32
        $region20: #{tpu_custom_call.1} parent=11 // pred_fallthru
          _
        // Predicated region
        $region21: #{tpu_custom_call.1} parent=11 // pred_check
          %p174 = pneg %p107
        $region22: #{tpu_custom_call.1} parent=11 // pred_check_branch
          %176 = sbr.rel (%p174) target = $region24
        $region23: #{tpu_custom_call.1} parent=11 // pred_region
          %178 = vsyncadd [#allocation10], 0
          %s179 = sshll.u32 %s3, 4
          %s180 = int_to_ptr.hbm [resolvable:$true] %s179
          %s181 = sshll.u32 [#allocation9], 4
          %s182 = int_to_ptr.vmem [resolvable:$true] %s181
          %187 = dma.hbm_to_vmem [thread:$0]  %s180, 8192, %s182, [#allocation10], 128, 128, 8
        $region24: #{tpu_custom_call.1} parent=11 // pred_fallthru
          _
      $region12: #{tpu_custom_call.1} parent=5 // pred_fallthru
        _
      %p188 = scmp.lt.s32.totalorder %s18, 2
      // Predicated region
      $region25: #{tpu_custom_call.1} parent=5 // pred_check
        %p189 = pneg %p188
      $region26: #{tpu_custom_call.1} parent=5 // pred_check_branch
        %191 = sbr.rel (%p189) target = $region28
      $region27: #{tpu_custom_call.1} parent=5 // pred_region
        // Predicated region
        $region29: #{tpu_custom_call.1} parent=27 // pred_check
          %p192 = pneg %p38
        $region30: #{tpu_custom_call.1} parent=27 // pred_check_branch
          %194 = sbr.rel (%p192) target = $region32
        $region31: #{tpu_custom_call.1} parent=27 // pred_region
          %s195 = sand.u32 %s28, 1
          %s196 = scalar_lea.sflag [#allocation4], %s195
          %s197 = sand.u32 %s28, 1
          %s198 = smul.addr %s197, 128
          %s199 = scalar_lea.vmem [#allocation3], %s198
          %s200 = smul.u32 8, %s18
          %202 = vsyncadd %s196, 0
          %s203 = smul.addr %s200, 4
          %s204 = smul.addr %s203, 4
          %s205 = scalar_lea.hbm %s0, %s204
          %s206 = sshll.u32 %s205, 4
          %s207 = int_to_ptr.hbm [resolvable:$true] %s206
          %s208 = sshll.u32 %s199, 4
          %s209 = int_to_ptr.vmem [resolvable:$true] %s208
          %214 = dma.hbm_to_vmem [thread:$0]  %s207, 2048, %s209, %s196, 128, 128, 8
        $region32: #{tpu_custom_call.1} parent=27 // pred_fallthru
          _
      $region28: #{tpu_custom_call.1} parent=5 // pred_fallthru
        _
      %p215 = scmp.le.s32.totalorder 1, %s18
      %p216 = scmp.lt.s32.totalorder %s18, 3
      %p217 = pnand %p215, %p216
      %p218 = pneg %p217
      // Predicated region
      $region33: #{tpu_custom_call.1} parent=5 // pred_check
        _
      $region34: #{tpu_custom_call.1} parent=5 // pred_check_branch
        %220 = sbr.rel (%p217) target = $region36
      $region35: #{tpu_custom_call.1} parent=5 // pred_region
        %s221 = ssub.s32 %s18, 1
        %s222 = sand.u32 %s31, 1
        %s223 = scalar_lea.sflag [#allocation4], %s222
        %s224 = sand.u32 %s31, 1
        %s225 = smul.addr %s224, 128
        %s226 = scalar_lea.vmem [#allocation3], %s225
        // Predicated region
        $region37: #{tpu_custom_call.1} parent=35 // pred_check
          %p227 = pneg %p44
        $region38: #{tpu_custom_call.1} parent=35 // pred_check_branch
          %229 = sbr.rel (%p227) target = $region40
        $region39: #{tpu_custom_call.1} parent=35 // pred_region
          %231 = dma.done %s223, 2048
        $region40: #{tpu_custom_call.1} parent=35 // pred_fallthru
          _
        // Predicated region
        $region41: #{tpu_custom_call.1} parent=35 // pred_check
          %p232 = pneg %p65
        $region42: #{tpu_custom_call.1} parent=35 // pred_check_branch
          %234 = sbr.rel (%p232) target = $region44
        $region43: #{tpu_custom_call.1} parent=35 // pred_region
          %236 = dma.done [#allocation7], 32
        $region44: #{tpu_custom_call.1} parent=35 // pred_fallthru
          _
        // Predicated region
        $region45: #{tpu_custom_call.1} parent=35 // pred_check
          %p237 = pneg %p86
        $region46: #{tpu_custom_call.1} parent=35 // pred_check_branch
          %239 = sbr.rel (%p237) target = $region48
        $region47: #{tpu_custom_call.1} parent=35 // pred_region
          %241 = dma.done [#allocation7], 16384
        $region48: #{tpu_custom_call.1} parent=35 // pred_fallthru
          _
        // Predicated region
        $region49: #{tpu_custom_call.1} parent=35 // pred_check
          %p242 = pneg %p107
        $region50: #{tpu_custom_call.1} parent=35 // pred_check_branch
          %244 = sbr.rel (%p242) target = $region52
        $region51: #{tpu_custom_call.1} parent=35 // pred_region
          %246 = dma.done [#allocation10], 8192
        $region52: #{tpu_custom_call.1} parent=35 // pred_fallthru
          _
        %s247 = sand.u32 %s31, 1
        %s248 = scalar_lea.sflag [#allocation4], %s247
        %s249 = sand.u32 %s31, 1
        %s250 = smul.addr %s249, 128
        %s251 = scalar_lea.vmem [#allocation3], %s250
        %p252 = pneg %p44
        %p253 = pneg %p41
        %p254 = pneg %p65
        %p255 = pneg %p62
        %p256 = pneg %p86
        %p257 = pneg %p83
        %p258 = pneg %p107
        %p259 = pneg %p104
        %p260 = pneg %p133
        %p261 = pneg %p130
        %s262 = sand.u32 %s120, 1
        %s263 = scalar_lea.sflag [#allocation5], %s262
        %s264 = sand.u32 %s120, 1
        %s265 = smul.addr %s264, 128
        %s266 = scalar_lea.vmem [#allocation11], %s265
        %s267 = smul.u32 8, %s23
        %s268 = smul.u32 8, %s23
        %v270 = vld [vmem:[%s226] sm:$0xff]
        %v271 = vld [vmem:[%s226 + $0x8] sm:$0xff]
        %v272 = vld [vmem:[%s226 + $0x10] sm:$0xff]
        %v273 = vld [vmem:[%s226 + $0x18] sm:$0xff]
        %v274 = vld [vmem:[%s226 + $0x20] sm:$0xff]
        %v275 = vld [vmem:[%s226 + $0x28] sm:$0xff]
        %v276 = vld [vmem:[%s226 + $0x30] sm:$0xff]
        %v277 = vld [vmem:[%s226 + $0x38] sm:$0xff]
        %v278 = vld [vmem:[%s226 + $0x40] sm:$0xff]
        %v279 = vld [vmem:[%s226 + $0x48] sm:$0xff]
        %v280 = vld [vmem:[%s226 + $0x50] sm:$0xff]
        %v281 = vld [vmem:[%s226 + $0x58] sm:$0xff]
        %v282 = vld [vmem:[%s226 + $0x60] sm:$0xff]
        %v283 = vld [vmem:[%s226 + $0x68] sm:$0xff]
        %v284 = vld [vmem:[%s226 + $0x70] sm:$0xff]
        %v285 = vld [vmem:[%s226 + $0x78] sm:$0xff]
        %v286 = vunpack.c.l.bf16 %v270
        %v287 = vunpack.c.h.bf16 %v270
        %v288 = vunpack.c.l.bf16 %v271
        %v289 = vunpack.c.h.bf16 %v271
        %v290 = vunpack.c.l.bf16 %v272
        %v291 = vunpack.c.h.bf16 %v272
        %v292 = vunpack.c.l.bf16 %v273
        %v293 = vunpack.c.h.bf16 %v273
        %v294 = vunpack.c.l.bf16 %v274
        %v295 = vunpack.c.h.bf16 %v274
        %v296 = vunpack.c.l.bf16 %v275
        %v297 = vunpack.c.h.bf16 %v275
        %v298 = vunpack.c.l.bf16 %v276
        %v299 = vunpack.c.h.bf16 %v276
        %v300 = vunpack.c.l.bf16 %v277
        %v301 = vunpack.c.h.bf16 %v277
        %v302 = vunpack.c.l.bf16 %v278
        %v303 = vunpack.c.h.bf16 %v278
        %v304 = vunpack.c.l.bf16 %v279
        %v305 = vunpack.c.h.bf16 %v279
        %v306 = vunpack.c.l.bf16 %v280
        %v307 = vunpack.c.h.bf16 %v280
        %v308 = vunpack.c.l.bf16 %v281
        %v309 = vunpack.c.h.bf16 %v281
        %v310 = vunpack.c.l.bf16 %v282
        %v311 = vunpack.c.h.bf16 %v282
        %v312 = vunpack.c.l.bf16 %v283
        %v313 = vunpack.c.h.bf16 %v283
        %v314 = vunpack.c.l.bf16 %v284
        %v315 = vunpack.c.h.bf16 %v284
        %v316 = vunpack.c.l.bf16 %v285
        %v317 = vunpack.c.h.bf16 %v285
        %v318 = vadd.f32 %v286, %v287
        %319 = vadd.xlane.f32.xlu0 %v318
        %v320 = vpop.xlane.xlu0 %319
        %v321 = vadd.f32 %v288, %v289
        %322 = vadd.xlane.f32.xlu0 %v321
        %v323 = vpop.xlane.xlu0 %322
        %v324 = vadd.f32 %v290, %v291
        %325 = vadd.xlane.f32.xlu0 %v324
        %v326 = vpop.xlane.xlu0 %325
        %v327 = vadd.f32 %v292, %v293
        %328 = vadd.xlane.f32.xlu0 %v327
        %v329 = vpop.xlane.xlu0 %328
        %v330 = vadd.f32 %v294, %v295
        %331 = vadd.xlane.f32.xlu0 %v330
        %v332 = vpop.xlane.xlu0 %331
        %v333 = vadd.f32 %v296, %v297
        %334 = vadd.xlane.f32.xlu0 %v333
        %v335 = vpop.xlane.xlu0 %334
        %v336 = vadd.f32 %v298, %v299
        %337 = vadd.xlane.f32.xlu0 %v336
        %v338 = vpop.xlane.xlu0 %337
        %v339 = vadd.f32 %v300, %v301
        %340 = vadd.xlane.f32.xlu0 %v339
        %v341 = vpop.xlane.xlu0 %340
        %v342 = vadd.f32 %v302, %v303
        %343 = vadd.xlane.f32.xlu0 %v342
        %v344 = vpop.xlane.xlu0 %343
        %v345 = vadd.f32 %v304, %v305
        %346 = vadd.xlane.f32.xlu0 %v345
        %v347 = vpop.xlane.xlu0 %346
        %v348 = vadd.f32 %v306, %v307
        %349 = vadd.xlane.f32.xlu0 %v348
        %v350 = vpop.xlane.xlu0 %349
        %v351 = vadd.f32 %v308, %v309
        %352 = vadd.xlane.f32.xlu0 %v351
        %v353 = vpop.xlane.xlu0 %352
        %v354 = vadd.f32 %v310, %v311
        %355 = vadd.xlane.f32.xlu0 %v354
        %v356 = vpop.xlane.xlu0 %355
        %v357 = vadd.f32 %v312, %v313
        %358 = vadd.xlane.f32.xlu0 %v357
        %v359 = vpop.xlane.xlu0 %358
        %v360 = vadd.f32 %v314, %v315
        %361 = vadd.xlane.f32.xlu0 %v360
        %v362 = vpop.xlane.xlu0 %361
        %v363 = vadd.f32 %v316, %v317
        %364 = vadd.xlane.f32.xlu0 %v363
        %v365 = vpop.xlane.xlu0 %364
        %v366 = vrcp.pop 256.0
        %v367 = vmul.f32 256.0, %v366
        %v368 = vsub.f32 1.0, %v367
        %v369 = vmul.f32 %v366, %v368
        %v370 = vadd.f32 %v366, %v369
        %vm371 = vweird.f32 %v366
        %v372 = vsel %vm371, %v366, %v370
        %v373 = vmul.f32 %v320, %v372
        %v374 = vmul.f32 %v323, %v372
        %v375 = vmul.f32 %v326, %v372
        %v376 = vmul.f32 %v329, %v372
        %v377 = vmul.f32 %v332, %v372
        %v378 = vmul.f32 %v335, %v372
        %v379 = vmul.f32 %v338, %v372
        %v380 = vmul.f32 %v341, %v372
        %v381 = vmul.f32 %v344, %v372
        %v382 = vmul.f32 %v347, %v372
        %v383 = vmul.f32 %v350, %v372
        %v384 = vmul.f32 %v353, %v372
        %v385 = vmul.f32 %v356, %v372
        %v386 = vmul.f32 %v359, %v372
        %v387 = vmul.f32 %v362, %v372
        %v388 = vmul.f32 %v365, %v372
        %v389 = vsub.f32 %v286, %v373
        %v390 = vsub.f32 %v287, %v373
        %v391 = vsub.f32 %v288, %v374
        %v392 = vsub.f32 %v289, %v374
        %v393 = vsub.f32 %v290, %v375
        %v394 = vsub.f32 %v291, %v375
        %v395 = vsub.f32 %v292, %v376
        %v396 = vsub.f32 %v293, %v376
        %v397 = vsub.f32 %v294, %v377
        %v398 = vsub.f32 %v295, %v377
        %v399 = vsub.f32 %v296, %v378
        %v400 = vsub.f32 %v297, %v378
        %v401 = vsub.f32 %v298, %v379
        %v402 = vsub.f32 %v299, %v379
        %v403 = vsub.f32 %v300, %v380
        %v404 = vsub.f32 %v301, %v380
        %v405 = vsub.f32 %v302, %v381
        %v406 = vsub.f32 %v303, %v381
        %v407 = vsub.f32 %v304, %v382
        %v408 = vsub.f32 %v305, %v382
        %v409 = vsub.f32 %v306, %v383
        %v410 = vsub.f32 %v307, %v383
        %v411 = vsub.f32 %v308, %v384
        %v412 = vsub.f32 %v309, %v384
        %v413 = vsub.f32 %v310, %v385
        %v414 = vsub.f32 %v311, %v385
        %v415 = vsub.f32 %v312, %v386
        %v416 = vsub.f32 %v313, %v386
        %v417 = vsub.f32 %v314, %v387
        %v418 = vsub.f32 %v315, %v387
        %v419 = vsub.f32 %v316, %v388
        %v420 = vsub.f32 %v317, %v388
        %v421 = vmul.f32 %v389, %v389
        %v422 = vmul.f32 %v390, %v390
        %v423 = vmul.f32 %v391, %v391
        %v424 = vmul.f32 %v392, %v392
        %v425 = vmul.f32 %v393, %v393
        %v426 = vmul.f32 %v394, %v394
        %v427 = vmul.f32 %v395, %v395
        %v428 = vmul.f32 %v396, %v396
        %v429 = vmul.f32 %v397, %v397
        %v430 = vmul.f32 %v398, %v398
        %v431 = vmul.f32 %v399, %v399
        %v432 = vmul.f32 %v400, %v400
        %v433 = vmul.f32 %v401, %v401
        %v434 = vmul.f32 %v402, %v402
        %v435 = vmul.f32 %v403, %v403
        %v436 = vmul.f32 %v404, %v404
        %v437 = vmul.f32 %v405, %v405
        %v438 = vmul.f32 %v406, %v406
        %v439 = vmul.f32 %v407, %v407
        %v440 = vmul.f32 %v408, %v408
        %v441 = vmul.f32 %v409, %v409
        %v442 = vmul.f32 %v410, %v410
        %v443 = vmul.f32 %v411, %v411
        %v444 = vmul.f32 %v412, %v412
        %v445 = vmul.f32 %v413, %v413
        %v446 = vmul.f32 %v414, %v414
        %v447 = vmul.f32 %v415, %v415
        %v448 = vmul.f32 %v416, %v416
        %v449 = vmul.f32 %v417, %v417
        %v450 = vmul.f32 %v418, %v418
        %v451 = vmul.f32 %v419, %v419
        %v452 = vmul.f32 %v420, %v420
        %v453 = vadd.f32 %v421, %v422
        %454 = vadd.xlane.f32.xlu0 %v453
        %v455 = vpop.xlane.xlu0 %454
        %v456 = vadd.f32 %v423, %v424
        %457 = vadd.xlane.f32.xlu0 %v456
        %v458 = vpop.xlane.xlu0 %457
        %v459 = vadd.f32 %v425, %v426
        %460 = vadd.xlane.f32.xlu0 %v459
        %v461 = vpop.xlane.xlu0 %460
        %v462 = vadd.f32 %v427, %v428
        %463 = vadd.xlane.f32.xlu0 %v462
        %v464 = vpop.xlane.xlu0 %463
        %v465 = vadd.f32 %v429, %v430
        %466 = vadd.xlane.f32.xlu0 %v465
        %v467 = vpop.xlane.xlu0 %466
        %v468 = vadd.f32 %v431, %v432
        %469 = vadd.xlane.f32.xlu0 %v468
        %v470 = vpop.xlane.xlu0 %469
        %v471 = vadd.f32 %v433, %v434
        %472 = vadd.xlane.f32.xlu0 %v471
        %v473 = vpop.xlane.xlu0 %472
        %v474 = vadd.f32 %v435, %v436
        %475 = vadd.xlane.f32.xlu0 %v474
        %v476 = vpop.xlane.xlu0 %475
        %v477 = vadd.f32 %v437, %v438
        %478 = vadd.xlane.f32.xlu0 %v477
        %v479 = vpop.xlane.xlu0 %478
        %v480 = vadd.f32 %v439, %v440
        %481 = vadd.xlane.f32.xlu0 %v480
        %v482 = vpop.xlane.xlu0 %481
        %v483 = vadd.f32 %v441, %v442
        %484 = vadd.xlane.f32.xlu0 %v483
        %v485 = vpop.xlane.xlu0 %484
        %v486 = vadd.f32 %v443, %v444
        %487 = vadd.xlane.f32.xlu0 %v486
        %v488 = vpop.xlane.xlu0 %487
        %v489 = vadd.f32 %v445, %v446
        %490 = vadd.xlane.f32.xlu0 %v489
        %v491 = vpop.xlane.xlu0 %490
        %v492 = vadd.f32 %v447, %v448
        %493 = vadd.xlane.f32.xlu0 %v492
        %v494 = vpop.xlane.xlu0 %493
        %v495 = vadd.f32 %v449, %v450
        %496 = vadd.xlane.f32.xlu0 %v495
        %v497 = vpop.xlane.xlu0 %496
        %v498 = vadd.f32 %v451, %v452
        %499 = vadd.xlane.f32.xlu0 %v498
        %v500 = vpop.xlane.xlu0 %499
        %v501 = vmul.f32 %v455, %v372
        %v502 = vmul.f32 %v458, %v372
        %v503 = vmul.f32 %v461, %v372
        %v504 = vmul.f32 %v464, %v372
        %v505 = vmul.f32 %v467, %v372
        %v506 = vmul.f32 %v470, %v372
        %v507 = vmul.f32 %v473, %v372
        %v508 = vmul.f32 %v476, %v372
        %v509 = vmul.f32 %v479, %v372
        %v510 = vmul.f32 %v482, %v372
        %v511 = vmul.f32 %v485, %v372
        %v512 = vmul.f32 %v488, %v372
        %v513 = vmul.f32 %v491, %v372
        %v514 = vmul.f32 %v494, %v372
        %v515 = vmul.f32 %v497, %v372
        %v516 = vmul.f32 %v500, %v372
        %v517 = vadd.f32 %v501, 1e-05
        %v518 = vadd.f32 %v502, 1e-05
        %v519 = vadd.f32 %v503, 1e-05
        %v520 = vadd.f32 %v504, 1e-05
        %v521 = vadd.f32 %v505, 1e-05
        %v522 = vadd.f32 %v506, 1e-05
        %v523 = vadd.f32 %v507, 1e-05
        %v524 = vadd.f32 %v508, 1e-05
        %v525 = vadd.f32 %v509, 1e-05
        %v526 = vadd.f32 %v510, 1e-05
        %v527 = vadd.f32 %v511, 1e-05
        %v528 = vadd.f32 %v512, 1e-05
        %v529 = vadd.f32 %v513, 1e-05
        %v530 = vadd.f32 %v514, 1e-05
        %v531 = vadd.f32 %v515, 1e-05
        %v532 = vadd.f32 %v516, 1e-05
        %v533 = vrsqrt.pop %v517
        %v534 = vmul.f32 %v533, %v517
        %v535 = vmul.f32 %v534, %v533
        %v536 = vmul.f32 0.5, %v535
        %v537 = vsub.f32 1.5, %v536
        %v538 = vmul.f32 %v533, %v537
        %vm539 = vweird.f32 %v517
        %vm540 = vweird.f32 %v533
        %vm541 = vmor %vm539, %vm540
        %v542 = vsel %vm541, %v533, %v538
        %v543 = vrsqrt.pop %v518
        %v544 = vmul.f32 %v543, %v518
        %v545 = vmul.f32 %v544, %v543
        %v546 = vmul.f32 0.5, %v545
        %v547 = vsub.f32 1.5, %v546
        %v548 = vmul.f32 %v543, %v547
        %vm549 = vweird.f32 %v518
        %vm550 = vweird.f32 %v543
        %vm551 = vmor %vm549, %vm550
        %v552 = vsel %vm551, %v543, %v548
        %v553 = vrsqrt.pop %v519
        %v554 = vmul.f32 %v553, %v519
        %v555 = vmul.f32 %v554, %v553
        %v556 = vmul.f32 0.5, %v555
        %v557 = vsub.f32 1.5, %v556
        %v558 = vmul.f32 %v553, %v557
        %vm559 = vweird.f32 %v519
        %vm560 = vweird.f32 %v553
        %vm561 = vmor %vm559, %vm560
        %v562 = vsel %vm561, %v553, %v558
        %v563 = vrsqrt.pop %v520
        %v564 = vmul.f32 %v563, %v520
        %v565 = vmul.f32 %v564, %v563
        %v566 = vmul.f32 0.5, %v565
        %v567 = vsub.f32 1.5, %v566
        %v568 = vmul.f32 %v563, %v567
        %vm569 = vweird.f32 %v520
        %vm570 = vweird.f32 %v563
        %vm571 = vmor %vm569, %vm570
        %v572 = vsel %vm571, %v563, %v568
        %v573 = vrsqrt.pop %v521
        %v574 = vmul.f32 %v573, %v521
        %v575 = vmul.f32 %v574, %v573
        %v576 = vmul.f32 0.5, %v575
        %v577 = vsub.f32 1.5, %v576
        %v578 = vmul.f32 %v573, %v577
        %vm579 = vweird.f32 %v521
        %vm580 = vweird.f32 %v573
        %vm581 = vmor %vm579, %vm580
        %v582 = vsel %vm581, %v573, %v578
        %v583 = vrsqrt.pop %v522
        %v584 = vmul.f32 %v583, %v522
        %v585 = vmul.f32 %v584, %v583
        %v586 = vmul.f32 0.5, %v585
        %v587 = vsub.f32 1.5, %v586
        %v588 = vmul.f32 %v583, %v587
        %vm589 = vweird.f32 %v522
        %vm590 = vweird.f32 %v583
        %vm591 = vmor %vm589, %vm590
        %v592 = vsel %vm591, %v583, %v588
        %v593 = vrsqrt.pop %v523
        %v594 = vmul.f32 %v593, %v523
        %v595 = vmul.f32 %v594, %v593
        %v596 = vmul.f32 0.5, %v595
        %v597 = vsub.f32 1.5, %v596
        %v598 = vmul.f32 %v593, %v597
        %vm599 = vweird.f32 %v523
        %vm600 = vweird.f32 %v593
        %vm601 = vmor %vm599, %vm600
        %v602 = vsel %vm601, %v593, %v598
        %v603 = vrsqrt.pop %v524
        %v604 = vmul.f32 %v603, %v524
        %v605 = vmul.f32 %v604, %v603
        %v606 = vmul.f32 0.5, %v605
        %v607 = vsub.f32 1.5, %v606
        %v608 = vmul.f32 %v603, %v607
        %vm609 = vweird.f32 %v524
        %vm610 = vweird.f32 %v603
        %vm611 = vmor %vm609, %vm610
        %v612 = vsel %vm611, %v603, %v608
        %v613 = vrsqrt.pop %v525
        %v614 = vmul.f32 %v613, %v525
        %v615 = vmul.f32 %v614, %v613
        %v616 = vmul.f32 0.5, %v615
        %v617 = vsub.f32 1.5, %v616
        %v618 = vmul.f32 %v613, %v617
        %vm619 = vweird.f32 %v525
        %vm620 = vweird.f32 %v613
        %vm621 = vmor %vm619, %vm620
        %v622 = vsel %vm621, %v613, %v618
        %v623 = vrsqrt.pop %v526
        %v624 = vmul.f32 %v623, %v526
        %v625 = vmul.f32 %v624, %v623
        %v626 = vmul.f32 0.5, %v625
        %v627 = vsub.f32 1.5, %v626
        %v628 = vmul.f32 %v623, %v627
        %vm629 = vweird.f32 %v526
        %vm630 = vweird.f32 %v623
        %vm631 = vmor %vm629, %vm630
        %v632 = vsel %vm631, %v623, %v628
        %v633 = vrsqrt.pop %v527
        %v634 = vmul.f32 %v633, %v527
        %v635 = vmul.f32 %v634, %v633
        %v636 = vmul.f32 0.5, %v635
        %v637 = vsub.f32 1.5, %v636
        %v638 = vmul.f32 %v633, %v637
        %vm639 = vweird.f32 %v527
        %vm640 = vweird.f32 %v633
        %vm641 = vmor %vm639, %vm640
        %v642 = vsel %vm641, %v633, %v638
        %v643 = vrsqrt.pop %v528
        %v644 = vmul.f32 %v643, %v528
        %v645 = vmul.f32 %v644, %v643
        %v646 = vmul.f32 0.5, %v645
        %v647 = vsub.f32 1.5, %v646
        %v648 = vmul.f32 %v643, %v647
        %vm649 = vweird.f32 %v528
        %vm650 = vweird.f32 %v643
        %vm651 = vmor %vm649, %vm650
        %v652 = vsel %vm651, %v643, %v648
        %v653 = vrsqrt.pop %v529
        %v654 = vmul.f32 %v653, %v529
        %v655 = vmul.f32 %v654, %v653
        %v656 = vmul.f32 0.5, %v655
        %v657 = vsub.f32 1.5, %v656
        %v658 = vmul.f32 %v653, %v657
        %vm659 = vweird.f32 %v529
        %vm660 = vweird.f32 %v653
        %vm661 = vmor %vm659, %vm660
        %v662 = vsel %vm661, %v653, %v658
        %v663 = vrsqrt.pop %v530
        %v664 = vmul.f32 %v663, %v530
        %v665 = vmul.f32 %v664, %v663
        %v666 = vmul.f32 0.5, %v665
        %v667 = vsub.f32 1.5, %v666
        %v668 = vmul.f32 %v663, %v667
        %vm669 = vweird.f32 %v530
        %vm670 = vweird.f32 %v663
        %vm671 = vmor %vm669, %vm670
        %v672 = vsel %vm671, %v663, %v668
        %v673 = vrsqrt.pop %v531
        %v674 = vmul.f32 %v673, %v531
        %v675 = vmul.f32 %v674, %v673
        %v676 = vmul.f32 0.5, %v675
        %v677 = vsub.f32 1.5, %v676
        %v678 = vmul.f32 %v673, %v677
        %vm679 = vweird.f32 %v531
        %vm680 = vweird.f32 %v673
        %vm681 = vmor %vm679, %vm680
        %v682 = vsel %vm681, %v673, %v678
        %v683 = vrsqrt.pop %v532
        %v684 = vmul.f32 %v683, %v532
        %v685 = vmul.f32 %v684, %v683
        %v686 = vmul.f32 0.5, %v685
        %v687 = vsub.f32 1.5, %v686
        %v688 = vmul.f32 %v683, %v687
        %vm689 = vweird.f32 %v532
        %vm690 = vweird.f32 %v683
        %vm691 = vmor %vm689, %vm690
        %v692 = vsel %vm691, %v683, %v688
        %v693 = vmul.f32 %v389, %v542
        %v694 = vmul.f32 %v390, %v542
        %v695 = vmul.f32 %v391, %v552
        %v696 = vmul.f32 %v392, %v552
        %v697 = vmul.f32 %v393, %v562
        %v698 = vmul.f32 %v394, %v562
        %v699 = vmul.f32 %v395, %v572
        %v700 = vmul.f32 %v396, %v572
        %v701 = vmul.f32 %v397, %v582
        %v702 = vmul.f32 %v398, %v582
        %v703 = vmul.f32 %v399, %v592
        %v704 = vmul.f32 %v400, %v592
        %v705 = vmul.f32 %v401, %v602
        %v706 = vmul.f32 %v402, %v602
        %v707 = vmul.f32 %v403, %v612
        %v708 = vmul.f32 %v404, %v612
        %v709 = vmul.f32 %v405, %v622
        %v710 = vmul.f32 %v406, %v622
        %v711 = vmul.f32 %v407, %v632
        %v712 = vmul.f32 %v408, %v632
        %v713 = vmul.f32 %v409, %v642
        %v714 = vmul.f32 %v410, %v642
        %v715 = vmul.f32 %v411, %v652
        %v716 = vmul.f32 %v412, %v652
        %v717 = vmul.f32 %v413, %v662
        %v718 = vmul.f32 %v414, %v662
        %v719 = vmul.f32 %v415, %v672
        %v720 = vmul.f32 %v416, %v672
        %v721 = vmul.f32 %v417, %v682
        %v722 = vmul.f32 %v418, %v682
        %v723 = vmul.f32 %v419, %v692
        %v724 = vmul.f32 %v420, %v692
        %v725 = vld [vmem:[#allocation6] sm:$0x3]
        %v727 = vperm.slane %v725, 0
        %v728 = vperm.slane %v725, 1
        %v731 = vmul.f32 %v693, %v727
        %v732 = vmul.f32 %v694, %v728
        %v733 = vmul.f32 %v695, %v727
        %v734 = vmul.f32 %v696, %v728
        %v735 = vmul.f32 %v697, %v727
        %v736 = vmul.f32 %v698, %v728
        %v737 = vmul.f32 %v699, %v727
        %v738 = vmul.f32 %v700, %v728
        %v739 = vmul.f32 %v701, %v727
        %v740 = vmul.f32 %v702, %v728
        %v741 = vmul.f32 %v703, %v727
        %v742 = vmul.f32 %v704, %v728
        %v743 = vmul.f32 %v705, %v727
        %v744 = vmul.f32 %v706, %v728
        %v745 = vmul.f32 %v707, %v727
        %v746 = vmul.f32 %v708, %v728
        %v747 = vmul.f32 %v709, %v727
        %v748 = vmul.f32 %v710, %v728
        %v749 = vmul.f32 %v711, %v727
        %v750 = vmul.f32 %v712, %v728
        %v751 = vmul.f32 %v713, %v727
        %v752 = vmul.f32 %v714, %v728
        %v753 = vmul.f32 %v715, %v727
        %v754 = vmul.f32 %v716, %v728
        %v755 = vmul.f32 %v717, %v727
        %v756 = vmul.f32 %v718, %v728
        %v757 = vmul.f32 %v719, %v727
        %v758 = vmul.f32 %v720, %v728
        %v759 = vmul.f32 %v721, %v727
        %v760 = vmul.f32 %v722, %v728
        %v761 = vmul.f32 %v723, %v727
        %v762 = vmul.f32 %v724, %v728
        %v763 = vpack.c.bf16 %v733, %v731
        %v764 = vpack.c.bf16 %v734, %v732
        %v765 = vpack.c.bf16 %v737, %v735
        %v766 = vpack.c.bf16 %v738, %v736
        %v767 = vpack.c.bf16 %v741, %v739
        %v768 = vpack.c.bf16 %v742, %v740
        %v769 = vpack.c.bf16 %v745, %v743
        %v770 = vpack.c.bf16 %v746, %v744
        %v771 = vpack.c.bf16 %v749, %v747
        %v772 = vpack.c.bf16 %v750, %v748
        %v773 = vpack.c.bf16 %v753, %v751
        %v774 = vpack.c.bf16 %v754, %v752
        %v775 = vpack.c.bf16 %v757, %v755
        %v776 = vpack.c.bf16 %v758, %v756
        %v777 = vpack.c.bf16 %v761, %v759
        %v778 = vpack.c.bf16 %v762, %v760
        %v779 = vld [vmem:[#allocation8] sm:$0xff]
        %v780 = vld [vmem:[#allocation8 + $0x20] sm:$0xff]
        %v781 = vld [vmem:[#allocation8 + $0x40] sm:$0xff]
        %v782 = vld [vmem:[#allocation8 + $0x60] sm:$0xff]
        %v783 = vld [vmem:[#allocation8 + $0x80] sm:$0xff]
        %v784 = vld [vmem:[#allocation8 + $0xa0] sm:$0xff]
        %v785 = vld [vmem:[#allocation8 + $0xc0] sm:$0xff]
        %v786 = vld [vmem:[#allocation8 + $0xe0] sm:$0xff]
        %v787 = vld [vmem:[#allocation8 + $0x100] sm:$0xff]
        %v788 = vld [vmem:[#allocation8 + $0x120] sm:$0xff]
        %v789 = vld [vmem:[#allocation8 + $0x140] sm:$0xff]
        %v790 = vld [vmem:[#allocation8 + $0x160] sm:$0xff]
        %v791 = vld [vmem:[#allocation8 + $0x180] sm:$0xff]
        %v792 = vld [vmem:[#allocation8 + $0x1a0] sm:$0xff]
        %v793 = vld [vmem:[#allocation8 + $0x1c0] sm:$0xff]
        %v794 = vld [vmem:[#allocation8 + $0x1e0] sm:$0xff]
        %v795 = vld [vmem:[#allocation8 + $0x200] sm:$0xff]
        %v796 = vld [vmem:[#allocation8 + $0x220] sm:$0xff]
        %v797 = vld [vmem:[#allocation8 + $0x240] sm:$0xff]
        %v798 = vld [vmem:[#allocation8 + $0x260] sm:$0xff]
        %v799 = vld [vmem:[#allocation8 + $0x280] sm:$0xff]
        %v800 = vld [vmem:[#allocation8 + $0x2a0] sm:$0xff]
        %v801 = vld [vmem:[#allocation8 + $0x2c0] sm:$0xff]
        %v802 = vld [vmem:[#allocation8 + $0x2e0] sm:$0xff]
        %v803 = vld [vmem:[#allocation8 + $0x300] sm:$0xff]
        %v804 = vld [vmem:[#allocation8 + $0x320] sm:$0xff]
        %v805 = vld [vmem:[#allocation8 + $0x340] sm:$0xff]
        %v806 = vld [vmem:[#allocation8 + $0x360] sm:$0xff]
        %v807 = vld [vmem:[#allocation8 + $0x380] sm:$0xff]
        %v808 = vld [vmem:[#allocation8 + $0x3a0] sm:$0xff]
        %v809 = vld [vmem:[#allocation8 + $0x3c0] sm:$0xff]
        %v810 = vld [vmem:[#allocation8 + $0x3e0] sm:$0xff]
        %v843 = vunpack.c.l.b16 %v779
        %v844 = vunpack.c.h.b16 %v779
        %v845 = vunpack.c.l.b16 %v780
        %v846 = vunpack.c.h.b16 %v780
        %v847 = vunpack.c.l.b16 %v781
        %v848 = vunpack.c.h.b16 %v781
        %v849 = vunpack.c.l.b16 %v782
        %v850 = vunpack.c.h.b16 %v782
        %v851 = vunpack.c.l.b16 %v783
        %v852 = vunpack.c.h.b16 %v783
        %v853 = vunpack.c.l.b16 %v784
        %v854 = vunpack.c.h.b16 %v784
        %v855 = vunpack.c.l.b16 %v785
        %v856 = vunpack.c.h.b16 %v785
        %v857 = vunpack.c.l.b16 %v786
        %v858 = vunpack.c.h.b16 %v786
        %v859 = vunpack.c.l.b16 %v787
        %v860 = vunpack.c.h.b16 %v787
        %v861 = vunpack.c.l.b16 %v788
        %v862 = vunpack.c.h.b16 %v788
        %v863 = vunpack.c.l.b16 %v789
        %v864 = vunpack.c.h.b16 %v789
        %v865 = vunpack.c.l.b16 %v790
        %v866 = vunpack.c.h.b16 %v790
        %v867 = vunpack.c.l.b16 %v791
        %v868 = vunpack.c.h.b16 %v791
        %v869 = vunpack.c.l.b16 %v792
        %v870 = vunpack.c.h.b16 %v792
        %v871 = vunpack.c.l.b16 %v793
        %v872 = vunpack.c.h.b16 %v793
        %v873 = vunpack.c.l.b16 %v794
        %v874 = vunpack.c.h.b16 %v794
        %v875 = vunpack.c.l.b16 %v795
        %v876 = vunpack.c.h.b16 %v795
        %v877 = vunpack.c.l.b16 %v796
        %v878 = vunpack.c.h.b16 %v796
        %v879 = vunpack.c.l.b16 %v797
        %v880 = vunpack.c.h.b16 %v797
        %v881 = vunpack.c.l.b16 %v798
        %v882 = vunpack.c.h.b16 %v798
        %v883 = vunpack.c.l.b16 %v799
        %v884 = vunpack.c.h.b16 %v799
        %v885 = vunpack.c.l.b16 %v800
        %v886 = vunpack.c.h.b16 %v800
        %v887 = vunpack.c.l.b16 %v801
        %v888 = vunpack.c.h.b16 %v801
        %v889 = vunpack.c.l.b16 %v802
        %v890 = vunpack.c.h.b16 %v802
        %v891 = vunpack.c.l.b16 %v803
        %v892 = vunpack.c.h.b16 %v803
        %v893 = vunpack.c.l.b16 %v804
        %v894 = vunpack.c.h.b16 %v804
        %v895 = vunpack.c.l.b16 %v805
        %v896 = vunpack.c.h.b16 %v805
        %v897 = vunpack.c.l.b16 %v806
        %v898 = vunpack.c.h.b16 %v806
        %v899 = vunpack.c.l.b16 %v807
        %v900 = vunpack.c.h.b16 %v807
        %v901 = vunpack.c.l.b16 %v808
        %v902 = vunpack.c.h.b16 %v808
        %v903 = vunpack.c.l.b16 %v809
        %v904 = vunpack.c.h.b16 %v809
        %v905 = vunpack.c.l.b16 %v810
        %v906 = vunpack.c.h.b16 %v810
        %v907 = vpack.c.b16 %v845, %v843
        %v908 = vpack.c.b16 %v846, %v844
        %v909 = vpack.c.b16 %v849, %v847
        %v910 = vpack.c.b16 %v850, %v848
        %v911 = vpack.c.b16 %v853, %v851
        %v912 = vpack.c.b16 %v854, %v852
        %v913 = vpack.c.b16 %v857, %v855
        %v914 = vpack.c.b16 %v858, %v856
        %v915 = vpack.c.b16 %v861, %v859
        %v916 = vpack.c.b16 %v862, %v860
        %v917 = vpack.c.b16 %v865, %v863
        %v918 = vpack.c.b16 %v866, %v864
        %v919 = vpack.c.b16 %v869, %v867
        %v920 = vpack.c.b16 %v870, %v868
        %v921 = vpack.c.b16 %v873, %v871
        %v922 = vpack.c.b16 %v874, %v872
        %v923 = vpack.c.b16 %v877, %v875
        %v924 = vpack.c.b16 %v878, %v876
        %v925 = vpack.c.b16 %v881, %v879
        %v926 = vpack.c.b16 %v882, %v880
        %v927 = vpack.c.b16 %v885, %v883
        %v928 = vpack.c.b16 %v886, %v884
        %v929 = vpack.c.b16 %v889, %v887
        %v930 = vpack.c.b16 %v890, %v888
        %v931 = vpack.c.b16 %v893, %v891
        %v932 = vpack.c.b16 %v894, %v892
        %v933 = vpack.c.b16 %v897, %v895
        %v934 = vpack.c.b16 %v898, %v896
        %v935 = vpack.c.b16 %v901, %v899
        %v936 = vpack.c.b16 %v902, %v900
        %v937 = vpack.c.b16 %v905, %v903
        %v938 = vpack.c.b16 %v906, %v904
        %971 = vmatpush.bf16.msra.mxu0 %v921
        %972 = vmatpush.bf16.msra.mxu0 %v919
        %973 = vmatpush.bf16.msra.mxu0 %v917
        %974 = vmatpush.bf16.msra.mxu0 %v915
        %975 = vmatpush.bf16.msra.mxu0 %v913
        %976 = vmatpush.bf16.msra.mxu0 %v911
        %977 = vmatpush.bf16.msra.mxu0 %v909
        %978 = vmatpush.bf16.msra.mxu0 %v907
        %979 = vmatmul.bf16.gmra.mxu0 %v763
        %v980 = vpop.f32.mrf.mxu0
        %v981 = vadd.f32 0.0, %v980
        %v982 = vpop.f32.mrf.mxu0
        %v983 = vadd.f32 0.0, %v982
        %984 = vmatmul.bf16.gmra.mxu0 %v765
        %v985 = vpop.f32.mrf.mxu0
        %v986 = vadd.f32 0.0, %v985
        %v987 = vpop.f32.mrf.mxu0
        %v988 = vadd.f32 0.0, %v987
        %989 = vmatmul.bf16.gmra.mxu0 %v767
        %v990 = vpop.f32.mrf.mxu0
        %v991 = vadd.f32 0.0, %v990
        %v992 = vpop.f32.mrf.mxu0
        %v993 = vadd.f32 0.0, %v992
        %994 = vmatmul.bf16.gmra.mxu0 %v769
        %v995 = vpop.f32.mrf.mxu0
        %v996 = vadd.f32 0.0, %v995
        %v997 = vpop.f32.mrf.mxu0
        %v998 = vadd.f32 0.0, %v997
        %999 = vmatmul.bf16.gmra.mxu0 %v771
        %v1000 = vpop.f32.mrf.mxu0
        %v1001 = vadd.f32 0.0, %v1000
        %v1002 = vpop.f32.mrf.mxu0
        %v1003 = vadd.f32 0.0, %v1002
        %1004 = vmatmul.bf16.gmra.mxu0 %v773
        %v1005 = vpop.f32.mrf.mxu0
        %v1006 = vadd.f32 0.0, %v1005
        %v1007 = vpop.f32.mrf.mxu0
        %v1008 = vadd.f32 0.0, %v1007
        %1009 = vmatmul.bf16.gmra.mxu0 %v775
        %v1010 = vpop.f32.mrf.mxu0
        %v1011 = vadd.f32 0.0, %v1010
        %v1012 = vpop.f32.mrf.mxu0
        %v1013 = vadd.f32 0.0, %v1012
        %1014 = vmatmul.bf16.gmra.mxu0 %v777
        %v1015 = vpop.f32.mrf.mxu0
        %v1016 = vadd.f32 0.0, %v1015
        %v1017 = vpop.f32.mrf.mxu0
        %v1018 = vadd.f32 0.0, %v1017
        %1019 = vdwg.mxu0
        %1020 = vmatpush.bf16.msra.mxu0 %v937
        %1021 = vmatpush.bf16.msra.mxu0 %v935
        %1022 = vmatpush.bf16.msra.mxu0 %v933
        %1023 = vmatpush.bf16.msra.mxu0 %v931
        %1024 = vmatpush.bf16.msra.mxu0 %v929
        %1025 = vmatpush.bf16.msra.mxu0 %v927
        %1026 = vmatpush.bf16.msra.mxu0 %v925
        %1027 = vmatpush.bf16.msra.mxu0 %v923
        %1028 = vmatmul.bf16.gmra.mxu0 %v764
        %v1029 = vpop.f32.mrf.mxu0
        %v1030 = vadd.f32 %v981, %v1029
        %v1031 = vpop.f32.mrf.mxu0
        %v1032 = vadd.f32 %v983, %v1031
        %1033 = vmatmul.bf16.gmra.mxu0 %v766
        %v1034 = vpop.f32.mrf.mxu0
        %v1035 = vadd.f32 %v986, %v1034
        %v1036 = vpop.f32.mrf.mxu0
        %v1037 = vadd.f32 %v988, %v1036
        %1038 = vmatmul.bf16.gmra.mxu0 %v768
        %v1039 = vpop.f32.mrf.mxu0
        %v1040 = vadd.f32 %v991, %v1039
        %v1041 = vpop.f32.mrf.mxu0
        %v1042 = vadd.f32 %v993, %v1041
        %1043 = vmatmul.bf16.gmra.mxu0 %v770
        %v1044 = vpop.f32.mrf.mxu0
        %v1045 = vadd.f32 %v996, %v1044
        %v1046 = vpop.f32.mrf.mxu0
        %v1047 = vadd.f32 %v998, %v1046
        %1048 = vmatmul.bf16.gmra.mxu0 %v772
        %v1049 = vpop.f32.mrf.mxu0
        %v1050 = vadd.f32 %v1001, %v1049
        %v1051 = vpop.f32.mrf.mxu0
        %v1052 = vadd.f32 %v1003, %v1051
        %1053 = vmatmul.bf16.gmra.mxu0 %v774
        %v1054 = vpop.f32.mrf.mxu0
        %v1055 = vadd.f32 %v1006, %v1054
        %v1056 = vpop.f32.mrf.mxu0
        %v1057 = vadd.f32 %v1008, %v1056
        %1058 = vmatmul.bf16.gmra.mxu0 %v776
        %v1059 = vpop.f32.mrf.mxu0
        %v1060 = vadd.f32 %v1011, %v1059
        %v1061 = vpop.f32.mrf.mxu0
        %v1062 = vadd.f32 %v1013, %v1061
        %1063 = vmatmul.bf16.gmra.mxu0 %v778
        %v1064 = vpop.f32.mrf.mxu0
        %v1065 = vadd.f32 %v1016, %v1064
        %v1066 = vpop.f32.mrf.mxu0
        %v1067 = vadd.f32 %v1018, %v1066
        %1068 = vdwg.mxu0
        %1069 = vmatpush.bf16.msra.mxu0 %v922
        %1070 = vmatpush.bf16.msra.mxu0 %v920
        %1071 = vmatpush.bf16.msra.mxu0 %v918
        %1072 = vmatpush.bf16.msra.mxu0 %v916
        %1073 = vmatpush.bf16.msra.mxu0 %v914
        %1074 = vmatpush.bf16.msra.mxu0 %v912
        %1075 = vmatpush.bf16.msra.mxu0 %v910
        %1076 = vmatpush.bf16.msra.mxu0 %v908
        %1077 = vmatmul.bf16.gmra.mxu0 %v763
        %v1078 = vpop.f32.mrf.mxu0
        %v1079 = vadd.f32 0.0, %v1078
        %v1080 = vpop.f32.mrf.mxu0
        %v1081 = vadd.f32 0.0, %v1080
        %1082 = vmatmul.bf16.gmra.mxu0 %v765
        %v1083 = vpop.f32.mrf.mxu0
        %v1084 = vadd.f32 0.0, %v1083
        %v1085 = vpop.f32.mrf.mxu0
        %v1086 = vadd.f32 0.0, %v1085
        %1087 = vmatmul.bf16.gmra.mxu0 %v767
        %v1088 = vpop.f32.mrf.mxu0
        %v1089 = vadd.f32 0.0, %v1088
        %v1090 = vpop.f32.mrf.mxu0
        %v1091 = vadd.f32 0.0, %v1090
        %1092 = vmatmul.bf16.gmra.mxu0 %v769
        %v1093 = vpop.f32.mrf.mxu0
        %v1094 = vadd.f32 0.0, %v1093
        %v1095 = vpop.f32.mrf.mxu0
        %v1096 = vadd.f32 0.0, %v1095
        %1097 = vmatmul.bf16.gmra.mxu0 %v771
        %v1098 = vpop.f32.mrf.mxu0
        %v1099 = vadd.f32 0.0, %v1098
        %v1100 = vpop.f32.mrf.mxu0
        %v1101 = vadd.f32 0.0, %v1100
        %1102 = vmatmul.bf16.gmra.mxu0 %v773
        %v1103 = vpop.f32.mrf.mxu0
        %v1104 = vadd.f32 0.0, %v1103
        %v1105 = vpop.f32.mrf.mxu0
        %v1106 = vadd.f32 0.0, %v1105
        %1107 = vmatmul.bf16.gmra.mxu0 %v775
        %v1108 = vpop.f32.mrf.mxu0
        %v1109 = vadd.f32 0.0, %v1108
        %v1110 = vpop.f32.mrf.mxu0
        %v1111 = vadd.f32 0.0, %v1110
        %1112 = vmatmul.bf16.gmra.mxu0 %v777
        %v1113 = vpop.f32.mrf.mxu0
        %v1114 = vadd.f32 0.0, %v1113
        %v1115 = vpop.f32.mrf.mxu0
        %v1116 = vadd.f32 0.0, %v1115
        %1117 = vdwg.mxu0
        %1118 = vmatpush.bf16.msra.mxu0 %v938
        %1119 = vmatpush.bf16.msra.mxu0 %v936
        %1120 = vmatpush.bf16.msra.mxu0 %v934
        %1121 = vmatpush.bf16.msra.mxu0 %v932
        %1122 = vmatpush.bf16.msra.mxu0 %v930
        %1123 = vmatpush.bf16.msra.mxu0 %v928
        %1124 = vmatpush.bf16.msra.mxu0 %v926
        %1125 = vmatpush.bf16.msra.mxu0 %v924
        %1126 = vmatmul.bf16.gmra.mxu0 %v764
        %v1127 = vpop.f32.mrf.mxu0
        %v1128 = vadd.f32 %v1079, %v1127
        %v1129 = vpop.f32.mrf.mxu0
        %v1130 = vadd.f32 %v1081, %v1129
        %1131 = vmatmul.bf16.gmra.mxu0 %v766
        %v1132 = vpop.f32.mrf.mxu0
        %v1133 = vadd.f32 %v1084, %v1132
        %v1134 = vpop.f32.mrf.mxu0
        %v1135 = vadd.f32 %v1086, %v1134
        %1136 = vmatmul.bf16.gmra.mxu0 %v768
        %v1137 = vpop.f32.mrf.mxu0
        %v1138 = vadd.f32 %v1089, %v1137
        %v1139 = vpop.f32.mrf.mxu0
        %v1140 = vadd.f32 %v1091, %v1139
        %1141 = vmatmul.bf16.gmra.mxu0 %v770
        %v1142 = vpop.f32.mrf.mxu0
        %v1143 = vadd.f32 %v1094, %v1142
        %v1144 = vpop.f32.mrf.mxu0
        %v1145 = vadd.f32 %v1096, %v1144
        %1146 = vmatmul.bf16.gmra.mxu0 %v772
        %v1147 = vpop.f32.mrf.mxu0
        %v1148 = vadd.f32 %v1099, %v1147
        %v1149 = vpop.f32.mrf.mxu0
        %v1150 = vadd.f32 %v1101, %v1149
        %1151 = vmatmul.bf16.gmra.mxu0 %v774
        %v1152 = vpop.f32.mrf.mxu0
        %v1153 = vadd.f32 %v1104, %v1152
        %v1154 = vpop.f32.mrf.mxu0
        %v1155 = vadd.f32 %v1106, %v1154
        %1156 = vmatmul.bf16.gmra.mxu0 %v776
        %v1157 = vpop.f32.mrf.mxu0
        %v1158 = vadd.f32 %v1109, %v1157
        %v1159 = vpop.f32.mrf.mxu0
        %v1160 = vadd.f32 %v1111, %v1159
        %1161 = vmatmul.bf16.gmra.mxu0 %v778
        %v1162 = vpop.f32.mrf.mxu0
        %v1163 = vadd.f32 %v1114, %v1162
        %v1164 = vpop.f32.mrf.mxu0
        %v1165 = vadd.f32 %v1116, %v1164
        %1166 = vdwg.mxu0
        %v1167 = vld [vmem:[#allocation8 + $0x8] sm:$0xff]
        %v1168 = vld [vmem:[#allocation8 + $0x28] sm:$0xff]
        %v1169 = vld [vmem:[#allocation8 + $0x48] sm:$0xff]
        %v1170 = vld [vmem:[#allocation8 + $0x68] sm:$0xff]
        %v1171 = vld [vmem:[#allocation8 + $0x88] sm:$0xff]
        %v1172 = vld [vmem:[#allocation8 + $0xa8] sm:$0xff]
        %v1173 = vld [vmem:[#allocation8 + $0xc8] sm:$0xff]
        %v1174 = vld [vmem:[#allocation8 + $0xe8] sm:$0xff]
        %v1175 = vld [vmem:[#allocation8 + $0x108] sm:$0xff]
        %v1176 = vld [vmem:[#allocation8 + $0x128] sm:$0xff]
        %v1177 = vld [vmem:[#allocation8 + $0x148] sm:$0xff]
        %v1178 = vld [vmem:[#allocation8 + $0x168] sm:$0xff]
        %v1179 = vld [vmem:[#allocation8 + $0x188] sm:$0xff]
        %v1180 = vld [vmem:[#allocation8 + $0x1a8] sm:$0xff]
        %v1181 = vld [vmem:[#allocation8 + $0x1c8] sm:$0xff]
        %v1182 = vld [vmem:[#allocation8 + $0x1e8] sm:$0xff]
        %v1183 = vld [vmem:[#allocation8 + $0x208] sm:$0xff]
        %v1184 = vld [vmem:[#allocation8 + $0x228] sm:$0xff]
        %v1185 = vld [vmem:[#allocation8 + $0x248] sm:$0xff]
        %v1186 = vld [vmem:[#allocation8 + $0x268] sm:$0xff]
        %v1187 = vld [vmem:[#allocation8 + $0x288] sm:$0xff]
        %v1188 = vld [vmem:[#allocation8 + $0x2a8] sm:$0xff]
        %v1189 = vld [vmem:[#allocation8 + $0x2c8] sm:$0xff]
        %v1190 = vld [vmem:[#allocation8 + $0x2e8] sm:$0xff]
        %v1191 = vld [vmem:[#allocation8 + $0x308] sm:$0xff]
        %v1192 = vld [vmem:[#allocation8 + $0x328] sm:$0xff]
        %v1193 = vld [vmem:[#allocation8 + $0x348] sm:$0xff]
        %v1194 = vld [vmem:[#allocation8 + $0x368] sm:$0xff]
        %v1195 = vld [vmem:[#allocation8 + $0x388] sm:$0xff]
        %v1196 = vld [vmem:[#allocation8 + $0x3a8] sm:$0xff]
        %v1197 = vld [vmem:[#allocation8 + $0x3c8] sm:$0xff]
        %v1198 = vld [vmem:[#allocation8 + $0x3e8] sm:$0xff]
        %v1231 = vunpack.c.l.b16 %v1167
        %v1232 = vunpack.c.h.b16 %v1167
        %v1233 = vunpack.c.l.b16 %v1168
        %v1234 = vunpack.c.h.b16 %v1168
        %v1235 = vunpack.c.l.b16 %v1169
        %v1236 = vunpack.c.h.b16 %v1169
        %v1237 = vunpack.c.l.b16 %v1170
        %v1238 = vunpack.c.h.b16 %v1170
        %v1239 = vunpack.c.l.b16 %v1171
        %v1240 = vunpack.c.h.b16 %v1171
        %v1241 = vunpack.c.l.b16 %v1172
        %v1242 = vunpack.c.h.b16 %v1172
        %v1243 = vunpack.c.l.b16 %v1173
        %v1244 = vunpack.c.h.b16 %v1173
        %v1245 = vunpack.c.l.b16 %v1174
        %v1246 = vunpack.c.h.b16 %v1174
        %v1247 = vunpack.c.l.b16 %v1175
        %v1248 = vunpack.c.h.b16 %v1175
        %v1249 = vunpack.c.l.b16 %v1176
        %v1250 = vunpack.c.h.b16 %v1176
        %v1251 = vunpack.c.l.b16 %v1177
        %v1252 = vunpack.c.h.b16 %v1177
        %v1253 = vunpack.c.l.b16 %v1178
        %v1254 = vunpack.c.h.b16 %v1178
        %v1255 = vunpack.c.l.b16 %v1179
        %v1256 = vunpack.c.h.b16 %v1179
        %v1257 = vunpack.c.l.b16 %v1180
        %v1258 = vunpack.c.h.b16 %v1180
        %v1259 = vunpack.c.l.b16 %v1181
        %v1260 = vunpack.c.h.b16 %v1181
        %v1261 = vunpack.c.l.b16 %v1182
        %v1262 = vunpack.c.h.b16 %v1182
        %v1263 = vunpack.c.l.b16 %v1183
        %v1264 = vunpack.c.h.b16 %v1183
        %v1265 = vunpack.c.l.b16 %v1184
        %v1266 = vunpack.c.h.b16 %v1184
        %v1267 = vunpack.c.l.b16 %v1185
        %v1268 = vunpack.c.h.b16 %v1185
        %v1269 = vunpack.c.l.b16 %v1186
        %v1270 = vunpack.c.h.b16 %v1186
        %v1271 = vunpack.c.l.b16 %v1187
        %v1272 = vunpack.c.h.b16 %v1187
        %v1273 = vunpack.c.l.b16 %v1188
        %v1274 = vunpack.c.h.b16 %v1188
        %v1275 = vunpack.c.l.b16 %v1189
        %v1276 = vunpack.c.h.b16 %v1189
        %v1277 = vunpack.c.l.b16 %v1190
        %v1278 = vunpack.c.h.b16 %v1190
        %v1279 = vunpack.c.l.b16 %v1191
        %v1280 = vunpack.c.h.b16 %v1191
        %v1281 = vunpack.c.l.b16 %v1192
        %v1282 = vunpack.c.h.b16 %v1192
        %v1283 = vunpack.c.l.b16 %v1193
        %v1284 = vunpack.c.h.b16 %v1193
        %v1285 = vunpack.c.l.b16 %v1194
        %v1286 = vunpack.c.h.b16 %v1194
        %v1287 = vunpack.c.l.b16 %v1195
        %v1288 = vunpack.c.h.b16 %v1195
        %v1289 = vunpack.c.l.b16 %v1196
        %v1290 = vunpack.c.h.b16 %v1196
        %v1291 = vunpack.c.l.b16 %v1197
        %v1292 = vunpack.c.h.b16 %v1197
        %v1293 = vunpack.c.l.b16 %v1198
        %v1294 = vunpack.c.h.b16 %v1198
        %v1295 = vpack.c.b16 %v1233, %v1231
        %v1296 = vpack.c.b16 %v1234, %v1232
        %v1297 = vpack.c.b16 %v1237, %v1235
        %v1298 = vpack.c.b16 %v1238, %v1236
        %v1299 = vpack.c.b16 %v1241, %v1239
        %v1300 = vpack.c.b16 %v1242, %v1240
        %v1301 = vpack.c.b16 %v1245, %v1243
        %v1302 = vpack.c.b16 %v1246, %v1244
        %v1303 = vpack.c.b16 %v1249, %v1247
        %v1304 = vpack.c.b16 %v1250, %v1248
        %v1305 = vpack.c.b16 %v1253, %v1251
        %v1306 = vpack.c.b16 %v1254, %v1252
        %v1307 = vpack.c.b16 %v1257, %v1255
        %v1308 = vpack.c.b16 %v1258, %v1256
        %v1309 = vpack.c.b16 %v1261, %v1259
        %v1310 = vpack.c.b16 %v1262, %v1260
        %v1311 = vpack.c.b16 %v1265, %v1263
        %v1312 = vpack.c.b16 %v1266, %v1264
        %v1313 = vpack.c.b16 %v1269, %v1267
        %v1314 = vpack.c.b16 %v1270, %v1268
        %v1315 = vpack.c.b16 %v1273, %v1271
        %v1316 = vpack.c.b16 %v1274, %v1272
        %v1317 = vpack.c.b16 %v1277, %v1275
        %v1318 = vpack.c.b16 %v1278, %v1276
        %v1319 = vpack.c.b16 %v1281, %v1279
        %v1320 = vpack.c.b16 %v1282, %v1280
        %v1321 = vpack.c.b16 %v1285, %v1283
        %v1322 = vpack.c.b16 %v1286, %v1284
        %v1323 = vpack.c.b16 %v1289, %v1287
        %v1324 = vpack.c.b16 %v1290, %v1288
        %v1325 = vpack.c.b16 %v1293, %v1291
        %v1326 = vpack.c.b16 %v1294, %v1292
        %1359 = vmatpush.bf16.msra.mxu0 %v1309
        %1360 = vmatpush.bf16.msra.mxu0 %v1307
        %1361 = vmatpush.bf16.msra.mxu0 %v1305
        %1362 = vmatpush.bf16.msra.mxu0 %v1303
        %1363 = vmatpush.bf16.msra.mxu0 %v1301
        %1364 = vmatpush.bf16.msra.mxu0 %v1299
        %1365 = vmatpush.bf16.msra.mxu0 %v1297
        %1366 = vmatpush.bf16.msra.mxu0 %v1295
        %1367 = vmatmul.bf16.gmra.mxu0 %v763
        %v1368 = vpop.f32.mrf.mxu0
        %v1369 = vadd.f32 0.0, %v1368
        %v1370 = vpop.f32.mrf.mxu0
        %v1371 = vadd.f32 0.0, %v1370
        %1372 = vmatmul.bf16.gmra.mxu0 %v765
        %v1373 = vpop.f32.mrf.mxu0
        %v1374 = vadd.f32 0.0, %v1373
        %v1375 = vpop.f32.mrf.mxu0
        %v1376 = vadd.f32 0.0, %v1375
        %1377 = vmatmul.bf16.gmra.mxu0 %v767
        %v1378 = vpop.f32.mrf.mxu0
        %v1379 = vadd.f32 0.0, %v1378
        %v1380 = vpop.f32.mrf.mxu0
        %v1381 = vadd.f32 0.0, %v1380
        %1382 = vmatmul.bf16.gmra.mxu0 %v769
        %v1383 = vpop.f32.mrf.mxu0
        %v1384 = vadd.f32 0.0, %v1383
        %v1385 = vpop.f32.mrf.mxu0
        %v1386 = vadd.f32 0.0, %v1385
        %1387 = vmatmul.bf16.gmra.mxu0 %v771
        %v1388 = vpop.f32.mrf.mxu0
        %v1389 = vadd.f32 0.0, %v1388
        %v1390 = vpop.f32.mrf.mxu0
        %v1391 = vadd.f32 0.0, %v1390
        %1392 = vmatmul.bf16.gmra.mxu0 %v773
        %v1393 = vpop.f32.mrf.mxu0
        %v1394 = vadd.f32 0.0, %v1393
        %v1395 = vpop.f32.mrf.mxu0
        %v1396 = vadd.f32 0.0, %v1395
        %1397 = vmatmul.bf16.gmra.mxu0 %v775
        %v1398 = vpop.f32.mrf.mxu0
        %v1399 = vadd.f32 0.0, %v1398
        %v1400 = vpop.f32.mrf.mxu0
        %v1401 = vadd.f32 0.0, %v1400
        %1402 = vmatmul.bf16.gmra.mxu0 %v777
        %v1403 = vpop.f32.mrf.mxu0
        %v1404 = vadd.f32 0.0, %v1403
        %v1405 = vpop.f32.mrf.mxu0
        %v1406 = vadd.f32 0.0, %v1405
        %1407 = vdwg.mxu0
        %1408 = vmatpush.bf16.msra.mxu0 %v1325
        %1409 = vmatpush.bf16.msra.mxu0 %v1323
        %1410 = vmatpush.bf16.msra.mxu0 %v1321
        %1411 = vmatpush.bf16.msra.mxu0 %v1319
        %1412 = vmatpush.bf16.msra.mxu0 %v1317
        %1413 = vmatpush.bf16.msra.mxu0 %v1315
        %1414 = vmatpush.bf16.msra.mxu0 %v1313
        %1415 = vmatpush.bf16.msra.mxu0 %v1311
        %1416 = vmatmul.bf16.gmra.mxu0 %v764
        %v1417 = vpop.f32.mrf.mxu0
        %v1418 = vadd.f32 %v1369, %v1417
        %v1419 = vpop.f32.mrf.mxu0
        %v1420 = vadd.f32 %v1371, %v1419
        %1421 = vmatmul.bf16.gmra.mxu0 %v766
        %v1422 = vpop.f32.mrf.mxu0
        %v1423 = vadd.f32 %v1374, %v1422
        %v1424 = vpop.f32.mrf.mxu0
        %v1425 = vadd.f32 %v1376, %v1424
        %1426 = vmatmul.bf16.gmra.mxu0 %v768
        %v1427 = vpop.f32.mrf.mxu0
        %v1428 = vadd.f32 %v1379, %v1427
        %v1429 = vpop.f32.mrf.mxu0
        %v1430 = vadd.f32 %v1381, %v1429
        %1431 = vmatmul.bf16.gmra.mxu0 %v770
        %v1432 = vpop.f32.mrf.mxu0
        %v1433 = vadd.f32 %v1384, %v1432
        %v1434 = vpop.f32.mrf.mxu0
        %v1435 = vadd.f32 %v1386, %v1434
        %1436 = vmatmul.bf16.gmra.mxu0 %v772
        %v1437 = vpop.f32.mrf.mxu0
        %v1438 = vadd.f32 %v1389, %v1437
        %v1439 = vpop.f32.mrf.mxu0
        %v1440 = vadd.f32 %v1391, %v1439
        %1441 = vmatmul.bf16.gmra.mxu0 %v774
        %v1442 = vpop.f32.mrf.mxu0
        %v1443 = vadd.f32 %v1394, %v1442
        %v1444 = vpop.f32.mrf.mxu0
        %v1445 = vadd.f32 %v1396, %v1444
        %1446 = vmatmul.bf16.gmra.mxu0 %v776
        %v1447 = vpop.f32.mrf.mxu0
        %v1448 = vadd.f32 %v1399, %v1447
        %v1449 = vpop.f32.mrf.mxu0
        %v1450 = vadd.f32 %v1401, %v1449
        %1451 = vmatmul.bf16.gmra.mxu0 %v778
        %v1452 = vpop.f32.mrf.mxu0
        %v1453 = vadd.f32 %v1404, %v1452
        %v1454 = vpop.f32.mrf.mxu0
        %v1455 = vadd.f32 %v1406, %v1454
        %1456 = vdwg.mxu0
        %1457 = vmatpush.bf16.msra.mxu0 %v1310
        %1458 = vmatpush.bf16.msra.mxu0 %v1308
        %1459 = vmatpush.bf16.msra.mxu0 %v1306
        %1460 = vmatpush.bf16.msra.mxu0 %v1304
        %1461 = vmatpush.bf16.msra.mxu0 %v1302
        %1462 = vmatpush.bf16.msra.mxu0 %v1300
        %1463 = vmatpush.bf16.msra.mxu0 %v1298
        %1464 = vmatpush.bf16.msra.mxu0 %v1296
        %1465 = vmatmul.bf16.gmra.mxu0 %v763
        %v1466 = vpop.f32.mrf.mxu0
        %v1467 = vadd.f32 0.0, %v1466
        %v1468 = vpop.f32.mrf.mxu0
        %v1469 = vadd.f32 0.0, %v1468
        %1470 = vmatmul.bf16.gmra.mxu0 %v765
        %v1471 = vpop.f32.mrf.mxu0
        %v1472 = vadd.f32 0.0, %v1471
        %v1473 = vpop.f32.mrf.mxu0
        %v1474 = vadd.f32 0.0, %v1473
        %1475 = vmatmul.bf16.gmra.mxu0 %v767
        %v1476 = vpop.f32.mrf.mxu0
        %v1477 = vadd.f32 0.0, %v1476
        %v1478 = vpop.f32.mrf.mxu0
        %v1479 = vadd.f32 0.0, %v1478
        %1480 = vmatmul.bf16.gmra.mxu0 %v769
        %v1481 = vpop.f32.mrf.mxu0
        %v1482 = vadd.f32 0.0, %v1481
        %v1483 = vpop.f32.mrf.mxu0
        %v1484 = vadd.f32 0.0, %v1483
        %1485 = vmatmul.bf16.gmra.mxu0 %v771
        %v1486 = vpop.f32.mrf.mxu0
        %v1487 = vadd.f32 0.0, %v1486
        %v1488 = vpop.f32.mrf.mxu0
        %v1489 = vadd.f32 0.0, %v1488
        %1490 = vmatmul.bf16.gmra.mxu0 %v773
        %v1491 = vpop.f32.mrf.mxu0
        %v1492 = vadd.f32 0.0, %v1491
        %v1493 = vpop.f32.mrf.mxu0
        %v1494 = vadd.f32 0.0, %v1493
        %1495 = vmatmul.bf16.gmra.mxu0 %v775
        %v1496 = vpop.f32.mrf.mxu0
        %v1497 = vadd.f32 0.0, %v1496
        %v1498 = vpop.f32.mrf.mxu0
        %v1499 = vadd.f32 0.0, %v1498
        %1500 = vmatmul.bf16.gmra.mxu0 %v777
        %v1501 = vpop.f32.mrf.mxu0
        %v1502 = vadd.f32 0.0, %v1501
        %v1503 = vpop.f32.mrf.mxu0
        %v1504 = vadd.f32 0.0, %v1503
        %1505 = vdwg.mxu0
        %1506 = vmatpush.bf16.msra.mxu0 %v1326
        %1507 = vmatpush.bf16.msra.mxu0 %v1324
        %1508 = vmatpush.bf16.msra.mxu0 %v1322
        %1509 = vmatpush.bf16.msra.mxu0 %v1320
        %1510 = vmatpush.bf16.msra.mxu0 %v1318
        %1511 = vmatpush.bf16.msra.mxu0 %v1316
        %1512 = vmatpush.bf16.msra.mxu0 %v1314
        %1513 = vmatpush.bf16.msra.mxu0 %v1312
        %1514 = vmatmul.bf16.gmra.mxu0 %v764
        %v1515 = vpop.f32.mrf.mxu0
        %v1516 = vadd.f32 %v1467, %v1515
        %v1517 = vpop.f32.mrf.mxu0
        %v1518 = vadd.f32 %v1469, %v1517
        %1519 = vmatmul.bf16.gmra.mxu0 %v766
        %v1520 = vpop.f32.mrf.mxu0
        %v1521 = vadd.f32 %v1472, %v1520
        %v1522 = vpop.f32.mrf.mxu0
        %v1523 = vadd.f32 %v1474, %v1522
        %1524 = vmatmul.bf16.gmra.mxu0 %v768
        %v1525 = vpop.f32.mrf.mxu0
        %v1526 = vadd.f32 %v1477, %v1525
        %v1527 = vpop.f32.mrf.mxu0
        %v1528 = vadd.f32 %v1479, %v1527
        %1529 = vmatmul.bf16.gmra.mxu0 %v770
        %v1530 = vpop.f32.mrf.mxu0
        %v1531 = vadd.f32 %v1482, %v1530
        %v1532 = vpop.f32.mrf.mxu0
        %v1533 = vadd.f32 %v1484, %v1532
        %1534 = vmatmul.bf16.gmra.mxu0 %v772
        %v1535 = vpop.f32.mrf.mxu0
        %v1536 = vadd.f32 %v1487, %v1535
        %v1537 = vpop.f32.mrf.mxu0
        %v1538 = vadd.f32 %v1489, %v1537
        %1539 = vmatmul.bf16.gmra.mxu0 %v774
        %v1540 = vpop.f32.mrf.mxu0
        %v1541 = vadd.f32 %v1492, %v1540
        %v1542 = vpop.f32.mrf.mxu0
        %v1543 = vadd.f32 %v1494, %v1542
        %1544 = vmatmul.bf16.gmra.mxu0 %v776
        %v1545 = vpop.f32.mrf.mxu0
        %v1546 = vadd.f32 %v1497, %v1545
        %v1547 = vpop.f32.mrf.mxu0
        %v1548 = vadd.f32 %v1499, %v1547
        %1549 = vmatmul.bf16.gmra.mxu0 %v778
        %v1550 = vpop.f32.mrf.mxu0
        %v1551 = vadd.f32 %v1502, %v1550
        %v1552 = vpop.f32.mrf.mxu0
        %v1553 = vadd.f32 %v1504, %v1552
        %1554 = vdwg.mxu0
        %v1555 = vld [vmem:[#allocation8 + $0x10] sm:$0xff]
        %v1556 = vld [vmem:[#allocation8 + $0x30] sm:$0xff]
        %v1557 = vld [vmem:[#allocation8 + $0x50] sm:$0xff]
        %v1558 = vld [vmem:[#allocation8 + $0x70] sm:$0xff]
        %v1559 = vld [vmem:[#allocation8 + $0x90] sm:$0xff]
        %v1560 = vld [vmem:[#allocation8 + $0xb0] sm:$0xff]
        %v1561 = vld [vmem:[#allocation8 + $0xd0] sm:$0xff]
        %v1562 = vld [vmem:[#allocation8 + $0xf0] sm:$0xff]
        %v1563 = vld [vmem:[#allocation8 + $0x110] sm:$0xff]
        %v1564 = vld [vmem:[#allocation8 + $0x130] sm:$0xff]
        %v1565 = vld [vmem:[#allocation8 + $0x150] sm:$0xff]
        %v1566 = vld [vmem:[#allocation8 + $0x170] sm:$0xff]
        %v1567 = vld [vmem:[#allocation8 + $0x190] sm:$0xff]
        %v1568 = vld [vmem:[#allocation8 + $0x1b0] sm:$0xff]
        %v1569 = vld [vmem:[#allocation8 + $0x1d0] sm:$0xff]
        %v1570 = vld [vmem:[#allocation8 + $0x1f0] sm:$0xff]
        %v1571 = vld [vmem:[#allocation8 + $0x210] sm:$0xff]
        %v1572 = vld [vmem:[#allocation8 + $0x230] sm:$0xff]
        %v1573 = vld [vmem:[#allocation8 + $0x250] sm:$0xff]
        %v1574 = vld [vmem:[#allocation8 + $0x270] sm:$0xff]
        %v1575 = vld [vmem:[#allocation8 + $0x290] sm:$0xff]
        %v1576 = vld [vmem:[#allocation8 + $0x2b0] sm:$0xff]
        %v1577 = vld [vmem:[#allocation8 + $0x2d0] sm:$0xff]
        %v1578 = vld [vmem:[#allocation8 + $0x2f0] sm:$0xff]
        %v1579 = vld [vmem:[#allocation8 + $0x310] sm:$0xff]
        %v1580 = vld [vmem:[#allocation8 + $0x330] sm:$0xff]
        %v1581 = vld [vmem:[#allocation8 + $0x350] sm:$0xff]
        %v1582 = vld [vmem:[#allocation8 + $0x370] sm:$0xff]
        %v1583 = vld [vmem:[#allocation8 + $0x390] sm:$0xff]
        %v1584 = vld [vmem:[#allocation8 + $0x3b0] sm:$0xff]
        %v1585 = vld [vmem:[#allocation8 + $0x3d0] sm:$0xff]
        %v1586 = vld [vmem:[#allocation8 + $0x3f0] sm:$0xff]
        %v1619 = vunpack.c.l.b16 %v1555
        %v1620 = vunpack.c.h.b16 %v1555
        %v1621 = vunpack.c.l.b16 %v1556
        %v1622 = vunpack.c.h.b16 %v1556
        %v1623 = vunpack.c.l.b16 %v1557
        %v1624 = vunpack.c.h.b16 %v1557
        %v1625 = vunpack.c.l.b16 %v1558
        %v1626 = vunpack.c.h.b16 %v1558
        %v1627 = vunpack.c.l.b16 %v1559
        %v1628 = vunpack.c.h.b16 %v1559
        %v1629 = vunpack.c.l.b16 %v1560
        %v1630 = vunpack.c.h.b16 %v1560
        %v1631 = vunpack.c.l.b16 %v1561
        %v1632 = vunpack.c.h.b16 %v1561
        %v1633 = vunpack.c.l.b16 %v1562
        %v1634 = vunpack.c.h.b16 %v1562
        %v1635 = vunpack.c.l.b16 %v1563
        %v1636 = vunpack.c.h.b16 %v1563
        %v1637 = vunpack.c.l.b16 %v1564
        %v1638 = vunpack.c.h.b16 %v1564
        %v1639 = vunpack.c.l.b16 %v1565
        %v1640 = vunpack.c.h.b16 %v1565
        %v1641 = vunpack.c.l.b16 %v1566
        %v1642 = vunpack.c.h.b16 %v1566
        %v1643 = vunpack.c.l.b16 %v1567
        %v1644 = vunpack.c.h.b16 %v1567
        %v1645 = vunpack.c.l.b16 %v1568
        %v1646 = vunpack.c.h.b16 %v1568
        %v1647 = vunpack.c.l.b16 %v1569
        %v1648 = vunpack.c.h.b16 %v1569
        %v1649 = vunpack.c.l.b16 %v1570
        %v1650 = vunpack.c.h.b16 %v1570
        %v1651 = vunpack.c.l.b16 %v1571
        %v1652 = vunpack.c.h.b16 %v1571
        %v1653 = vunpack.c.l.b16 %v1572
        %v1654 = vunpack.c.h.b16 %v1572
        %v1655 = vunpack.c.l.b16 %v1573
        %v1656 = vunpack.c.h.b16 %v1573
        %v1657 = vunpack.c.l.b16 %v1574
        %v1658 = vunpack.c.h.b16 %v1574
        %v1659 = vunpack.c.l.b16 %v1575
        %v1660 = vunpack.c.h.b16 %v1575
        %v1661 = vunpack.c.l.b16 %v1576
        %v1662 = vunpack.c.h.b16 %v1576
        %v1663 = vunpack.c.l.b16 %v1577
        %v1664 = vunpack.c.h.b16 %v1577
        %v1665 = vunpack.c.l.b16 %v1578
        %v1666 = vunpack.c.h.b16 %v1578
        %v1667 = vunpack.c.l.b16 %v1579
        %v1668 = vunpack.c.h.b16 %v1579
        %v1669 = vunpack.c.l.b16 %v1580
        %v1670 = vunpack.c.h.b16 %v1580
        %v1671 = vunpack.c.l.b16 %v1581
        %v1672 = vunpack.c.h.b16 %v1581
        %v1673 = vunpack.c.l.b16 %v1582
        %v1674 = vunpack.c.h.b16 %v1582
        %v1675 = vunpack.c.l.b16 %v1583
        %v1676 = vunpack.c.h.b16 %v1583
        %v1677 = vunpack.c.l.b16 %v1584
        %v1678 = vunpack.c.h.b16 %v1584
        %v1679 = vunpack.c.l.b16 %v1585
        %v1680 = vunpack.c.h.b16 %v1585
        %v1681 = vunpack.c.l.b16 %v1586
        %v1682 = vunpack.c.h.b16 %v1586
        %v1683 = vpack.c.b16 %v1621, %v1619
        %v1684 = vpack.c.b16 %v1622, %v1620
        %v1685 = vpack.c.b16 %v1625, %v1623
        %v1686 = vpack.c.b16 %v1626, %v1624
        %v1687 = vpack.c.b16 %v1629, %v1627
        %v1688 = vpack.c.b16 %v1630, %v1628
        %v1689 = vpack.c.b16 %v1633, %v1631
        %v1690 = vpack.c.b16 %v1634, %v1632
        %v1691 = vpack.c.b16 %v1637, %v1635
        %v1692 = vpack.c.b16 %v1638, %v1636
        %v1693 = vpack.c.b16 %v1641, %v1639
        %v1694 = vpack.c.b16 %v1642, %v1640
        %v1695 = vpack.c.b16 %v1645, %v1643
        %v1696 = vpack.c.b16 %v1646, %v1644
        %v1697 = vpack.c.b16 %v1649, %v1647
        %v1698 = vpack.c.b16 %v1650, %v1648
        %v1699 = vpack.c.b16 %v1653, %v1651
        %v1700 = vpack.c.b16 %v1654, %v1652
        %v1701 = vpack.c.b16 %v1657, %v1655
        %v1702 = vpack.c.b16 %v1658, %v1656
        %v1703 = vpack.c.b16 %v1661, %v1659
        %v1704 = vpack.c.b16 %v1662, %v1660
        %v1705 = vpack.c.b16 %v1665, %v1663
        %v1706 = vpack.c.b16 %v1666, %v1664
        %v1707 = vpack.c.b16 %v1669, %v1667
        %v1708 = vpack.c.b16 %v1670, %v1668
        %v1709 = vpack.c.b16 %v1673, %v1671
        %v1710 = vpack.c.b16 %v1674, %v1672
        %v1711 = vpack.c.b16 %v1677, %v1675
        %v1712 = vpack.c.b16 %v1678, %v1676
        %v1713 = vpack.c.b16 %v1681, %v1679
        %v1714 = vpack.c.b16 %v1682, %v1680
        %1747 = vmatpush.bf16.msra.mxu0 %v1697
        %1748 = vmatpush.bf16.msra.mxu0 %v1695
        %1749 = vmatpush.bf16.msra.mxu0 %v1693
        %1750 = vmatpush.bf16.msra.mxu0 %v1691
        %1751 = vmatpush.bf16.msra.mxu0 %v1689
        %1752 = vmatpush.bf16.msra.mxu0 %v1687
        %1753 = vmatpush.bf16.msra.mxu0 %v1685
        %1754 = vmatpush.bf16.msra.mxu0 %v1683
        %1755 = vmatmul.bf16.gmra.mxu0 %v763
        %v1756 = vpop.f32.mrf.mxu0
        %v1757 = vadd.f32 0.0, %v1756
        %v1758 = vpop.f32.mrf.mxu0
        %v1759 = vadd.f32 0.0, %v1758
        %1760 = vmatmul.bf16.gmra.mxu0 %v765
        %v1761 = vpop.f32.mrf.mxu0
        %v1762 = vadd.f32 0.0, %v1761
        %v1763 = vpop.f32.mrf.mxu0
        %v1764 = vadd.f32 0.0, %v1763
        %1765 = vmatmul.bf16.gmra.mxu0 %v767
        %v1766 = vpop.f32.mrf.mxu0
        %v1767 = vadd.f32 0.0, %v1766
        %v1768 = vpop.f32.mrf.mxu0
        %v1769 = vadd.f32 0.0, %v1768
        %1770 = vmatmul.bf16.gmra.mxu0 %v769
        %v1771 = vpop.f32.mrf.mxu0
        %v1772 = vadd.f32 0.0, %v1771
        %v1773 = vpop.f32.mrf.mxu0
        %v1774 = vadd.f32 0.0, %v1773
        %1775 = vmatmul.bf16.gmra.mxu0 %v771
        %v1776 = vpop.f32.mrf.mxu0
        %v1777 = vadd.f32 0.0, %v1776
        %v1778 = vpop.f32.mrf.mxu0
        %v1779 = vadd.f32 0.0, %v1778
        %1780 = vmatmul.bf16.gmra.mxu0 %v773
        %v1781 = vpop.f32.mrf.mxu0
        %v1782 = vadd.f32 0.0, %v1781
        %v1783 = vpop.f32.mrf.mxu0
        %v1784 = vadd.f32 0.0, %v1783
        %1785 = vmatmul.bf16.gmra.mxu0 %v775
        %v1786 = vpop.f32.mrf.mxu0
        %v1787 = vadd.f32 0.0, %v1786
        %v1788 = vpop.f32.mrf.mxu0
        %v1789 = vadd.f32 0.0, %v1788
        %1790 = vmatmul.bf16.gmra.mxu0 %v777
        %v1791 = vpop.f32.mrf.mxu0
        %v1792 = vadd.f32 0.0, %v1791
        %v1793 = vpop.f32.mrf.mxu0
        %v1794 = vadd.f32 0.0, %v1793
        %1795 = vdwg.mxu0
        %1796 = vmatpush.bf16.msra.mxu0 %v1713
        %1797 = vmatpush.bf16.msra.mxu0 %v1711
        %1798 = vmatpush.bf16.msra.mxu0 %v1709
        %1799 = vmatpush.bf16.msra.mxu0 %v1707
        %1800 = vmatpush.bf16.msra.mxu0 %v1705
        %1801 = vmatpush.bf16.msra.mxu0 %v1703
        %1802 = vmatpush.bf16.msra.mxu0 %v1701
        %1803 = vmatpush.bf16.msra.mxu0 %v1699
        %1804 = vmatmul.bf16.gmra.mxu0 %v764
        %v1805 = vpop.f32.mrf.mxu0
        %v1806 = vadd.f32 %v1757, %v1805
        %v1807 = vpop.f32.mrf.mxu0
        %v1808 = vadd.f32 %v1759, %v1807
        %1809 = vmatmul.bf16.gmra.mxu0 %v766
        %v1810 = vpop.f32.mrf.mxu0
        %v1811 = vadd.f32 %v1762, %v1810
        %v1812 = vpop.f32.mrf.mxu0
        %v1813 = vadd.f32 %v1764, %v1812
        %1814 = vmatmul.bf16.gmra.mxu0 %v768
        %v1815 = vpop.f32.mrf.mxu0
        %v1816 = vadd.f32 %v1767, %v1815
        %v1817 = vpop.f32.mrf.mxu0
        %v1818 = vadd.f32 %v1769, %v1817
        %1819 = vmatmul.bf16.gmra.mxu0 %v770
        %v1820 = vpop.f32.mrf.mxu0
        %v1821 = vadd.f32 %v1772, %v1820
        %v1822 = vpop.f32.mrf.mxu0
        %v1823 = vadd.f32 %v1774, %v1822
        %1824 = vmatmul.bf16.gmra.mxu0 %v772
        %v1825 = vpop.f32.mrf.mxu0
        %v1826 = vadd.f32 %v1777, %v1825
        %v1827 = vpop.f32.mrf.mxu0
        %v1828 = vadd.f32 %v1779, %v1827
        %1829 = vmatmul.bf16.gmra.mxu0 %v774
        %v1830 = vpop.f32.mrf.mxu0
        %v1831 = vadd.f32 %v1782, %v1830
        %v1832 = vpop.f32.mrf.mxu0
        %v1833 = vadd.f32 %v1784, %v1832
        %1834 = vmatmul.bf16.gmra.mxu0 %v776
        %v1835 = vpop.f32.mrf.mxu0
        %v1836 = vadd.f32 %v1787, %v1835
        %v1837 = vpop.f32.mrf.mxu0
        %v1838 = vadd.f32 %v1789, %v1837
        %1839 = vmatmul.bf16.gmra.mxu0 %v778
        %v1840 = vpop.f32.mrf.mxu0
        %v1841 = vadd.f32 %v1792, %v1840
        %v1842 = vpop.f32.mrf.mxu0
        %v1843 = vadd.f32 %v1794, %v1842
        %1844 = vdwg.mxu0
        %1845 = vmatpush.bf16.msra.mxu0 %v1698
        %1846 = vmatpush.bf16.msra.mxu0 %v1696
        %1847 = vmatpush.bf16.msra.mxu0 %v1694
        %1848 = vmatpush.bf16.msra.mxu0 %v1692
        %1849 = vmatpush.bf16.msra.mxu0 %v1690
        %1850 = vmatpush.bf16.msra.mxu0 %v1688
        %1851 = vmatpush.bf16.msra.mxu0 %v1686
        %1852 = vmatpush.bf16.msra.mxu0 %v1684
        %1853 = vmatmul.bf16.gmra.mxu0 %v763
        %v1854 = vpop.f32.mrf.mxu0
        %v1855 = vadd.f32 0.0, %v1854
        %v1856 = vpop.f32.mrf.mxu0
        %v1857 = vadd.f32 0.0, %v1856
        %1858 = vmatmul.bf16.gmra.mxu0 %v765
        %v1859 = vpop.f32.mrf.mxu0
        %v1860 = vadd.f32 0.0, %v1859
        %v1861 = vpop.f32.mrf.mxu0
        %v1862 = vadd.f32 0.0, %v1861
        %1863 = vmatmul.bf16.gmra.mxu0 %v767
        %v1864 = vpop.f32.mrf.mxu0
        %v1865 = vadd.f32 0.0, %v1864
        %v1866 = vpop.f32.mrf.mxu0
        %v1867 = vadd.f32 0.0, %v1866
        %1868 = vmatmul.bf16.gmra.mxu0 %v769
        %v1869 = vpop.f32.mrf.mxu0
        %v1870 = vadd.f32 0.0, %v1869
        %v1871 = vpop.f32.mrf.mxu0
        %v1872 = vadd.f32 0.0, %v1871
        %1873 = vmatmul.bf16.gmra.mxu0 %v771
        %v1874 = vpop.f32.mrf.mxu0
        %v1875 = vadd.f32 0.0, %v1874
        %v1876 = vpop.f32.mrf.mxu0
        %v1877 = vadd.f32 0.0, %v1876
        %1878 = vmatmul.bf16.gmra.mxu0 %v773
        %v1879 = vpop.f32.mrf.mxu0
        %v1880 = vadd.f32 0.0, %v1879
        %v1881 = vpop.f32.mrf.mxu0
        %v1882 = vadd.f32 0.0, %v1881
        %1883 = vmatmul.bf16.gmra.mxu0 %v775
        %v1884 = vpop.f32.mrf.mxu0
        %v1885 = vadd.f32 0.0, %v1884
        %v1886 = vpop.f32.mrf.mxu0
        %v1887 = vadd.f32 0.0, %v1886
        %1888 = vmatmul.bf16.gmra.mxu0 %v777
        %v1889 = vpop.f32.mrf.mxu0
        %v1890 = vadd.f32 0.0, %v1889
        %v1891 = vpop.f32.mrf.mxu0
        %v1892 = vadd.f32 0.0, %v1891
        %1893 = vdwg.mxu0
        %1894 = vmatpush.bf16.msra.mxu0 %v1714
        %1895 = vmatpush.bf16.msra.mxu0 %v1712
        %1896 = vmatpush.bf16.msra.mxu0 %v1710
        %1897 = vmatpush.bf16.msra.mxu0 %v1708
        %1898 = vmatpush.bf16.msra.mxu0 %v1706
        %1899 = vmatpush.bf16.msra.mxu0 %v1704
        %1900 = vmatpush.bf16.msra.mxu0 %v1702
        %1901 = vmatpush.bf16.msra.mxu0 %v1700
        %1902 = vmatmul.bf16.gmra.mxu0 %v764
        %v1903 = vpop.f32.mrf.mxu0
        %v1904 = vadd.f32 %v1855, %v1903
        %v1905 = vpop.f32.mrf.mxu0
        %v1906 = vadd.f32 %v1857, %v1905
        %1907 = vmatmul.bf16.gmra.mxu0 %v766
        %v1908 = vpop.f32.mrf.mxu0
        %v1909 = vadd.f32 %v1860, %v1908
        %v1910 = vpop.f32.mrf.mxu0
        %v1911 = vadd.f32 %v1862, %v1910
        %1912 = vmatmul.bf16.gmra.mxu0 %v768
        %v1913 = vpop.f32.mrf.mxu0
        %v1914 = vadd.f32 %v1865, %v1913
        %v1915 = vpop.f32.mrf.mxu0
        %v1916 = vadd.f32 %v1867, %v1915
        %1917 = vmatmul.bf16.gmra.mxu0 %v770
        %v1918 = vpop.f32.mrf.mxu0
        %v1919 = vadd.f32 %v1870, %v1918
        %v1920 = vpop.f32.mrf.mxu0
        %v1921 = vadd.f32 %v1872, %v1920
        %1922 = vmatmul.bf16.gmra.mxu0 %v772
        %v1923 = vpop.f32.mrf.mxu0
        %v1924 = vadd.f32 %v1875, %v1923
        %v1925 = vpop.f32.mrf.mxu0
        %v1926 = vadd.f32 %v1877, %v1925
        %1927 = vmatmul.bf16.gmra.mxu0 %v774
        %v1928 = vpop.f32.mrf.mxu0
        %v1929 = vadd.f32 %v1880, %v1928
        %v1930 = vpop.f32.mrf.mxu0
        %v1931 = vadd.f32 %v1882, %v1930
        %1932 = vmatmul.bf16.gmra.mxu0 %v776
        %v1933 = vpop.f32.mrf.mxu0
        %v1934 = vadd.f32 %v1885, %v1933
        %v1935 = vpop.f32.mrf.mxu0
        %v1936 = vadd.f32 %v1887, %v1935
        %1937 = vmatmul.bf16.gmra.mxu0 %v778
        %v1938 = vpop.f32.mrf.mxu0
        %v1939 = vadd.f32 %v1890, %v1938
        %v1940 = vpop.f32.mrf.mxu0
        %v1941 = vadd.f32 %v1892, %v1940
        %1942 = vdwg.mxu0
        %v1943 = vld [vmem:[#allocation8 + $0x18] sm:$0xff]
        %v1944 = vld [vmem:[#allocation8 + $0x38] sm:$0xff]
        %v1945 = vld [vmem:[#allocation8 + $0x58] sm:$0xff]
        %v1946 = vld [vmem:[#allocation8 + $0x78] sm:$0xff]
        %v1947 = vld [vmem:[#allocation8 + $0x98] sm:$0xff]
        %v1948 = vld [vmem:[#allocation8 + $0xb8] sm:$0xff]
        %v1949 = vld [vmem:[#allocation8 + $0xd8] sm:$0xff]
        %v1950 = vld [vmem:[#allocation8 + $0xf8] sm:$0xff]
        %v1951 = vld [vmem:[#allocation8 + $0x118] sm:$0xff]
        %v1952 = vld [vmem:[#allocation8 + $0x138] sm:$0xff]
        %v1953 = vld [vmem:[#allocation8 + $0x158] sm:$0xff]
        %v1954 = vld [vmem:[#allocation8 + $0x178] sm:$0xff]
        %v1955 = vld [vmem:[#allocation8 + $0x198] sm:$0xff]
        %v1956 = vld [vmem:[#allocation8 + $0x1b8] sm:$0xff]
        %v1957 = vld [vmem:[#allocation8 + $0x1d8] sm:$0xff]
        %v1958 = vld [vmem:[#allocation8 + $0x1f8] sm:$0xff]
        %v1959 = vld [vmem:[#allocation8 + $0x218] sm:$0xff]
        %v1960 = vld [vmem:[#allocation8 + $0x238] sm:$0xff]
        %v1961 = vld [vmem:[#allocation8 + $0x258] sm:$0xff]
        %v1962 = vld [vmem:[#allocation8 + $0x278] sm:$0xff]
        %v1963 = vld [vmem:[#allocation8 + $0x298] sm:$0xff]
        %v1964 = vld [vmem:[#allocation8 + $0x2b8] sm:$0xff]
        %v1965 = vld [vmem:[#allocation8 + $0x2d8] sm:$0xff]
        %v1966 = vld [vmem:[#allocation8 + $0x2f8] sm:$0xff]
        %v1967 = vld [vmem:[#allocation8 + $0x318] sm:$0xff]
        %v1968 = vld [vmem:[#allocation8 + $0x338] sm:$0xff]
        %v1969 = vld [vmem:[#allocation8 + $0x358] sm:$0xff]
        %v1970 = vld [vmem:[#allocation8 + $0x378] sm:$0xff]
        %v1971 = vld [vmem:[#allocation8 + $0x398] sm:$0xff]
        %v1972 = vld [vmem:[#allocation8 + $0x3b8] sm:$0xff]
        %v1973 = vld [vmem:[#allocation8 + $0x3d8] sm:$0xff]
        %v1974 = vld [vmem:[#allocation8 + $0x3f8] sm:$0xff]
        %v2007 = vunpack.c.l.b16 %v1943
        %v2008 = vunpack.c.h.b16 %v1943
        %v2009 = vunpack.c.l.b16 %v1944
        %v2010 = vunpack.c.h.b16 %v1944
        %v2011 = vunpack.c.l.b16 %v1945
        %v2012 = vunpack.c.h.b16 %v1945
        %v2013 = vunpack.c.l.b16 %v1946
        %v2014 = vunpack.c.h.b16 %v1946
        %v2015 = vunpack.c.l.b16 %v1947
        %v2016 = vunpack.c.h.b16 %v1947
        %v2017 = vunpack.c.l.b16 %v1948
        %v2018 = vunpack.c.h.b16 %v1948
        %v2019 = vunpack.c.l.b16 %v1949
        %v2020 = vunpack.c.h.b16 %v1949
        %v2021 = vunpack.c.l.b16 %v1950
        %v2022 = vunpack.c.h.b16 %v1950
        %v2023 = vunpack.c.l.b16 %v1951
        %v2024 = vunpack.c.h.b16 %v1951
        %v2025 = vunpack.c.l.b16 %v1952
        %v2026 = vunpack.c.h.b16 %v1952
        %v2027 = vunpack.c.l.b16 %v1953
        %v2028 = vunpack.c.h.b16 %v1953
        %v2029 = vunpack.c.l.b16 %v1954
        %v2030 = vunpack.c.h.b16 %v1954
        %v2031 = vunpack.c.l.b16 %v1955
        %v2032 = vunpack.c.h.b16 %v1955
        %v2033 = vunpack.c.l.b16 %v1956
        %v2034 = vunpack.c.h.b16 %v1956
        %v2035 = vunpack.c.l.b16 %v1957
        %v2036 = vunpack.c.h.b16 %v1957
        %v2037 = vunpack.c.l.b16 %v1958
        %v2038 = vunpack.c.h.b16 %v1958
        %v2039 = vunpack.c.l.b16 %v1959
        %v2040 = vunpack.c.h.b16 %v1959
        %v2041 = vunpack.c.l.b16 %v1960
        %v2042 = vunpack.c.h.b16 %v1960
        %v2043 = vunpack.c.l.b16 %v1961
        %v2044 = vunpack.c.h.b16 %v1961
        %v2045 = vunpack.c.l.b16 %v1962
        %v2046 = vunpack.c.h.b16 %v1962
        %v2047 = vunpack.c.l.b16 %v1963
        %v2048 = vunpack.c.h.b16 %v1963
        %v2049 = vunpack.c.l.b16 %v1964
        %v2050 = vunpack.c.h.b16 %v1964
        %v2051 = vunpack.c.l.b16 %v1965
        %v2052 = vunpack.c.h.b16 %v1965
        %v2053 = vunpack.c.l.b16 %v1966
        %v2054 = vunpack.c.h.b16 %v1966
        %v2055 = vunpack.c.l.b16 %v1967
        %v2056 = vunpack.c.h.b16 %v1967
        %v2057 = vunpack.c.l.b16 %v1968
        %v2058 = vunpack.c.h.b16 %v1968
        %v2059 = vunpack.c.l.b16 %v1969
        %v2060 = vunpack.c.h.b16 %v1969
        %v2061 = vunpack.c.l.b16 %v1970
        %v2062 = vunpack.c.h.b16 %v1970
        %v2063 = vunpack.c.l.b16 %v1971
        %v2064 = vunpack.c.h.b16 %v1971
        %v2065 = vunpack.c.l.b16 %v1972
        %v2066 = vunpack.c.h.b16 %v1972
        %v2067 = vunpack.c.l.b16 %v1973
        %v2068 = vunpack.c.h.b16 %v1973
        %v2069 = vunpack.c.l.b16 %v1974
        %v2070 = vunpack.c.h.b16 %v1974
        %v2071 = vpack.c.b16 %v2009, %v2007
        %v2072 = vpack.c.b16 %v2010, %v2008
        %v2073 = vpack.c.b16 %v2013, %v2011
        %v2074 = vpack.c.b16 %v2014, %v2012
        %v2075 = vpack.c.b16 %v2017, %v2015
        %v2076 = vpack.c.b16 %v2018, %v2016
        %v2077 = vpack.c.b16 %v2021, %v2019
        %v2078 = vpack.c.b16 %v2022, %v2020
        %v2079 = vpack.c.b16 %v2025, %v2023
        %v2080 = vpack.c.b16 %v2026, %v2024
        %v2081 = vpack.c.b16 %v2029, %v2027
        %v2082 = vpack.c.b16 %v2030, %v2028
        %v2083 = vpack.c.b16 %v2033, %v2031
        %v2084 = vpack.c.b16 %v2034, %v2032
        %v2085 = vpack.c.b16 %v2037, %v2035
        %v2086 = vpack.c.b16 %v2038, %v2036
        %v2087 = vpack.c.b16 %v2041, %v2039
        %v2088 = vpack.c.b16 %v2042, %v2040
        %v2089 = vpack.c.b16 %v2045, %v2043
        %v2090 = vpack.c.b16 %v2046, %v2044
        %v2091 = vpack.c.b16 %v2049, %v2047
        %v2092 = vpack.c.b16 %v2050, %v2048
        %v2093 = vpack.c.b16 %v2053, %v2051
        %v2094 = vpack.c.b16 %v2054, %v2052
        %v2095 = vpack.c.b16 %v2057, %v2055
        %v2096 = vpack.c.b16 %v2058, %v2056
        %v2097 = vpack.c.b16 %v2061, %v2059
        %v2098 = vpack.c.b16 %v2062, %v2060
        %v2099 = vpack.c.b16 %v2065, %v2063
        %v2100 = vpack.c.b16 %v2066, %v2064
        %v2101 = vpack.c.b16 %v2069, %v2067
        %v2102 = vpack.c.b16 %v2070, %v2068
        %2135 = vmatpush.bf16.msra.mxu0 %v2085
        %2136 = vmatpush.bf16.msra.mxu0 %v2083
        %2137 = vmatpush.bf16.msra.mxu0 %v2081
        %2138 = vmatpush.bf16.msra.mxu0 %v2079
        %2139 = vmatpush.bf16.msra.mxu0 %v2077
        %2140 = vmatpush.bf16.msra.mxu0 %v2075
        %2141 = vmatpush.bf16.msra.mxu0 %v2073
        %2142 = vmatpush.bf16.msra.mxu0 %v2071
        %2143 = vmatmul.bf16.gmra.mxu0 %v763
        %v2144 = vpop.f32.mrf.mxu0
        %v2145 = vadd.f32 0.0, %v2144
        %v2146 = vpop.f32.mrf.mxu0
        %v2147 = vadd.f32 0.0, %v2146
        %2148 = vmatmul.bf16.gmra.mxu0 %v765
        %v2149 = vpop.f32.mrf.mxu0
        %v2150 = vadd.f32 0.0, %v2149
        %v2151 = vpop.f32.mrf.mxu0
        %v2152 = vadd.f32 0.0, %v2151
        %2153 = vmatmul.bf16.gmra.mxu0 %v767
        %v2154 = vpop.f32.mrf.mxu0
        %v2155 = vadd.f32 0.0, %v2154
        %v2156 = vpop.f32.mrf.mxu0
        %v2157 = vadd.f32 0.0, %v2156
        %2158 = vmatmul.bf16.gmra.mxu0 %v769
        %v2159 = vpop.f32.mrf.mxu0
        %v2160 = vadd.f32 0.0, %v2159
        %v2161 = vpop.f32.mrf.mxu0
        %v2162 = vadd.f32 0.0, %v2161
        %2163 = vmatmul.bf16.gmra.mxu0 %v771
        %v2164 = vpop.f32.mrf.mxu0
        %v2165 = vadd.f32 0.0, %v2164
        %v2166 = vpop.f32.mrf.mxu0
        %v2167 = vadd.f32 0.0, %v2166
        %2168 = vmatmul.bf16.gmra.mxu0 %v773
        %v2169 = vpop.f32.mrf.mxu0
        %v2170 = vadd.f32 0.0, %v2169
        %v2171 = vpop.f32.mrf.mxu0
        %v2172 = vadd.f32 0.0, %v2171
        %2173 = vmatmul.bf16.gmra.mxu0 %v775
        %v2174 = vpop.f32.mrf.mxu0
        %v2175 = vadd.f32 0.0, %v2174
        %v2176 = vpop.f32.mrf.mxu0
        %v2177 = vadd.f32 0.0, %v2176
        %2178 = vmatmul.bf16.gmra.mxu0 %v777
        %v2179 = vpop.f32.mrf.mxu0
        %v2180 = vadd.f32 0.0, %v2179
        %v2181 = vpop.f32.mrf.mxu0
        %v2182 = vadd.f32 0.0, %v2181
        %2183 = vdwg.mxu0
        %2184 = vmatpush.bf16.msra.mxu0 %v2101
        %2185 = vmatpush.bf16.msra.mxu0 %v2099
        %2186 = vmatpush.bf16.msra.mxu0 %v2097
        %2187 = vmatpush.bf16.msra.mxu0 %v2095
        %2188 = vmatpush.bf16.msra.mxu0 %v2093
        %2189 = vmatpush.bf16.msra.mxu0 %v2091
        %2190 = vmatpush.bf16.msra.mxu0 %v2089
        %2191 = vmatpush.bf16.msra.mxu0 %v2087
        %2192 = vmatmul.bf16.gmra.mxu0 %v764
        %v2193 = vpop.f32.mrf.mxu0
        %v2194 = vadd.f32 %v2145, %v2193
        %v2195 = vpop.f32.mrf.mxu0
        %v2196 = vadd.f32 %v2147, %v2195
        %2197 = vmatmul.bf16.gmra.mxu0 %v766
        %v2198 = vpop.f32.mrf.mxu0
        %v2199 = vadd.f32 %v2150, %v2198
        %v2200 = vpop.f32.mrf.mxu0
        %v2201 = vadd.f32 %v2152, %v2200
        %2202 = vmatmul.bf16.gmra.mxu0 %v768
        %v2203 = vpop.f32.mrf.mxu0
        %v2204 = vadd.f32 %v2155, %v2203
        %v2205 = vpop.f32.mrf.mxu0
        %v2206 = vadd.f32 %v2157, %v2205
        %2207 = vmatmul.bf16.gmra.mxu0 %v770
        %v2208 = vpop.f32.mrf.mxu0
        %v2209 = vadd.f32 %v2160, %v2208
        %v2210 = vpop.f32.mrf.mxu0
        %v2211 = vadd.f32 %v2162, %v2210
        %2212 = vmatmul.bf16.gmra.mxu0 %v772
        %v2213 = vpop.f32.mrf.mxu0
        %v2214 = vadd.f32 %v2165, %v2213
        %v2215 = vpop.f32.mrf.mxu0
        %v2216 = vadd.f32 %v2167, %v2215
        %2217 = vmatmul.bf16.gmra.mxu0 %v774
        %v2218 = vpop.f32.mrf.mxu0
        %v2219 = vadd.f32 %v2170, %v2218
        %v2220 = vpop.f32.mrf.mxu0
        %v2221 = vadd.f32 %v2172, %v2220
        %2222 = vmatmul.bf16.gmra.mxu0 %v776
        %v2223 = vpop.f32.mrf.mxu0
        %v2224 = vadd.f32 %v2175, %v2223
        %v2225 = vpop.f32.mrf.mxu0
        %v2226 = vadd.f32 %v2177, %v2225
        %2227 = vmatmul.bf16.gmra.mxu0 %v778
        %v2228 = vpop.f32.mrf.mxu0
        %v2229 = vadd.f32 %v2180, %v2228
        %v2230 = vpop.f32.mrf.mxu0
        %v2231 = vadd.f32 %v2182, %v2230
        %2232 = vdwg.mxu0
        %2233 = vmatpush.bf16.msra.mxu0 %v2086
        %2234 = vmatpush.bf16.msra.mxu0 %v2084
        %2235 = vmatpush.bf16.msra.mxu0 %v2082
        %2236 = vmatpush.bf16.msra.mxu0 %v2080
        %2237 = vmatpush.bf16.msra.mxu0 %v2078
        %2238 = vmatpush.bf16.msra.mxu0 %v2076
        %2239 = vmatpush.bf16.msra.mxu0 %v2074
        %2240 = vmatpush.bf16.msra.mxu0 %v2072
        %2241 = vmatmul.bf16.gmra.mxu0 %v763
        %v2242 = vpop.f32.mrf.mxu0
        %v2243 = vadd.f32 0.0, %v2242
        %v2244 = vpop.f32.mrf.mxu0
        %v2245 = vadd.f32 0.0, %v2244
        %2246 = vmatmul.bf16.gmra.mxu0 %v765
        %v2247 = vpop.f32.mrf.mxu0
        %v2248 = vadd.f32 0.0, %v2247
        %v2249 = vpop.f32.mrf.mxu0
        %v2250 = vadd.f32 0.0, %v2249
        %2251 = vmatmul.bf16.gmra.mxu0 %v767
        %v2252 = vpop.f32.mrf.mxu0
        %v2253 = vadd.f32 0.0, %v2252
        %v2254 = vpop.f32.mrf.mxu0
        %v2255 = vadd.f32 0.0, %v2254
        %2256 = vmatmul.bf16.gmra.mxu0 %v769
        %v2257 = vpop.f32.mrf.mxu0
        %v2258 = vadd.f32 0.0, %v2257
        %v2259 = vpop.f32.mrf.mxu0
        %v2260 = vadd.f32 0.0, %v2259
        %2261 = vmatmul.bf16.gmra.mxu0 %v771
        %v2262 = vpop.f32.mrf.mxu0
        %v2263 = vadd.f32 0.0, %v2262
        %v2264 = vpop.f32.mrf.mxu0
        %v2265 = vadd.f32 0.0, %v2264
        %2266 = vmatmul.bf16.gmra.mxu0 %v773
        %v2267 = vpop.f32.mrf.mxu0
        %v2268 = vadd.f32 0.0, %v2267
        %v2269 = vpop.f32.mrf.mxu0
        %v2270 = vadd.f32 0.0, %v2269
        %2271 = vmatmul.bf16.gmra.mxu0 %v775
        %v2272 = vpop.f32.mrf.mxu0
        %v2273 = vadd.f32 0.0, %v2272
        %v2274 = vpop.f32.mrf.mxu0
        %v2275 = vadd.f32 0.0, %v2274
        %2276 = vmatmul.bf16.gmra.mxu0 %v777
        %v2277 = vpop.f32.mrf.mxu0
        %v2278 = vadd.f32 0.0, %v2277
        %v2279 = vpop.f32.mrf.mxu0
        %v2280 = vadd.f32 0.0, %v2279
        %2281 = vdwg.mxu0
        %2282 = vmatpush.bf16.msra.mxu0 %v2102
        %2283 = vmatpush.bf16.msra.mxu0 %v2100
        %2284 = vmatpush.bf16.msra.mxu0 %v2098
        %2285 = vmatpush.bf16.msra.mxu0 %v2096
        %2286 = vmatpush.bf16.msra.mxu0 %v2094
        %2287 = vmatpush.bf16.msra.mxu0 %v2092
        %2288 = vmatpush.bf16.msra.mxu0 %v2090
        %2289 = vmatpush.bf16.msra.mxu0 %v2088
        %2290 = vmatmul.bf16.gmra.mxu0 %v764
        %v2291 = vpop.f32.mrf.mxu0
        %v2292 = vadd.f32 %v2243, %v2291
        %v2293 = vpop.f32.mrf.mxu0
        %v2294 = vadd.f32 %v2245, %v2293
        %2295 = vmatmul.bf16.gmra.mxu0 %v766
        %v2296 = vpop.f32.mrf.mxu0
        %v2297 = vadd.f32 %v2248, %v2296
        %v2298 = vpop.f32.mrf.mxu0
        %v2299 = vadd.f32 %v2250, %v2298
        %2300 = vmatmul.bf16.gmra.mxu0 %v768
        %v2301 = vpop.f32.mrf.mxu0
        %v2302 = vadd.f32 %v2253, %v2301
        %v2303 = vpop.f32.mrf.mxu0
        %v2304 = vadd.f32 %v2255, %v2303
        %2305 = vmatmul.bf16.gmra.mxu0 %v770
        %v2306 = vpop.f32.mrf.mxu0
        %v2307 = vadd.f32 %v2258, %v2306
        %v2308 = vpop.f32.mrf.mxu0
        %v2309 = vadd.f32 %v2260, %v2308
        %2310 = vmatmul.bf16.gmra.mxu0 %v772
        %v2311 = vpop.f32.mrf.mxu0
        %v2312 = vadd.f32 %v2263, %v2311
        %v2313 = vpop.f32.mrf.mxu0
        %v2314 = vadd.f32 %v2265, %v2313
        %2315 = vmatmul.bf16.gmra.mxu0 %v774
        %v2316 = vpop.f32.mrf.mxu0
        %v2317 = vadd.f32 %v2268, %v2316
        %v2318 = vpop.f32.mrf.mxu0
        %v2319 = vadd.f32 %v2270, %v2318
        %2320 = vmatmul.bf16.gmra.mxu0 %v776
        %v2321 = vpop.f32.mrf.mxu0
        %v2322 = vadd.f32 %v2273, %v2321
        %v2323 = vpop.f32.mrf.mxu0
        %v2324 = vadd.f32 %v2275, %v2323
        %2325 = vmatmul.bf16.gmra.mxu0 %v778
        %v2326 = vpop.f32.mrf.mxu0
        %v2327 = vadd.f32 %v2278, %v2326
        %v2328 = vpop.f32.mrf.mxu0
        %v2329 = vadd.f32 %v2280, %v2328
        %2330 = vdwg.mxu0
        %v2331 = vxor.u32 %v1806, 2147483648
        %v2332 = vxor.u32 %v1904, 2147483648
        %v2333 = vxor.u32 %v1808, 2147483648
        %v2334 = vxor.u32 %v1906, 2147483648
        %v2335 = vxor.u32 %v1811, 2147483648
        %v2336 = vxor.u32 %v1909, 2147483648
        %v2337 = vxor.u32 %v1813, 2147483648
        %v2338 = vxor.u32 %v1911, 2147483648
        %v2339 = vxor.u32 %v1816, 2147483648
        %v2340 = vxor.u32 %v1914, 2147483648
        %v2341 = vxor.u32 %v1818, 2147483648
        %v2342 = vxor.u32 %v1916, 2147483648
        %v2343 = vxor.u32 %v1821, 2147483648
        %v2344 = vxor.u32 %v1919, 2147483648
        %v2345 = vxor.u32 %v1823, 2147483648
        %v2346 = vxor.u32 %v1921, 2147483648
        %v2347 = vxor.u32 %v1826, 2147483648
        %v2348 = vxor.u32 %v1924, 2147483648
        %v2349 = vxor.u32 %v1828, 2147483648
        %v2350 = vxor.u32 %v1926, 2147483648
        %v2351 = vxor.u32 %v1831, 2147483648
        %v2352 = vxor.u32 %v1929, 2147483648
        %v2353 = vxor.u32 %v1833, 2147483648
        %v2354 = vxor.u32 %v1931, 2147483648
        %v2355 = vxor.u32 %v1836, 2147483648
        %v2356 = vxor.u32 %v1934, 2147483648
        %v2357 = vxor.u32 %v1838, 2147483648
        %v2358 = vxor.u32 %v1936, 2147483648
        %v2359 = vxor.u32 %v1841, 2147483648
        %v2360 = vxor.u32 %v1939, 2147483648
        %v2361 = vxor.u32 %v1843, 2147483648
        %v2362 = vxor.u32 %v1941, 2147483648
        %v2363 = vmul.f32 %v2331, 1.442695
        %v2364 = vpow.pop %v2363
        %v2365 = vmul.f32 %v2332, 1.442695
        %v2366 = vpow.pop %v2365
        %v2367 = vmul.f32 %v2333, 1.442695
        %v2368 = vpow.pop %v2367
        %v2369 = vmul.f32 %v2334, 1.442695
        %v2370 = vpow.pop %v2369
        %v2371 = vmul.f32 %v2335, 1.442695
        %v2372 = vpow.pop %v2371
        %v2373 = vmul.f32 %v2336, 1.442695
        %v2374 = vpow.pop %v2373
        %v2375 = vmul.f32 %v2337, 1.442695
        %v2376 = vpow.pop %v2375
        %v2377 = vmul.f32 %v2338, 1.442695
        %v2378 = vpow.pop %v2377
        %v2379 = vmul.f32 %v2339, 1.442695
        %v2380 = vpow.pop %v2379
        %v2381 = vmul.f32 %v2340, 1.442695
        %v2382 = vpow.pop %v2381
        %v2383 = vmul.f32 %v2341, 1.442695
        %v2384 = vpow.pop %v2383
        %v2385 = vmul.f32 %v2342, 1.442695
        %v2386 = vpow.pop %v2385
        %v2387 = vmul.f32 %v2343, 1.442695
        %v2388 = vpow.pop %v2387
        %v2389 = vmul.f32 %v2344, 1.442695
        %v2390 = vpow.pop %v2389
        %v2391 = vmul.f32 %v2345, 1.442695
        %v2392 = vpow.pop %v2391
        %v2393 = vmul.f32 %v2346, 1.442695
        %v2394 = vpow.pop %v2393
        %v2395 = vmul.f32 %v2347, 1.442695
        %v2396 = vpow.pop %v2395
        %v2397 = vmul.f32 %v2348, 1.442695
        %v2398 = vpow.pop %v2397
        %v2399 = vmul.f32 %v2349, 1.442695
        %v2400 = vpow.pop %v2399
        %v2401 = vmul.f32 %v2350, 1.442695
        %v2402 = vpow.pop %v2401
        %v2403 = vmul.f32 %v2351, 1.442695
        %v2404 = vpow.pop %v2403
        %v2405 = vmul.f32 %v2352, 1.442695
        %v2406 = vpow.pop %v2405
        %v2407 = vmul.f32 %v2353, 1.442695
        %v2408 = vpow.pop %v2407
        %v2409 = vmul.f32 %v2354, 1.442695
        %v2410 = vpow.pop %v2409
        %v2411 = vmul.f32 %v2355, 1.442695
        %v2412 = vpow.pop %v2411
        %v2413 = vmul.f32 %v2356, 1.442695
        %v2414 = vpow.pop %v2413
        %v2415 = vmul.f32 %v2357, 1.442695
        %v2416 = vpow.pop %v2415
        %v2417 = vmul.f32 %v2358, 1.442695
        %v2418 = vpow.pop %v2417
        %v2419 = vmul.f32 %v2359, 1.442695
        %v2420 = vpow.pop %v2419
        %v2421 = vmul.f32 %v2360, 1.442695
        %v2422 = vpow.pop %v2421
        %v2423 = vmul.f32 %v2361, 1.442695
        %v2424 = vpow.pop %v2423
        %v2425 = vmul.f32 %v2362, 1.442695
        %v2426 = vpow.pop %v2425
        %v2427 = vadd.f32 %v2364, 1.0
        %v2428 = vadd.f32 %v2366, 1.0
        %v2429 = vadd.f32 %v2368, 1.0
        %v2430 = vadd.f32 %v2370, 1.0
        %v2431 = vadd.f32 %v2372, 1.0
        %v2432 = vadd.f32 %v2374, 1.0
        %v2433 = vadd.f32 %v2376, 1.0
        %v2434 = vadd.f32 %v2378, 1.0
        %v2435 = vadd.f32 %v2380, 1.0
        %v2436 = vadd.f32 %v2382, 1.0
        %v2437 = vadd.f32 %v2384, 1.0
        %v2438 = vadd.f32 %v2386, 1.0
        %v2439 = vadd.f32 %v2388, 1.0
        %v2440 = vadd.f32 %v2390, 1.0
        %v2441 = vadd.f32 %v2392, 1.0
        %v2442 = vadd.f32 %v2394, 1.0
        %v2443 = vadd.f32 %v2396, 1.0
        %v2444 = vadd.f32 %v2398, 1.0
        %v2445 = vadd.f32 %v2400, 1.0
        %v2446 = vadd.f32 %v2402, 1.0
        %v2447 = vadd.f32 %v2404, 1.0
        %v2448 = vadd.f32 %v2406, 1.0
        %v2449 = vadd.f32 %v2408, 1.0
        %v2450 = vadd.f32 %v2410, 1.0
        %v2451 = vadd.f32 %v2412, 1.0
        %v2452 = vadd.f32 %v2414, 1.0
        %v2453 = vadd.f32 %v2416, 1.0
        %v2454 = vadd.f32 %v2418, 1.0
        %v2455 = vadd.f32 %v2420, 1.0
        %v2456 = vadd.f32 %v2422, 1.0
        %v2457 = vadd.f32 %v2424, 1.0
        %v2458 = vadd.f32 %v2426, 1.0
        %v2459 = vrcp.pop %v2427
        %v2460 = vmul.f32 %v2427, %v2459
        %v2461 = vsub.f32 1.0, %v2460
        %v2462 = vmul.f32 %v2459, %v2461
        %v2463 = vadd.f32 %v2459, %v2462
        %vm2464 = vweird.f32 %v2427
        %vm2465 = vweird.f32 %v2459
        %vm2466 = vmor %vm2464, %vm2465
        %v2467 = vsel %vm2466, %v2459, %v2463
        %v2468 = vand.u32 2147483647, %v2427
        %vm2469 = vcmp.eq.f32.partialorder %v2468, 8.507059e+37
        %v2470 = vand.u32 %v2427, 2147483648
        %v2471 = vor.u32 1.1754944e-38, %v2470
        %v2472 = vsel %vm2469, %v2471, %v2467
        %v2473 = vmul.f32 1.0, %v2472
        %v2474 = vrcp.pop %v2428
        %v2475 = vmul.f32 %v2428, %v2474
        %v2476 = vsub.f32 1.0, %v2475
        %v2477 = vmul.f32 %v2474, %v2476
        %v2478 = vadd.f32 %v2474, %v2477
        %vm2479 = vweird.f32 %v2428
        %vm2480 = vweird.f32 %v2474
        %vm2481 = vmor %vm2479, %vm2480
        %v2482 = vsel %vm2481, %v2474, %v2478
        %v2483 = vand.u32 2147483647, %v2428
        %vm2484 = vcmp.eq.f32.partialorder %v2483, 8.507059e+37
        %v2485 = vand.u32 %v2428, 2147483648
        %v2486 = vor.u32 1.1754944e-38, %v2485
        %v2487 = vsel %vm2484, %v2486, %v2482
        %v2488 = vmul.f32 1.0, %v2487
        %v2489 = vrcp.pop %v2429
        %v2490 = vmul.f32 %v2429, %v2489
        %v2491 = vsub.f32 1.0, %v2490
        %v2492 = vmul.f32 %v2489, %v2491
        %v2493 = vadd.f32 %v2489, %v2492
        %vm2494 = vweird.f32 %v2429
        %vm2495 = vweird.f32 %v2489
        %vm2496 = vmor %vm2494, %vm2495
        %v2497 = vsel %vm2496, %v2489, %v2493
        %v2498 = vand.u32 2147483647, %v2429
        %vm2499 = vcmp.eq.f32.partialorder %v2498, 8.507059e+37
        %v2500 = vand.u32 %v2429, 2147483648
        %v2501 = vor.u32 1.1754944e-38, %v2500
        %v2502 = vsel %vm2499, %v2501, %v2497
        %v2503 = vmul.f32 1.0, %v2502
        %v2504 = vrcp.pop %v2430
        %v2505 = vmul.f32 %v2430, %v2504
        %v2506 = vsub.f32 1.0, %v2505
        %v2507 = vmul.f32 %v2504, %v2506
        %v2508 = vadd.f32 %v2504, %v2507
        %vm2509 = vweird.f32 %v2430
        %vm2510 = vweird.f32 %v2504
        %vm2511 = vmor %vm2509, %vm2510
        %v2512 = vsel %vm2511, %v2504, %v2508
        %v2513 = vand.u32 2147483647, %v2430
        %vm2514 = vcmp.eq.f32.partialorder %v2513, 8.507059e+37
        %v2515 = vand.u32 %v2430, 2147483648
        %v2516 = vor.u32 1.1754944e-38, %v2515
        %v2517 = vsel %vm2514, %v2516, %v2512
        %v2518 = vmul.f32 1.0, %v2517
        %v2519 = vrcp.pop %v2431
        %v2520 = vmul.f32 %v2431, %v2519
        %v2521 = vsub.f32 1.0, %v2520
        %v2522 = vmul.f32 %v2519, %v2521
        %v2523 = vadd.f32 %v2519, %v2522
        %vm2524 = vweird.f32 %v2431
        %vm2525 = vweird.f32 %v2519
        %vm2526 = vmor %vm2524, %vm2525
        %v2527 = vsel %vm2526, %v2519, %v2523
        %v2528 = vand.u32 2147483647, %v2431
        %vm2529 = vcmp.eq.f32.partialorder %v2528, 8.507059e+37
        %v2530 = vand.u32 %v2431, 2147483648
        %v2531 = vor.u32 1.1754944e-38, %v2530
        %v2532 = vsel %vm2529, %v2531, %v2527
        %v2533 = vmul.f32 1.0, %v2532
        %v2534 = vrcp.pop %v2432
        %v2535 = vmul.f32 %v2432, %v2534
        %v2536 = vsub.f32 1.0, %v2535
        %v2537 = vmul.f32 %v2534, %v2536
        %v2538 = vadd.f32 %v2534, %v2537
        %vm2539 = vweird.f32 %v2432
        %vm2540 = vweird.f32 %v2534
        %vm2541 = vmor %vm2539, %vm2540
        %v2542 = vsel %vm2541, %v2534, %v2538
        %v2543 = vand.u32 2147483647, %v2432
        %vm2544 = vcmp.eq.f32.partialorder %v2543, 8.507059e+37
        %v2545 = vand.u32 %v2432, 2147483648
        %v2546 = vor.u32 1.1754944e-38, %v2545
        %v2547 = vsel %vm2544, %v2546, %v2542
        %v2548 = vmul.f32 1.0, %v2547
        %v2549 = vrcp.pop %v2433
        %v2550 = vmul.f32 %v2433, %v2549
        %v2551 = vsub.f32 1.0, %v2550
        %v2552 = vmul.f32 %v2549, %v2551
        %v2553 = vadd.f32 %v2549, %v2552
        %vm2554 = vweird.f32 %v2433
        %vm2555 = vweird.f32 %v2549
        %vm2556 = vmor %vm2554, %vm2555
        %v2557 = vsel %vm2556, %v2549, %v2553
        %v2558 = vand.u32 2147483647, %v2433
        %vm2559 = vcmp.eq.f32.partialorder %v2558, 8.507059e+37
        %v2560 = vand.u32 %v2433, 2147483648
        %v2561 = vor.u32 1.1754944e-38, %v2560
        %v2562 = vsel %vm2559, %v2561, %v2557
        %v2563 = vmul.f32 1.0, %v2562
        %v2564 = vrcp.pop %v2434
        %v2565 = vmul.f32 %v2434, %v2564
        %v2566 = vsub.f32 1.0, %v2565
        %v2567 = vmul.f32 %v2564, %v2566
        %v2568 = vadd.f32 %v2564, %v2567
        %vm2569 = vweird.f32 %v2434
        %vm2570 = vweird.f32 %v2564
        %vm2571 = vmor %vm2569, %vm2570
        %v2572 = vsel %vm2571, %v2564, %v2568
        %v2573 = vand.u32 2147483647, %v2434
        %vm2574 = vcmp.eq.f32.partialorder %v2573, 8.507059e+37
        %v2575 = vand.u32 %v2434, 2147483648
        %v2576 = vor.u32 1.1754944e-38, %v2575
        %v2577 = vsel %vm2574, %v2576, %v2572
        %v2578 = vmul.f32 1.0, %v2577
        %v2579 = vrcp.pop %v2435
        %v2580 = vmul.f32 %v2435, %v2579
        %v2581 = vsub.f32 1.0, %v2580
        %v2582 = vmul.f32 %v2579, %v2581
        %v2583 = vadd.f32 %v2579, %v2582
        %vm2584 = vweird.f32 %v2435
        %vm2585 = vweird.f32 %v2579
        %vm2586 = vmor %vm2584, %vm2585
        %v2587 = vsel %vm2586, %v2579, %v2583
        %v2588 = vand.u32 2147483647, %v2435
        %vm2589 = vcmp.eq.f32.partialorder %v2588, 8.507059e+37
        %v2590 = vand.u32 %v2435, 2147483648
        %v2591 = vor.u32 1.1754944e-38, %v2590
        %v2592 = vsel %vm2589, %v2591, %v2587
        %v2593 = vmul.f32 1.0, %v2592
        %v2594 = vrcp.pop %v2436
        %v2595 = vmul.f32 %v2436, %v2594
        %v2596 = vsub.f32 1.0, %v2595
        %v2597 = vmul.f32 %v2594, %v2596
        %v2598 = vadd.f32 %v2594, %v2597
        %vm2599 = vweird.f32 %v2436
        %vm2600 = vweird.f32 %v2594
        %vm2601 = vmor %vm2599, %vm2600
        %v2602 = vsel %vm2601, %v2594, %v2598
        %v2603 = vand.u32 2147483647, %v2436
        %vm2604 = vcmp.eq.f32.partialorder %v2603, 8.507059e+37
        %v2605 = vand.u32 %v2436, 2147483648
        %v2606 = vor.u32 1.1754944e-38, %v2605
        %v2607 = vsel %vm2604, %v2606, %v2602
        %v2608 = vmul.f32 1.0, %v2607
        %v2609 = vrcp.pop %v2437
        %v2610 = vmul.f32 %v2437, %v2609
        %v2611 = vsub.f32 1.0, %v2610
        %v2612 = vmul.f32 %v2609, %v2611
        %v2613 = vadd.f32 %v2609, %v2612
        %vm2614 = vweird.f32 %v2437
        %vm2615 = vweird.f32 %v2609
        %vm2616 = vmor %vm2614, %vm2615
        %v2617 = vsel %vm2616, %v2609, %v2613
        %v2618 = vand.u32 2147483647, %v2437
        %vm2619 = vcmp.eq.f32.partialorder %v2618, 8.507059e+37
        %v2620 = vand.u32 %v2437, 2147483648
        %v2621 = vor.u32 1.1754944e-38, %v2620
        %v2622 = vsel %vm2619, %v2621, %v2617
        %v2623 = vmul.f32 1.0, %v2622
        %v2624 = vrcp.pop %v2438
        %v2625 = vmul.f32 %v2438, %v2624
        %v2626 = vsub.f32 1.0, %v2625
        %v2627 = vmul.f32 %v2624, %v2626
        %v2628 = vadd.f32 %v2624, %v2627
        %vm2629 = vweird.f32 %v2438
        %vm2630 = vweird.f32 %v2624
        %vm2631 = vmor %vm2629, %vm2630
        %v2632 = vsel %vm2631, %v2624, %v2628
        %v2633 = vand.u32 2147483647, %v2438
        %vm2634 = vcmp.eq.f32.partialorder %v2633, 8.507059e+37
        %v2635 = vand.u32 %v2438, 2147483648
        %v2636 = vor.u32 1.1754944e-38, %v2635
        %v2637 = vsel %vm2634, %v2636, %v2632
        %v2638 = vmul.f32 1.0, %v2637
        %v2639 = vrcp.pop %v2439
        %v2640 = vmul.f32 %v2439, %v2639
        %v2641 = vsub.f32 1.0, %v2640
        %v2642 = vmul.f32 %v2639, %v2641
        %v2643 = vadd.f32 %v2639, %v2642
        %vm2644 = vweird.f32 %v2439
        %vm2645 = vweird.f32 %v2639
        %vm2646 = vmor %vm2644, %vm2645
        %v2647 = vsel %vm2646, %v2639, %v2643
        %v2648 = vand.u32 2147483647, %v2439
        %vm2649 = vcmp.eq.f32.partialorder %v2648, 8.507059e+37
        %v2650 = vand.u32 %v2439, 2147483648
        %v2651 = vor.u32 1.1754944e-38, %v2650
        %v2652 = vsel %vm2649, %v2651, %v2647
        %v2653 = vmul.f32 1.0, %v2652
        %v2654 = vrcp.pop %v2440
        %v2655 = vmul.f32 %v2440, %v2654
        %v2656 = vsub.f32 1.0, %v2655
        %v2657 = vmul.f32 %v2654, %v2656
        %v2658 = vadd.f32 %v2654, %v2657
        %vm2659 = vweird.f32 %v2440
        %vm2660 = vweird.f32 %v2654
        %vm2661 = vmor %vm2659, %vm2660
        %v2662 = vsel %vm2661, %v2654, %v2658
        %v2663 = vand.u32 2147483647, %v2440
        %vm2664 = vcmp.eq.f32.partialorder %v2663, 8.507059e+37
        %v2665 = vand.u32 %v2440, 2147483648
        %v2666 = vor.u32 1.1754944e-38, %v2665
        %v2667 = vsel %vm2664, %v2666, %v2662
        %v2668 = vmul.f32 1.0, %v2667
        %v2669 = vrcp.pop %v2441
        %v2670 = vmul.f32 %v2441, %v2669
        %v2671 = vsub.f32 1.0, %v2670
        %v2672 = vmul.f32 %v2669, %v2671
        %v2673 = vadd.f32 %v2669, %v2672
        %vm2674 = vweird.f32 %v2441
        %vm2675 = vweird.f32 %v2669
        %vm2676 = vmor %vm2674, %vm2675
        %v2677 = vsel %vm2676, %v2669, %v2673
        %v2678 = vand.u32 2147483647, %v2441
        %vm2679 = vcmp.eq.f32.partialorder %v2678, 8.507059e+37
        %v2680 = vand.u32 %v2441, 2147483648
        %v2681 = vor.u32 1.1754944e-38, %v2680
        %v2682 = vsel %vm2679, %v2681, %v2677
        %v2683 = vmul.f32 1.0, %v2682
        %v2684 = vrcp.pop %v2442
        %v2685 = vmul.f32 %v2442, %v2684
        %v2686 = vsub.f32 1.0, %v2685
        %v2687 = vmul.f32 %v2684, %v2686
        %v2688 = vadd.f32 %v2684, %v2687
        %vm2689 = vweird.f32 %v2442
        %vm2690 = vweird.f32 %v2684
        %vm2691 = vmor %vm2689, %vm2690
        %v2692 = vsel %vm2691, %v2684, %v2688
        %v2693 = vand.u32 2147483647, %v2442
        %vm2694 = vcmp.eq.f32.partialorder %v2693, 8.507059e+37
        %v2695 = vand.u32 %v2442, 2147483648
        %v2696 = vor.u32 1.1754944e-38, %v2695
        %v2697 = vsel %vm2694, %v2696, %v2692
        %v2698 = vmul.f32 1.0, %v2697
        %v2699 = vrcp.pop %v2443
        %v2700 = vmul.f32 %v2443, %v2699
        %v2701 = vsub.f32 1.0, %v2700
        %v2702 = vmul.f32 %v2699, %v2701
        %v2703 = vadd.f32 %v2699, %v2702
        %vm2704 = vweird.f32 %v2443
        %vm2705 = vweird.f32 %v2699
        %vm2706 = vmor %vm2704, %vm2705
        %v2707 = vsel %vm2706, %v2699, %v2703
        %v2708 = vand.u32 2147483647, %v2443
        %vm2709 = vcmp.eq.f32.partialorder %v2708, 8.507059e+37
        %v2710 = vand.u32 %v2443, 2147483648
        %v2711 = vor.u32 1.1754944e-38, %v2710
        %v2712 = vsel %vm2709, %v2711, %v2707
        %v2713 = vmul.f32 1.0, %v2712
        %v2714 = vrcp.pop %v2444
        %v2715 = vmul.f32 %v2444, %v2714
        %v2716 = vsub.f32 1.0, %v2715
        %v2717 = vmul.f32 %v2714, %v2716
        %v2718 = vadd.f32 %v2714, %v2717
        %vm2719 = vweird.f32 %v2444
        %vm2720 = vweird.f32 %v2714
        %vm2721 = vmor %vm2719, %vm2720
        %v2722 = vsel %vm2721, %v2714, %v2718
        %v2723 = vand.u32 2147483647, %v2444
        %vm2724 = vcmp.eq.f32.partialorder %v2723, 8.507059e+37
        %v2725 = vand.u32 %v2444, 2147483648
        %v2726 = vor.u32 1.1754944e-38, %v2725
        %v2727 = vsel %vm2724, %v2726, %v2722
        %v2728 = vmul.f32 1.0, %v2727
        %v2729 = vrcp.pop %v2445
        %v2730 = vmul.f32 %v2445, %v2729
        %v2731 = vsub.f32 1.0, %v2730
        %v2732 = vmul.f32 %v2729, %v2731
        %v2733 = vadd.f32 %v2729, %v2732
        %vm2734 = vweird.f32 %v2445
        %vm2735 = vweird.f32 %v2729
        %vm2736 = vmor %vm2734, %vm2735
        %v2737 = vsel %vm2736, %v2729, %v2733
        %v2738 = vand.u32 2147483647, %v2445
        %vm2739 = vcmp.eq.f32.partialorder %v2738, 8.507059e+37
        %v2740 = vand.u32 %v2445, 2147483648
        %v2741 = vor.u32 1.1754944e-38, %v2740
        %v2742 = vsel %vm2739, %v2741, %v2737
        %v2743 = vmul.f32 1.0, %v2742
        %v2744 = vrcp.pop %v2446
        %v2745 = vmul.f32 %v2446, %v2744
        %v2746 = vsub.f32 1.0, %v2745
        %v2747 = vmul.f32 %v2744, %v2746
        %v2748 = vadd.f32 %v2744, %v2747
        %vm2749 = vweird.f32 %v2446
        %vm2750 = vweird.f32 %v2744
        %vm2751 = vmor %vm2749, %vm2750
        %v2752 = vsel %vm2751, %v2744, %v2748
        %v2753 = vand.u32 2147483647, %v2446
        %vm2754 = vcmp.eq.f32.partialorder %v2753, 8.507059e+37
        %v2755 = vand.u32 %v2446, 2147483648
        %v2756 = vor.u32 1.1754944e-38, %v2755
        %v2757 = vsel %vm2754, %v2756, %v2752
        %v2758 = vmul.f32 1.0, %v2757
        %v2759 = vrcp.pop %v2447
        %v2760 = vmul.f32 %v2447, %v2759
        %v2761 = vsub.f32 1.0, %v2760
        %v2762 = vmul.f32 %v2759, %v2761
        %v2763 = vadd.f32 %v2759, %v2762
        %vm2764 = vweird.f32 %v2447
        %vm2765 = vweird.f32 %v2759
        %vm2766 = vmor %vm2764, %vm2765
        %v2767 = vsel %vm2766, %v2759, %v2763
        %v2768 = vand.u32 2147483647, %v2447
        %vm2769 = vcmp.eq.f32.partialorder %v2768, 8.507059e+37
        %v2770 = vand.u32 %v2447, 2147483648
        %v2771 = vor.u32 1.1754944e-38, %v2770
        %v2772 = vsel %vm2769, %v2771, %v2767
        %v2773 = vmul.f32 1.0, %v2772
        %v2774 = vrcp.pop %v2448
        %v2775 = vmul.f32 %v2448, %v2774
        %v2776 = vsub.f32 1.0, %v2775
        %v2777 = vmul.f32 %v2774, %v2776
        %v2778 = vadd.f32 %v2774, %v2777
        %vm2779 = vweird.f32 %v2448
        %vm2780 = vweird.f32 %v2774
        %vm2781 = vmor %vm2779, %vm2780
        %v2782 = vsel %vm2781, %v2774, %v2778
        %v2783 = vand.u32 2147483647, %v2448
        %vm2784 = vcmp.eq.f32.partialorder %v2783, 8.507059e+37
        %v2785 = vand.u32 %v2448, 2147483648
        %v2786 = vor.u32 1.1754944e-38, %v2785
        %v2787 = vsel %vm2784, %v2786, %v2782
        %v2788 = vmul.f32 1.0, %v2787
        %v2789 = vrcp.pop %v2449
        %v2790 = vmul.f32 %v2449, %v2789
        %v2791 = vsub.f32 1.0, %v2790
        %v2792 = vmul.f32 %v2789, %v2791
        %v2793 = vadd.f32 %v2789, %v2792
        %vm2794 = vweird.f32 %v2449
        %vm2795 = vweird.f32 %v2789
        %vm2796 = vmor %vm2794, %vm2795
        %v2797 = vsel %vm2796, %v2789, %v2793
        %v2798 = vand.u32 2147483647, %v2449
        %vm2799 = vcmp.eq.f32.partialorder %v2798, 8.507059e+37
        %v2800 = vand.u32 %v2449, 2147483648
        %v2801 = vor.u32 1.1754944e-38, %v2800
        %v2802 = vsel %vm2799, %v2801, %v2797
        %v2803 = vmul.f32 1.0, %v2802
        %v2804 = vrcp.pop %v2450
        %v2805 = vmul.f32 %v2450, %v2804
        %v2806 = vsub.f32 1.0, %v2805
        %v2807 = vmul.f32 %v2804, %v2806
        %v2808 = vadd.f32 %v2804, %v2807
        %vm2809 = vweird.f32 %v2450
        %vm2810 = vweird.f32 %v2804
        %vm2811 = vmor %vm2809, %vm2810
        %v2812 = vsel %vm2811, %v2804, %v2808
        %v2813 = vand.u32 2147483647, %v2450
        %vm2814 = vcmp.eq.f32.partialorder %v2813, 8.507059e+37
        %v2815 = vand.u32 %v2450, 2147483648
        %v2816 = vor.u32 1.1754944e-38, %v2815
        %v2817 = vsel %vm2814, %v2816, %v2812
        %v2818 = vmul.f32 1.0, %v2817
        %v2819 = vrcp.pop %v2451
        %v2820 = vmul.f32 %v2451, %v2819
        %v2821 = vsub.f32 1.0, %v2820
        %v2822 = vmul.f32 %v2819, %v2821
        %v2823 = vadd.f32 %v2819, %v2822
        %vm2824 = vweird.f32 %v2451
        %vm2825 = vweird.f32 %v2819
        %vm2826 = vmor %vm2824, %vm2825
        %v2827 = vsel %vm2826, %v2819, %v2823
        %v2828 = vand.u32 2147483647, %v2451
        %vm2829 = vcmp.eq.f32.partialorder %v2828, 8.507059e+37
        %v2830 = vand.u32 %v2451, 2147483648
        %v2831 = vor.u32 1.1754944e-38, %v2830
        %v2832 = vsel %vm2829, %v2831, %v2827
        %v2833 = vmul.f32 1.0, %v2832
        %v2834 = vrcp.pop %v2452
        %v2835 = vmul.f32 %v2452, %v2834
        %v2836 = vsub.f32 1.0, %v2835
        %v2837 = vmul.f32 %v2834, %v2836
        %v2838 = vadd.f32 %v2834, %v2837
        %vm2839 = vweird.f32 %v2452
        %vm2840 = vweird.f32 %v2834
        %vm2841 = vmor %vm2839, %vm2840
        %v2842 = vsel %vm2841, %v2834, %v2838
        %v2843 = vand.u32 2147483647, %v2452
        %vm2844 = vcmp.eq.f32.partialorder %v2843, 8.507059e+37
        %v2845 = vand.u32 %v2452, 2147483648
        %v2846 = vor.u32 1.1754944e-38, %v2845
        %v2847 = vsel %vm2844, %v2846, %v2842
        %v2848 = vmul.f32 1.0, %v2847
        %v2849 = vrcp.pop %v2453
        %v2850 = vmul.f32 %v2453, %v2849
        %v2851 = vsub.f32 1.0, %v2850
        %v2852 = vmul.f32 %v2849, %v2851
        %v2853 = vadd.f32 %v2849, %v2852
        %vm2854 = vweird.f32 %v2453
        %vm2855 = vweird.f32 %v2849
        %vm2856 = vmor %vm2854, %vm2855
        %v2857 = vsel %vm2856, %v2849, %v2853
        %v2858 = vand.u32 2147483647, %v2453
        %vm2859 = vcmp.eq.f32.partialorder %v2858, 8.507059e+37
        %v2860 = vand.u32 %v2453, 2147483648
        %v2861 = vor.u32 1.1754944e-38, %v2860
        %v2862 = vsel %vm2859, %v2861, %v2857
        %v2863 = vmul.f32 1.0, %v2862
        %v2864 = vrcp.pop %v2454
        %v2865 = vmul.f32 %v2454, %v2864
        %v2866 = vsub.f32 1.0, %v2865
        %v2867 = vmul.f32 %v2864, %v2866
        %v2868 = vadd.f32 %v2864, %v2867
        %vm2869 = vweird.f32 %v2454
        %vm2870 = vweird.f32 %v2864
        %vm2871 = vmor %vm2869, %vm2870
        %v2872 = vsel %vm2871, %v2864, %v2868
        %v2873 = vand.u32 2147483647, %v2454
        %vm2874 = vcmp.eq.f32.partialorder %v2873, 8.507059e+37
        %v2875 = vand.u32 %v2454, 2147483648
        %v2876 = vor.u32 1.1754944e-38, %v2875
        %v2877 = vsel %vm2874, %v2876, %v2872
        %v2878 = vmul.f32 1.0, %v2877
        %v2879 = vrcp.pop %v2455
        %v2880 = vmul.f32 %v2455, %v2879
        %v2881 = vsub.f32 1.0, %v2880
        %v2882 = vmul.f32 %v2879, %v2881
        %v2883 = vadd.f32 %v2879, %v2882
        %vm2884 = vweird.f32 %v2455
        %vm2885 = vweird.f32 %v2879
        %vm2886 = vmor %vm2884, %vm2885
        %v2887 = vsel %vm2886, %v2879, %v2883
        %v2888 = vand.u32 2147483647, %v2455
        %vm2889 = vcmp.eq.f32.partialorder %v2888, 8.507059e+37
        %v2890 = vand.u32 %v2455, 2147483648
        %v2891 = vor.u32 1.1754944e-38, %v2890
        %v2892 = vsel %vm2889, %v2891, %v2887
        %v2893 = vmul.f32 1.0, %v2892
        %v2894 = vrcp.pop %v2456
        %v2895 = vmul.f32 %v2456, %v2894
        %v2896 = vsub.f32 1.0, %v2895
        %v2897 = vmul.f32 %v2894, %v2896
        %v2898 = vadd.f32 %v2894, %v2897
        %vm2899 = vweird.f32 %v2456
        %vm2900 = vweird.f32 %v2894
        %vm2901 = vmor %vm2899, %vm2900
        %v2902 = vsel %vm2901, %v2894, %v2898
        %v2903 = vand.u32 2147483647, %v2456
        %vm2904 = vcmp.eq.f32.partialorder %v2903, 8.507059e+37
        %v2905 = vand.u32 %v2456, 2147483648
        %v2906 = vor.u32 1.1754944e-38, %v2905
        %v2907 = vsel %vm2904, %v2906, %v2902
        %v2908 = vmul.f32 1.0, %v2907
        %v2909 = vrcp.pop %v2457
        %v2910 = vmul.f32 %v2457, %v2909
        %v2911 = vsub.f32 1.0, %v2910
        %v2912 = vmul.f32 %v2909, %v2911
        %v2913 = vadd.f32 %v2909, %v2912
        %vm2914 = vweird.f32 %v2457
        %vm2915 = vweird.f32 %v2909
        %vm2916 = vmor %vm2914, %vm2915
        %v2917 = vsel %vm2916, %v2909, %v2913
        %v2918 = vand.u32 2147483647, %v2457
        %vm2919 = vcmp.eq.f32.partialorder %v2918, 8.507059e+37
        %v2920 = vand.u32 %v2457, 2147483648
        %v2921 = vor.u32 1.1754944e-38, %v2920
        %v2922 = vsel %vm2919, %v2921, %v2917
        %v2923 = vmul.f32 1.0, %v2922
        %v2924 = vrcp.pop %v2458
        %v2925 = vmul.f32 %v2458, %v2924
        %v2926 = vsub.f32 1.0, %v2925
        %v2927 = vmul.f32 %v2924, %v2926
        %v2928 = vadd.f32 %v2924, %v2927
        %vm2929 = vweird.f32 %v2458
        %vm2930 = vweird.f32 %v2924
        %vm2931 = vmor %vm2929, %vm2930
        %v2932 = vsel %vm2931, %v2924, %v2928
        %v2933 = vand.u32 2147483647, %v2458
        %vm2934 = vcmp.eq.f32.partialorder %v2933, 8.507059e+37
        %v2935 = vand.u32 %v2458, 2147483648
        %v2936 = vor.u32 1.1754944e-38, %v2935
        %v2937 = vsel %vm2934, %v2936, %v2932
        %v2938 = vmul.f32 1.0, %v2937
        %v2939 = vmul.f32 %v2473, %v1806
        %v2940 = vmul.f32 %v2488, %v1904
        %v2941 = vmul.f32 %v2503, %v1808
        %v2942 = vmul.f32 %v2518, %v1906
        %v2943 = vmul.f32 %v2533, %v1811
        %v2944 = vmul.f32 %v2548, %v1909
        %v2945 = vmul.f32 %v2563, %v1813
        %v2946 = vmul.f32 %v2578, %v1911
        %v2947 = vmul.f32 %v2593, %v1816
        %v2948 = vmul.f32 %v2608, %v1914
        %v2949 = vmul.f32 %v2623, %v1818
        %v2950 = vmul.f32 %v2638, %v1916
        %v2951 = vmul.f32 %v2653, %v1821
        %v2952 = vmul.f32 %v2668, %v1919
        %v2953 = vmul.f32 %v2683, %v1823
        %v2954 = vmul.f32 %v2698, %v1921
        %v2955 = vmul.f32 %v2713, %v1826
        %v2956 = vmul.f32 %v2728, %v1924
        %v2957 = vmul.f32 %v2743, %v1828
        %v2958 = vmul.f32 %v2758, %v1926
        %v2959 = vmul.f32 %v2773, %v1831
        %v2960 = vmul.f32 %v2788, %v1929
        %v2961 = vmul.f32 %v2803, %v1833
        %v2962 = vmul.f32 %v2818, %v1931
        %v2963 = vmul.f32 %v2833, %v1836
        %v2964 = vmul.f32 %v2848, %v1934
        %v2965 = vmul.f32 %v2863, %v1838
        %v2966 = vmul.f32 %v2878, %v1936
        %v2967 = vmul.f32 %v2893, %v1841
        %v2968 = vmul.f32 %v2908, %v1939
        %v2969 = vmul.f32 %v2923, %v1843
        %v2970 = vmul.f32 %v2938, %v1941
        %v2971 = vmul.f32 %v2939, %v2194
        %v2972 = vmul.f32 %v2940, %v2292
        %v2973 = vmul.f32 %v2941, %v2196
        %v2974 = vmul.f32 %v2942, %v2294
        %v2975 = vmul.f32 %v2943, %v2199
        %v2976 = vmul.f32 %v2944, %v2297
        %v2977 = vmul.f32 %v2945, %v2201
        %v2978 = vmul.f32 %v2946, %v2299
        %v2979 = vmul.f32 %v2947, %v2204
        %v2980 = vmul.f32 %v2948, %v2302
        %v2981 = vmul.f32 %v2949, %v2206
        %v2982 = vmul.f32 %v2950, %v2304
        %v2983 = vmul.f32 %v2951, %v2209
        %v2984 = vmul.f32 %v2952, %v2307
        %v2985 = vmul.f32 %v2953, %v2211
        %v2986 = vmul.f32 %v2954, %v2309
        %v2987 = vmul.f32 %v2955, %v2214
        %v2988 = vmul.f32 %v2956, %v2312
        %v2989 = vmul.f32 %v2957, %v2216
        %v2990 = vmul.f32 %v2958, %v2314
        %v2991 = vmul.f32 %v2959, %v2219
        %v2992 = vmul.f32 %v2960, %v2317
        %v2993 = vmul.f32 %v2961, %v2221
        %v2994 = vmul.f32 %v2962, %v2319
        %v2995 = vmul.f32 %v2963, %v2224
        %v2996 = vmul.f32 %v2964, %v2322
        %v2997 = vmul.f32 %v2965, %v2226
        %v2998 = vmul.f32 %v2966, %v2324
        %v2999 = vmul.f32 %v2967, %v2229
        %v3000 = vmul.f32 %v2968, %v2327
        %v3001 = vmul.f32 %v2969, %v2231
        %v3002 = vmul.f32 %v2970, %v2329
        %v3003 = vpack.c.bf16 %v2972, %v2971
        %v3004 = vpack.c.bf16 %v2974, %v2973
        %v3005 = vpack.c.bf16 %v2976, %v2975
        %v3006 = vpack.c.bf16 %v2978, %v2977
        %v3007 = vpack.c.bf16 %v2980, %v2979
        %v3008 = vpack.c.bf16 %v2982, %v2981
        %v3009 = vpack.c.bf16 %v2984, %v2983
        %v3010 = vpack.c.bf16 %v2986, %v2985
        %v3011 = vpack.c.bf16 %v2988, %v2987
        %v3012 = vpack.c.bf16 %v2990, %v2989
        %v3013 = vpack.c.bf16 %v2992, %v2991
        %v3014 = vpack.c.bf16 %v2994, %v2993
        %v3015 = vpack.c.bf16 %v2996, %v2995
        %v3016 = vpack.c.bf16 %v2998, %v2997
        %v3017 = vpack.c.bf16 %v3000, %v2999
        %v3018 = vpack.c.bf16 %v3002, %v3001
        %3019 = vst [vmem:[#allocation2] sm:$0xff] %v3003
        %3020 = vst [vmem:[#allocation2 + $0x10] sm:$0xff] %v3004
        %3021 = vst [vmem:[#allocation2 + $0x20] sm:$0xff] %v3005
        %3022 = vst [vmem:[#allocation2 + $0x30] sm:$0xff] %v3006
        %3023 = vst [vmem:[#allocation2 + $0x40] sm:$0xff] %v3007
        %3024 = vst [vmem:[#allocation2 + $0x50] sm:$0xff] %v3008
        %3025 = vst [vmem:[#allocation2 + $0x60] sm:$0xff] %v3009
        %3026 = vst [vmem:[#allocation2 + $0x70] sm:$0xff] %v3010
        %3027 = vst [vmem:[#allocation2 + $0x80] sm:$0xff] %v3011
        %3028 = vst [vmem:[#allocation2 + $0x90] sm:$0xff] %v3012
        %3029 = vst [vmem:[#allocation2 + $0xa0] sm:$0xff] %v3013
        %3030 = vst [vmem:[#allocation2 + $0xb0] sm:$0xff] %v3014
        %3031 = vst [vmem:[#allocation2 + $0xc0] sm:$0xff] %v3015
        %3032 = vst [vmem:[#allocation2 + $0xd0] sm:$0xff] %v3016
        %3033 = vst [vmem:[#allocation2 + $0xe0] sm:$0xff] %v3017
        %3034 = vst [vmem:[#allocation2 + $0xf0] sm:$0xff] %v3018
        %v3035 = vpack.c.bf16 %v1030, %v1030
        %v3036 = vpack.c.bf16 %v1032, %v1032
        %v3037 = vpack.c.bf16 %v1035, %v1035
        %v3038 = vpack.c.bf16 %v1037, %v1037
        %v3039 = vpack.c.bf16 %v1040, %v1040
        %v3040 = vpack.c.bf16 %v1042, %v1042
        %v3041 = vpack.c.bf16 %v1045, %v1045
        %v3042 = vpack.c.bf16 %v1047, %v1047
        %v3043 = vpack.c.bf16 %v1050, %v1050
        %v3044 = vpack.c.bf16 %v1052, %v1052
        %v3045 = vpack.c.bf16 %v1055, %v1055
        %v3046 = vpack.c.bf16 %v1057, %v1057
        %v3047 = vpack.c.bf16 %v1060, %v1060
        %v3048 = vpack.c.bf16 %v1062, %v1062
        %v3049 = vpack.c.bf16 %v1065, %v1065
        %v3050 = vpack.c.bf16 %v1067, %v1067
        %v3051 = vpack.c.bf16 %v1418, %v1418
        %v3052 = vpack.c.bf16 %v1420, %v1420
        %v3053 = vpack.c.bf16 %v1423, %v1423
        %v3054 = vpack.c.bf16 %v1425, %v1425
        %v3055 = vpack.c.bf16 %v1428, %v1428
        %v3056 = vpack.c.bf16 %v1430, %v1430
        %v3057 = vpack.c.bf16 %v1433, %v1433
        %v3058 = vpack.c.bf16 %v1435, %v1435
        %v3059 = vpack.c.bf16 %v1438, %v1438
        %v3060 = vpack.c.bf16 %v1440, %v1440
        %v3061 = vpack.c.bf16 %v1443, %v1443
        %v3062 = vpack.c.bf16 %v1445, %v1445
        %v3063 = vpack.c.bf16 %v1448, %v1448
        %v3064 = vpack.c.bf16 %v1450, %v1450
        %v3065 = vpack.c.bf16 %v1453, %v1453
        %v3066 = vpack.c.bf16 %v1455, %v1455
        %v3067 = vpack.c.bf16 %v2971, %v2971
        %v3068 = vpack.c.bf16 %v2973, %v2973
        %v3069 = vpack.c.bf16 %v2975, %v2975
        %v3070 = vpack.c.bf16 %v2977, %v2977
        %v3071 = vpack.c.bf16 %v2979, %v2979
        %v3072 = vpack.c.bf16 %v2981, %v2981
        %v3073 = vpack.c.bf16 %v2983, %v2983
        %v3074 = vpack.c.bf16 %v2985, %v2985
        %v3075 = vpack.c.bf16 %v2987, %v2987
        %v3076 = vpack.c.bf16 %v2989, %v2989
        %v3077 = vpack.c.bf16 %v2991, %v2991
        %v3078 = vpack.c.bf16 %v2993, %v2993
        %v3079 = vpack.c.bf16 %v2995, %v2995
        %v3080 = vpack.c.bf16 %v2997, %v2997
        %v3081 = vpack.c.bf16 %v2999, %v2999
        %v3082 = vpack.c.bf16 %v3001, %v3001
        %v3085 = vunpack.c.l.b16 %v3035
        %v3086 = vunpack.c.l.b16 %v3036
        %v3087 = vpack.c.b16 %v3086, %v3085
        %v3091 = vunpack.c.l.b16 %v3051
        %v3092 = vunpack.c.l.b16 %v3052
        %v3093 = vpack.c.b16 %v3092, %v3091
        %3095 = vmatpush.bf16.xpose.msra.mxu0 0
        %3096 = vmatpush.bf16.xpose.msra.mxu0 0
        %3097 = vmatpush.bf16.xpose.msra.mxu0 0
        %3098 = vmatpush.bf16.xpose.msra.mxu0 0
        %3099 = vmatpush.bf16.xpose.msra.mxu0 0
        %3100 = vmatpush.bf16.xpose.msra.mxu0 0
        %3101 = vmatpush.bf16.xpose.msra.mxu0 0
        %3102 = vmatpush.bf16.xpose.msra.mxu0 %v3093
        %3103 = vmatmul.bf16.gmra.mxu0 %v3087
        %v3104 = vpop.f32.mrf.mxu0
        %v3105 = vadd.f32 0.0, %v3104
        %v3106 = vpop.f32.mrf.mxu0
        %v3107 = vadd.f32 0.0, %v3106
        %3108 = vdwg.mxu0
        %v3111 = vunpack.c.l.b16 %v3037
        %v3112 = vunpack.c.l.b16 %v3038
        %v3113 = vpack.c.b16 %v3112, %v3111
        %v3117 = vunpack.c.l.b16 %v3053
        %v3118 = vunpack.c.l.b16 %v3054
        %v3119 = vpack.c.b16 %v3118, %v3117
        %3121 = vmatpush.bf16.xpose.msra.mxu0 0
        %3122 = vmatpush.bf16.xpose.msra.mxu0 0
        %3123 = vmatpush.bf16.xpose.msra.mxu0 0
        %3124 = vmatpush.bf16.xpose.msra.mxu0 0
        %3125 = vmatpush.bf16.xpose.msra.mxu0 0
        %3126 = vmatpush.bf16.xpose.msra.mxu0 0
        %3127 = vmatpush.bf16.xpose.msra.mxu0 0
        %3128 = vmatpush.bf16.xpose.msra.mxu0 %v3119
        %3129 = vmatmul.bf16.gmra.mxu0 %v3113
        %v3130 = vpop.f32.mrf.mxu0
        %v3131 = vadd.f32 0.0, %v3130
        %v3132 = vpop.f32.mrf.mxu0
        %v3133 = vadd.f32 0.0, %v3132
        %3134 = vdwg.mxu0
        %v3137 = vunpack.c.l.b16 %v3039
        %v3138 = vunpack.c.l.b16 %v3040
        %v3139 = vpack.c.b16 %v3138, %v3137
        %v3143 = vunpack.c.l.b16 %v3055
        %v3144 = vunpack.c.l.b16 %v3056
        %v3145 = vpack.c.b16 %v3144, %v3143
        %3147 = vmatpush.bf16.xpose.msra.mxu0 0
        %3148 = vmatpush.bf16.xpose.msra.mxu0 0
        %3149 = vmatpush.bf16.xpose.msra.mxu0 0
        %3150 = vmatpush.bf16.xpose.msra.mxu0 0
        %3151 = vmatpush.bf16.xpose.msra.mxu0 0
        %3152 = vmatpush.bf16.xpose.msra.mxu0 0
        %3153 = vmatpush.bf16.xpose.msra.mxu0 0
        %3154 = vmatpush.bf16.xpose.msra.mxu0 %v3145
        %3155 = vmatmul.bf16.gmra.mxu0 %v3139
        %v3156 = vpop.f32.mrf.mxu0
        %v3157 = vadd.f32 0.0, %v3156
        %v3158 = vpop.f32.mrf.mxu0
        %v3159 = vadd.f32 0.0, %v3158
        %3160 = vdwg.mxu0
        %v3163 = vunpack.c.l.b16 %v3041
        %v3164 = vunpack.c.l.b16 %v3042
        %v3165 = vpack.c.b16 %v3164, %v3163
        %v3169 = vunpack.c.l.b16 %v3057
        %v3170 = vunpack.c.l.b16 %v3058
        %v3171 = vpack.c.b16 %v3170, %v3169
        %3173 = vmatpush.bf16.xpose.msra.mxu0 0
        %3174 = vmatpush.bf16.xpose.msra.mxu0 0
        %3175 = vmatpush.bf16.xpose.msra.mxu0 0
        %3176 = vmatpush.bf16.xpose.msra.mxu0 0
        %3177 = vmatpush.bf16.xpose.msra.mxu0 0
        %3178 = vmatpush.bf16.xpose.msra.mxu0 0
        %3179 = vmatpush.bf16.xpose.msra.mxu0 0
        %3180 = vmatpush.bf16.xpose.msra.mxu0 %v3171
        %3181 = vmatmul.bf16.gmra.mxu0 %v3165
        %v3182 = vpop.f32.mrf.mxu0
        %v3183 = vadd.f32 0.0, %v3182
        %v3184 = vpop.f32.mrf.mxu0
        %v3185 = vadd.f32 0.0, %v3184
        %3186 = vdwg.mxu0
        %v3189 = vunpack.c.l.b16 %v3043
        %v3190 = vunpack.c.l.b16 %v3044
        %v3191 = vpack.c.b16 %v3190, %v3189
        %v3195 = vunpack.c.l.b16 %v3059
        %v3196 = vunpack.c.l.b16 %v3060
        %v3197 = vpack.c.b16 %v3196, %v3195
        %3199 = vmatpush.bf16.xpose.msra.mxu0 0
        %3200 = vmatpush.bf16.xpose.msra.mxu0 0
        %3201 = vmatpush.bf16.xpose.msra.mxu0 0
        %3202 = vmatpush.bf16.xpose.msra.mxu0 0
        %3203 = vmatpush.bf16.xpose.msra.mxu0 0
        %3204 = vmatpush.bf16.xpose.msra.mxu0 0
        %3205 = vmatpush.bf16.xpose.msra.mxu0 0
        %3206 = vmatpush.bf16.xpose.msra.mxu0 %v3197
        %3207 = vmatmul.bf16.gmra.mxu0 %v3191
        %v3208 = vpop.f32.mrf.mxu0
        %v3209 = vadd.f32 0.0, %v3208
        %v3210 = vpop.f32.mrf.mxu0
        %v3211 = vadd.f32 0.0, %v3210
        %3212 = vdwg.mxu0
        %v3215 = vunpack.c.l.b16 %v3045
        %v3216 = vunpack.c.l.b16 %v3046
        %v3217 = vpack.c.b16 %v3216, %v3215
        %v3221 = vunpack.c.l.b16 %v3061
        %v3222 = vunpack.c.l.b16 %v3062
        %v3223 = vpack.c.b16 %v3222, %v3221
        %3225 = vmatpush.bf16.xpose.msra.mxu0 0
        %3226 = vmatpush.bf16.xpose.msra.mxu0 0
        %3227 = vmatpush.bf16.xpose.msra.mxu0 0
        %3228 = vmatpush.bf16.xpose.msra.mxu0 0
        %3229 = vmatpush.bf16.xpose.msra.mxu0 0
        %3230 = vmatpush.bf16.xpose.msra.mxu0 0
        %3231 = vmatpush.bf16.xpose.msra.mxu0 0
        %3232 = vmatpush.bf16.xpose.msra.mxu0 %v3223
        %3233 = vmatmul.bf16.gmra.mxu0 %v3217
        %v3234 = vpop.f32.mrf.mxu0
        %v3235 = vadd.f32 0.0, %v3234
        %v3236 = vpop.f32.mrf.mxu0
        %v3237 = vadd.f32 0.0, %v3236
        %3238 = vdwg.mxu0
        %v3241 = vunpack.c.l.b16 %v3047
        %v3242 = vunpack.c.l.b16 %v3048
        %v3243 = vpack.c.b16 %v3242, %v3241
        %v3247 = vunpack.c.l.b16 %v3063
        %v3248 = vunpack.c.l.b16 %v3064
        %v3249 = vpack.c.b16 %v3248, %v3247
        %3251 = vmatpush.bf16.xpose.msra.mxu0 0
        %3252 = vmatpush.bf16.xpose.msra.mxu0 0
        %3253 = vmatpush.bf16.xpose.msra.mxu0 0
        %3254 = vmatpush.bf16.xpose.msra.mxu0 0
        %3255 = vmatpush.bf16.xpose.msra.mxu0 0
        %3256 = vmatpush.bf16.xpose.msra.mxu0 0
        %3257 = vmatpush.bf16.xpose.msra.mxu0 0
        %3258 = vmatpush.bf16.xpose.msra.mxu0 %v3249
        %3259 = vmatmul.bf16.gmra.mxu0 %v3243
        %v3260 = vpop.f32.mrf.mxu0
        %v3261 = vadd.f32 0.0, %v3260
        %v3262 = vpop.f32.mrf.mxu0
        %v3263 = vadd.f32 0.0, %v3262
        %3264 = vdwg.mxu0
        %v3267 = vunpack.c.l.b16 %v3049
        %v3268 = vunpack.c.l.b16 %v3050
        %v3269 = vpack.c.b16 %v3268, %v3267
        %v3273 = vunpack.c.l.b16 %v3065
        %v3274 = vunpack.c.l.b16 %v3066
        %v3275 = vpack.c.b16 %v3274, %v3273
        %3277 = vmatpush.bf16.xpose.msra.mxu0 0
        %3278 = vmatpush.bf16.xpose.msra.mxu0 0
        %3279 = vmatpush.bf16.xpose.msra.mxu0 0
        %3280 = vmatpush.bf16.xpose.msra.mxu0 0
        %3281 = vmatpush.bf16.xpose.msra.mxu0 0
        %3282 = vmatpush.bf16.xpose.msra.mxu0 0
        %3283 = vmatpush.bf16.xpose.msra.mxu0 0
        %3284 = vmatpush.bf16.xpose.msra.mxu0 %v3275
        %3285 = vmatmul.bf16.gmra.mxu0 %v3269
        %v3286 = vpop.f32.mrf.mxu0
        %v3287 = vadd.f32 0.0, %v3286
        %v3288 = vpop.f32.mrf.mxu0
        %v3289 = vadd.f32 0.0, %v3288
        %3290 = vdwg.mxu0
        %vm3291 = vcmask 130048
        %v3292 = vsel %vm3291, %v3105, -inf
        %3293 = vmax.xlane.f32.xlu0 %v3292
        %v3294 = vpop.xlane.xlu0 %3293
        %v3295 = vsel %vm3291, %v3107, -inf
        %3296 = vmax.xlane.f32.xlu0 %v3295
        %v3297 = vpop.xlane.xlu0 %3296
        %v3298 = vsel %vm3291, %v3131, -inf
        %3299 = vmax.xlane.f32.xlu0 %v3298
        %v3300 = vpop.xlane.xlu0 %3299
        %v3301 = vsel %vm3291, %v3133, -inf
        %3302 = vmax.xlane.f32.xlu0 %v3301
        %v3303 = vpop.xlane.xlu0 %3302
        %v3304 = vsel %vm3291, %v3157, -inf
        %3305 = vmax.xlane.f32.xlu0 %v3304
        %v3306 = vpop.xlane.xlu0 %3305
        %v3307 = vsel %vm3291, %v3159, -inf
        %3308 = vmax.xlane.f32.xlu0 %v3307
        %v3309 = vpop.xlane.xlu0 %3308
        %v3310 = vsel %vm3291, %v3183, -inf
        %3311 = vmax.xlane.f32.xlu0 %v3310
        %v3312 = vpop.xlane.xlu0 %3311
        %v3313 = vsel %vm3291, %v3185, -inf
        %3314 = vmax.xlane.f32.xlu0 %v3313
        %v3315 = vpop.xlane.xlu0 %3314
        %v3316 = vsel %vm3291, %v3209, -inf
        %3317 = vmax.xlane.f32.xlu0 %v3316
        %v3318 = vpop.xlane.xlu0 %3317
        %v3319 = vsel %vm3291, %v3211, -inf
        %3320 = vmax.xlane.f32.xlu0 %v3319
        %v3321 = vpop.xlane.xlu0 %3320
        %v3322 = vsel %vm3291, %v3235, -inf
        %3323 = vmax.xlane.f32.xlu0 %v3322
        %v3324 = vpop.xlane.xlu0 %3323
        %v3325 = vsel %vm3291, %v3237, -inf
        %3326 = vmax.xlane.f32.xlu0 %v3325
        %v3327 = vpop.xlane.xlu0 %3326
        %v3328 = vsel %vm3291, %v3261, -inf
        %3329 = vmax.xlane.f32.xlu0 %v3328
        %v3330 = vpop.xlane.xlu0 %3329
        %v3331 = vsel %vm3291, %v3263, -inf
        %3332 = vmax.xlane.f32.xlu0 %v3331
        %v3333 = vpop.xlane.xlu0 %3332
        %v3334 = vsel %vm3291, %v3287, -inf
        %3335 = vmax.xlane.f32.xlu0 %v3334
        %v3336 = vpop.xlane.xlu0 %3335
        %v3337 = vsel %vm3291, %v3289, -inf
        %3338 = vmax.xlane.f32.xlu0 %v3337
        %v3339 = vpop.xlane.xlu0 %3338
        %v3340 = vsub.f32 %v3105, %v3294
        %v3341 = vsub.f32 %v3107, %v3297
        %v3342 = vsub.f32 %v3131, %v3300
        %v3343 = vsub.f32 %v3133, %v3303
        %v3344 = vsub.f32 %v3157, %v3306
        %v3345 = vsub.f32 %v3159, %v3309
        %v3346 = vsub.f32 %v3183, %v3312
        %v3347 = vsub.f32 %v3185, %v3315
        %v3348 = vsub.f32 %v3209, %v3318
        %v3349 = vsub.f32 %v3211, %v3321
        %v3350 = vsub.f32 %v3235, %v3324
        %v3351 = vsub.f32 %v3237, %v3327
        %v3352 = vsub.f32 %v3261, %v3330
        %v3353 = vsub.f32 %v3263, %v3333
        %v3354 = vsub.f32 %v3287, %v3336
        %v3355 = vsub.f32 %v3289, %v3339
        %v3356 = vmul.f32 %v3340, 1.442695
        %v3357 = vpow.pop %v3356
        %v3358 = vmul.f32 %v3341, 1.442695
        %v3359 = vpow.pop %v3358
        %v3360 = vmul.f32 %v3342, 1.442695
        %v3361 = vpow.pop %v3360
        %v3362 = vmul.f32 %v3343, 1.442695
        %v3363 = vpow.pop %v3362
        %v3364 = vmul.f32 %v3344, 1.442695
        %v3365 = vpow.pop %v3364
        %v3366 = vmul.f32 %v3345, 1.442695
        %v3367 = vpow.pop %v3366
        %v3368 = vmul.f32 %v3346, 1.442695
        %v3369 = vpow.pop %v3368
        %v3370 = vmul.f32 %v3347, 1.442695
        %v3371 = vpow.pop %v3370
        %v3372 = vmul.f32 %v3348, 1.442695
        %v3373 = vpow.pop %v3372
        %v3374 = vmul.f32 %v3349, 1.442695
        %v3375 = vpow.pop %v3374
        %v3376 = vmul.f32 %v3350, 1.442695
        %v3377 = vpow.pop %v3376
        %v3378 = vmul.f32 %v3351, 1.442695
        %v3379 = vpow.pop %v3378
        %v3380 = vmul.f32 %v3352, 1.442695
        %v3381 = vpow.pop %v3380
        %v3382 = vmul.f32 %v3353, 1.442695
        %v3383 = vpow.pop %v3382
        %v3384 = vmul.f32 %v3354, 1.442695
        %v3385 = vpow.pop %v3384
        %v3386 = vmul.f32 %v3355, 1.442695
        %v3387 = vpow.pop %v3386
        %v3388 = vsel %vm3291, %v3357, 0.0
        %3389 = vadd.xlane.f32.xlu0 %v3388
        %v3390 = vpop.xlane.xlu0 %3389
        %v3391 = vsel %vm3291, %v3359, 0.0
        %3392 = vadd.xlane.f32.xlu0 %v3391
        %v3393 = vpop.xlane.xlu0 %3392
        %v3394 = vsel %vm3291, %v3361, 0.0
        %3395 = vadd.xlane.f32.xlu0 %v3394
        %v3396 = vpop.xlane.xlu0 %3395
        %v3397 = vsel %vm3291, %v3363, 0.0
        %3398 = vadd.xlane.f32.xlu0 %v3397
        %v3399 = vpop.xlane.xlu0 %3398
        %v3400 = vsel %vm3291, %v3365, 0.0
        %3401 = vadd.xlane.f32.xlu0 %v3400
        %v3402 = vpop.xlane.xlu0 %3401
        %v3403 = vsel %vm3291, %v3367, 0.0
        %3404 = vadd.xlane.f32.xlu0 %v3403
        %v3405 = vpop.xlane.xlu0 %3404
        %v3406 = vsel %vm3291, %v3369, 0.0
        %3407 = vadd.xlane.f32.xlu0 %v3406
        %v3408 = vpop.xlane.xlu0 %3407
        %v3409 = vsel %vm3291, %v3371, 0.0
        %3410 = vadd.xlane.f32.xlu0 %v3409
        %v3411 = vpop.xlane.xlu0 %3410
        %v3412 = vsel %vm3291, %v3373, 0.0
        %3413 = vadd.xlane.f32.xlu0 %v3412
        %v3414 = vpop.xlane.xlu0 %3413
        %v3415 = vsel %vm3291, %v3375, 0.0
        %3416 = vadd.xlane.f32.xlu0 %v3415
        %v3417 = vpop.xlane.xlu0 %3416
        %v3418 = vsel %vm3291, %v3377, 0.0
        %3419 = vadd.xlane.f32.xlu0 %v3418
        %v3420 = vpop.xlane.xlu0 %3419
        %v3421 = vsel %vm3291, %v3379, 0.0
        %3422 = vadd.xlane.f32.xlu0 %v3421
        %v3423 = vpop.xlane.xlu0 %3422
        %v3424 = vsel %vm3291, %v3381, 0.0
        %3425 = vadd.xlane.f32.xlu0 %v3424
        %v3426 = vpop.xlane.xlu0 %3425
        %v3427 = vsel %vm3291, %v3383, 0.0
        %3428 = vadd.xlane.f32.xlu0 %v3427
        %v3429 = vpop.xlane.xlu0 %3428
        %v3430 = vsel %vm3291, %v3385, 0.0
        %3431 = vadd.xlane.f32.xlu0 %v3430
        %v3432 = vpop.xlane.xlu0 %3431
        %v3433 = vsel %vm3291, %v3387, 0.0
        %3434 = vadd.xlane.f32.xlu0 %v3433
        %v3435 = vpop.xlane.xlu0 %3434
        %v3436 = vrcp.pop %v3390
        %v3437 = vrcp.pop %v3393
        %v3438 = vrcp.pop %v3396
        %v3439 = vrcp.pop %v3399
        %v3440 = vrcp.pop %v3402
        %v3441 = vrcp.pop %v3405
        %v3442 = vrcp.pop %v3408
        %v3443 = vrcp.pop %v3411
        %v3444 = vrcp.pop %v3414
        %v3445 = vrcp.pop %v3417
        %v3446 = vrcp.pop %v3420
        %v3447 = vrcp.pop %v3423
        %v3448 = vrcp.pop %v3426
        %v3449 = vrcp.pop %v3429
        %v3450 = vrcp.pop %v3432
        %v3451 = vrcp.pop %v3435
        %v3452 = vmul.f32 %v3357, %v3436
        %v3453 = vmul.f32 %v3359, %v3437
        %v3454 = vmul.f32 %v3361, %v3438
        %v3455 = vmul.f32 %v3363, %v3439
        %v3456 = vmul.f32 %v3365, %v3440
        %v3457 = vmul.f32 %v3367, %v3441
        %v3458 = vmul.f32 %v3369, %v3442
        %v3459 = vmul.f32 %v3371, %v3443
        %v3460 = vmul.f32 %v3373, %v3444
        %v3461 = vmul.f32 %v3375, %v3445
        %v3462 = vmul.f32 %v3377, %v3446
        %v3463 = vmul.f32 %v3379, %v3447
        %v3464 = vmul.f32 %v3381, %v3448
        %v3465 = vmul.f32 %v3383, %v3449
        %v3466 = vmul.f32 %v3385, %v3450
        %v3467 = vmul.f32 %v3387, %v3451
        %v3468 = vpack.c.bf16 %v3452, %v3452
        %v3469 = vpack.c.bf16 %v3453, %v3453
        %v3470 = vpack.c.bf16 %v3454, %v3454
        %v3471 = vpack.c.bf16 %v3455, %v3455
        %v3472 = vpack.c.bf16 %v3456, %v3456
        %v3473 = vpack.c.bf16 %v3457, %v3457
        %v3474 = vpack.c.bf16 %v3458, %v3458
        %v3475 = vpack.c.bf16 %v3459, %v3459
        %v3476 = vpack.c.bf16 %v3460, %v3460
        %v3477 = vpack.c.bf16 %v3461, %v3461
        %v3478 = vpack.c.bf16 %v3462, %v3462
        %v3479 = vpack.c.bf16 %v3463, %v3463
        %v3480 = vpack.c.bf16 %v3464, %v3464
        %v3481 = vpack.c.bf16 %v3465, %v3465
        %v3482 = vpack.c.bf16 %v3466, %v3466
        %v3483 = vpack.c.bf16 %v3467, %v3467
        %v3486 = vunpack.c.l.b16 %v3468
        %v3487 = vunpack.c.l.b16 %v3469
        %v3488 = vpack.c.b16 %v3487, %v3486
        %v3491 = vunpack.c.l.b16 %v3067
        %v3492 = vunpack.c.l.b16 %v3068
        %v3493 = vpack.c.b16 %v3492, %v3491
        %v3496 = vsel %vm3291, %v3488, 0
        %3498 = vmatpush.bf16.msra.mxu0 0
        %3499 = vmatpush.bf16.msra.mxu0 0
        %3500 = vmatpush.bf16.msra.mxu0 0
        %3501 = vmatpush.bf16.msra.mxu0 0
        %3502 = vmatpush.bf16.msra.mxu0 0
        %3503 = vmatpush.bf16.msra.mxu0 0
        %3504 = vmatpush.bf16.msra.mxu0 0
        %3505 = vmatpush.bf16.msra.mxu0 %v3493
        %3506 = vmatmul.bf16.gmra.mxu0 %v3496
        %v3507 = vpop.f32.mrf.mxu0
        %v3508 = vadd.f32 0.0, %v3507
        %v3509 = vpop.f32.mrf.mxu0
        %v3510 = vadd.f32 0.0, %v3509
        %3511 = vdwg.mxu0
        %v3514 = vunpack.c.l.b16 %v3470
        %v3515 = vunpack.c.l.b16 %v3471
        %v3516 = vpack.c.b16 %v3515, %v3514
        %v3519 = vunpack.c.l.b16 %v3069
        %v3520 = vunpack.c.l.b16 %v3070
        %v3521 = vpack.c.b16 %v3520, %v3519
        %v3524 = vsel %vm3291, %v3516, 0
        %3526 = vmatpush.bf16.msra.mxu0 0
        %3527 = vmatpush.bf16.msra.mxu0 0
        %3528 = vmatpush.bf16.msra.mxu0 0
        %3529 = vmatpush.bf16.msra.mxu0 0
        %3530 = vmatpush.bf16.msra.mxu0 0
        %3531 = vmatpush.bf16.msra.mxu0 0
        %3532 = vmatpush.bf16.msra.mxu0 0
        %3533 = vmatpush.bf16.msra.mxu0 %v3521
        %3534 = vmatmul.bf16.gmra.mxu0 %v3524
        %v3535 = vpop.f32.mrf.mxu0
        %v3536 = vadd.f32 0.0, %v3535
        %v3537 = vpop.f32.mrf.mxu0
        %v3538 = vadd.f32 0.0, %v3537
        %3539 = vdwg.mxu0
        %v3542 = vunpack.c.l.b16 %v3472
        %v3543 = vunpack.c.l.b16 %v3473
        %v3544 = vpack.c.b16 %v3543, %v3542
        %v3547 = vunpack.c.l.b16 %v3071
        %v3548 = vunpack.c.l.b16 %v3072
        %v3549 = vpack.c.b16 %v3548, %v3547
        %v3552 = vsel %vm3291, %v3544, 0
        %3554 = vmatpush.bf16.msra.mxu0 0
        %3555 = vmatpush.bf16.msra.mxu0 0
        %3556 = vmatpush.bf16.msra.mxu0 0
        %3557 = vmatpush.bf16.msra.mxu0 0
        %3558 = vmatpush.bf16.msra.mxu0 0
        %3559 = vmatpush.bf16.msra.mxu0 0
        %3560 = vmatpush.bf16.msra.mxu0 0
        %3561 = vmatpush.bf16.msra.mxu0 %v3549
        %3562 = vmatmul.bf16.gmra.mxu0 %v3552
        %v3563 = vpop.f32.mrf.mxu0
        %v3564 = vadd.f32 0.0, %v3563
        %v3565 = vpop.f32.mrf.mxu0
        %v3566 = vadd.f32 0.0, %v3565
        %3567 = vdwg.mxu0
        %v3570 = vunpack.c.l.b16 %v3474
        %v3571 = vunpack.c.l.b16 %v3475
        %v3572 = vpack.c.b16 %v3571, %v3570
        %v3575 = vunpack.c.l.b16 %v3073
        %v3576 = vunpack.c.l.b16 %v3074
        %v3577 = vpack.c.b16 %v3576, %v3575
        %v3580 = vsel %vm3291, %v3572, 0
        %3582 = vmatpush.bf16.msra.mxu0 0
        %3583 = vmatpush.bf16.msra.mxu0 0
        %3584 = vmatpush.bf16.msra.mxu0 0
        %3585 = vmatpush.bf16.msra.mxu0 0
        %3586 = vmatpush.bf16.msra.mxu0 0
        %3587 = vmatpush.bf16.msra.mxu0 0
        %3588 = vmatpush.bf16.msra.mxu0 0
        %3589 = vmatpush.bf16.msra.mxu0 %v3577
        %3590 = vmatmul.bf16.gmra.mxu0 %v3580
        %v3591 = vpop.f32.mrf.mxu0
        %v3592 = vadd.f32 0.0, %v3591
        %v3593 = vpop.f32.mrf.mxu0
        %v3594 = vadd.f32 0.0, %v3593
        %3595 = vdwg.mxu0
        %v3598 = vunpack.c.l.b16 %v3476
        %v3599 = vunpack.c.l.b16 %v3477
        %v3600 = vpack.c.b16 %v3599, %v3598
        %v3603 = vunpack.c.l.b16 %v3075
        %v3604 = vunpack.c.l.b16 %v3076
        %v3605 = vpack.c.b16 %v3604, %v3603
        %v3608 = vsel %vm3291, %v3600, 0
        %3610 = vmatpush.bf16.msra.mxu0 0
        %3611 = vmatpush.bf16.msra.mxu0 0
        %3612 = vmatpush.bf16.msra.mxu0 0
        %3613 = vmatpush.bf16.msra.mxu0 0
        %3614 = vmatpush.bf16.msra.mxu0 0
        %3615 = vmatpush.bf16.msra.mxu0 0
        %3616 = vmatpush.bf16.msra.mxu0 0
        %3617 = vmatpush.bf16.msra.mxu0 %v3605
        %3618 = vmatmul.bf16.gmra.mxu0 %v3608
        %v3619 = vpop.f32.mrf.mxu0
        %v3620 = vadd.f32 0.0, %v3619
        %v3621 = vpop.f32.mrf.mxu0
        %v3622 = vadd.f32 0.0, %v3621
        %3623 = vdwg.mxu0
        %v3626 = vunpack.c.l.b16 %v3478
        %v3627 = vunpack.c.l.b16 %v3479
        %v3628 = vpack.c.b16 %v3627, %v3626
        %v3631 = vunpack.c.l.b16 %v3077
        %v3632 = vunpack.c.l.b16 %v3078
        %v3633 = vpack.c.b16 %v3632, %v3631
        %v3636 = vsel %vm3291, %v3628, 0
        %3638 = vmatpush.bf16.msra.mxu0 0
        %3639 = vmatpush.bf16.msra.mxu0 0
        %3640 = vmatpush.bf16.msra.mxu0 0
        %3641 = vmatpush.bf16.msra.mxu0 0
        %3642 = vmatpush.bf16.msra.mxu0 0
        %3643 = vmatpush.bf16.msra.mxu0 0
        %3644 = vmatpush.bf16.msra.mxu0 0
        %3645 = vmatpush.bf16.msra.mxu0 %v3633
        %3646 = vmatmul.bf16.gmra.mxu0 %v3636
        %v3647 = vpop.f32.mrf.mxu0
        %v3648 = vadd.f32 0.0, %v3647
        %v3649 = vpop.f32.mrf.mxu0
        %v3650 = vadd.f32 0.0, %v3649
        %3651 = vdwg.mxu0
        %v3654 = vunpack.c.l.b16 %v3480
        %v3655 = vunpack.c.l.b16 %v3481
        %v3656 = vpack.c.b16 %v3655, %v3654
        %v3659 = vunpack.c.l.b16 %v3079
        %v3660 = vunpack.c.l.b16 %v3080
        %v3661 = vpack.c.b16 %v3660, %v3659
        %v3664 = vsel %vm3291, %v3656, 0
        %3666 = vmatpush.bf16.msra.mxu0 0
        %3667 = vmatpush.bf16.msra.mxu0 0
        %3668 = vmatpush.bf16.msra.mxu0 0
        %3669 = vmatpush.bf16.msra.mxu0 0
        %3670 = vmatpush.bf16.msra.mxu0 0
        %3671 = vmatpush.bf16.msra.mxu0 0
        %3672 = vmatpush.bf16.msra.mxu0 0
        %3673 = vmatpush.bf16.msra.mxu0 %v3661
        %3674 = vmatmul.bf16.gmra.mxu0 %v3664
        %v3675 = vpop.f32.mrf.mxu0
        %v3676 = vadd.f32 0.0, %v3675
        %v3677 = vpop.f32.mrf.mxu0
        %v3678 = vadd.f32 0.0, %v3677
        %3679 = vdwg.mxu0
        %v3682 = vunpack.c.l.b16 %v3482
        %v3683 = vunpack.c.l.b16 %v3483
        %v3684 = vpack.c.b16 %v3683, %v3682
        %v3687 = vunpack.c.l.b16 %v3081
        %v3688 = vunpack.c.l.b16 %v3082
        %v3689 = vpack.c.b16 %v3688, %v3687
        %v3692 = vsel %vm3291, %v3684, 0
        %3694 = vmatpush.bf16.msra.mxu0 0
        %3695 = vmatpush.bf16.msra.mxu0 0
        %3696 = vmatpush.bf16.msra.mxu0 0
        %3697 = vmatpush.bf16.msra.mxu0 0
        %3698 = vmatpush.bf16.msra.mxu0 0
        %3699 = vmatpush.bf16.msra.mxu0 0
        %3700 = vmatpush.bf16.msra.mxu0 0
        %3701 = vmatpush.bf16.msra.mxu0 %v3689
        %3702 = vmatmul.bf16.gmra.mxu0 %v3692
        %v3703 = vpop.f32.mrf.mxu0
        %v3704 = vadd.f32 0.0, %v3703
        %v3705 = vpop.f32.mrf.mxu0
        %v3706 = vadd.f32 0.0, %v3705
        %3707 = vdwg.mxu0
        %v3708 = vpack.c.bf16 %v3508, %v3508
        %v3709 = vpack.c.bf16 %v3510, %v3510
        %v3710 = vpack.c.bf16 %v3536, %v3536
        %v3711 = vpack.c.bf16 %v3538, %v3538
        %v3712 = vpack.c.bf16 %v3564, %v3564
        %v3713 = vpack.c.bf16 %v3566, %v3566
        %v3714 = vpack.c.bf16 %v3592, %v3592
        %v3715 = vpack.c.bf16 %v3594, %v3594
        %v3716 = vpack.c.bf16 %v3620, %v3620
        %v3717 = vpack.c.bf16 %v3622, %v3622
        %v3718 = vpack.c.bf16 %v3648, %v3648
        %v3719 = vpack.c.bf16 %v3650, %v3650
        %v3720 = vpack.c.bf16 %v3676, %v3676
        %v3721 = vpack.c.bf16 %v3678, %v3678
        %v3722 = vpack.c.bf16 %v3704, %v3704
        %v3723 = vpack.c.bf16 %v3706, %v3706
        %3724 = vst [vmem:[#allocation2 + $0x8] sm:$0xf] %v3708
        %3725 = vst [vmem:[#allocation2 + $0x18] sm:$0xf] %v3709
        %3726 = vst [vmem:[#allocation2 + $0x28] sm:$0xf] %v3710
        %3727 = vst [vmem:[#allocation2 + $0x38] sm:$0xf] %v3711
        %3728 = vst [vmem:[#allocation2 + $0x48] sm:$0xf] %v3712
        %3729 = vst [vmem:[#allocation2 + $0x58] sm:$0xf] %v3713
        %3730 = vst [vmem:[#allocation2 + $0x68] sm:$0xf] %v3714
        %3731 = vst [vmem:[#allocation2 + $0x78] sm:$0xf] %v3715
        %3732 = vst [vmem:[#allocation2 + $0x88] sm:$0xf] %v3716
        %3733 = vst [vmem:[#allocation2 + $0x98] sm:$0xf] %v3717
        %3734 = vst [vmem:[#allocation2 + $0xa8] sm:$0xf] %v3718
        %3735 = vst [vmem:[#allocation2 + $0xb8] sm:$0xf] %v3719
        %3736 = vst [vmem:[#allocation2 + $0xc8] sm:$0xf] %v3720
        %3737 = vst [vmem:[#allocation2 + $0xd8] sm:$0xf] %v3721
        %3738 = vst [vmem:[#allocation2 + $0xe8] sm:$0xf] %v3722
        %3739 = vst [vmem:[#allocation2 + $0xf8] sm:$0xf] %v3723
        %v3740 = vpack.c.bf16 %v1128, %v1128
        %v3741 = vpack.c.bf16 %v1130, %v1130
        %v3742 = vpack.c.bf16 %v1133, %v1133
        %v3743 = vpack.c.bf16 %v1135, %v1135
        %v3744 = vpack.c.bf16 %v1138, %v1138
        %v3745 = vpack.c.bf16 %v1140, %v1140
        %v3746 = vpack.c.bf16 %v1143, %v1143
        %v3747 = vpack.c.bf16 %v1145, %v1145
        %v3748 = vpack.c.bf16 %v1148, %v1148
        %v3749 = vpack.c.bf16 %v1150, %v1150
        %v3750 = vpack.c.bf16 %v1153, %v1153
        %v3751 = vpack.c.bf16 %v1155, %v1155
        %v3752 = vpack.c.bf16 %v1158, %v1158
        %v3753 = vpack.c.bf16 %v1160, %v1160
        %v3754 = vpack.c.bf16 %v1163, %v1163
        %v3755 = vpack.c.bf16 %v1165, %v1165
        %v3756 = vpack.c.bf16 %v1516, %v1516
        %v3757 = vpack.c.bf16 %v1518, %v1518
        %v3758 = vpack.c.bf16 %v1521, %v1521
        %v3759 = vpack.c.bf16 %v1523, %v1523
        %v3760 = vpack.c.bf16 %v1526, %v1526
        %v3761 = vpack.c.bf16 %v1528, %v1528
        %v3762 = vpack.c.bf16 %v1531, %v1531
        %v3763 = vpack.c.bf16 %v1533, %v1533
        %v3764 = vpack.c.bf16 %v1536, %v1536
        %v3765 = vpack.c.bf16 %v1538, %v1538
        %v3766 = vpack.c.bf16 %v1541, %v1541
        %v3767 = vpack.c.bf16 %v1543, %v1543
        %v3768 = vpack.c.bf16 %v1546, %v1546
        %v3769 = vpack.c.bf16 %v1548, %v1548
        %v3770 = vpack.c.bf16 %v1551, %v1551
        %v3771 = vpack.c.bf16 %v1553, %v1553
        %v3772 = vpack.c.bf16 %v2972, %v2972
        %v3773 = vpack.c.bf16 %v2974, %v2974
        %v3774 = vpack.c.bf16 %v2976, %v2976
        %v3775 = vpack.c.bf16 %v2978, %v2978
        %v3776 = vpack.c.bf16 %v2980, %v2980
        %v3777 = vpack.c.bf16 %v2982, %v2982
        %v3778 = vpack.c.bf16 %v2984, %v2984
        %v3779 = vpack.c.bf16 %v2986, %v2986
        %v3780 = vpack.c.bf16 %v2988, %v2988
        %v3781 = vpack.c.bf16 %v2990, %v2990
        %v3782 = vpack.c.bf16 %v2992, %v2992
        %v3783 = vpack.c.bf16 %v2994, %v2994
        %v3784 = vpack.c.bf16 %v2996, %v2996
        %v3785 = vpack.c.bf16 %v2998, %v2998
        %v3786 = vpack.c.bf16 %v3000, %v3000
        %v3787 = vpack.c.bf16 %v3002, %v3002
        %v3790 = vunpack.c.l.b16 %v3740
        %v3791 = vunpack.c.l.b16 %v3741
        %v3792 = vpack.c.b16 %v3791, %v3790
        %v3796 = vunpack.c.l.b16 %v3756
        %v3797 = vunpack.c.l.b16 %v3757
        %v3798 = vpack.c.b16 %v3797, %v3796
        %3800 = vmatpush.bf16.xpose.msra.mxu0 0
        %3801 = vmatpush.bf16.xpose.msra.mxu0 0
        %3802 = vmatpush.bf16.xpose.msra.mxu0 0
        %3803 = vmatpush.bf16.xpose.msra.mxu0 0
        %3804 = vmatpush.bf16.xpose.msra.mxu0 0
        %3805 = vmatpush.bf16.xpose.msra.mxu0 0
        %3806 = vmatpush.bf16.xpose.msra.mxu0 0
        %3807 = vmatpush.bf16.xpose.msra.mxu0 %v3798
        %3808 = vmatmul.bf16.gmra.mxu0 %v3792
        %v3809 = vpop.f32.mrf.mxu0
        %v3810 = vadd.f32 0.0, %v3809
        %v3811 = vpop.f32.mrf.mxu0
        %v3812 = vadd.f32 0.0, %v3811
        %3813 = vdwg.mxu0
        %v3816 = vunpack.c.l.b16 %v3742
        %v3817 = vunpack.c.l.b16 %v3743
        %v3818 = vpack.c.b16 %v3817, %v3816
        %v3822 = vunpack.c.l.b16 %v3758
        %v3823 = vunpack.c.l.b16 %v3759
        %v3824 = vpack.c.b16 %v3823, %v3822
        %3826 = vmatpush.bf16.xpose.msra.mxu0 0
        %3827 = vmatpush.bf16.xpose.msra.mxu0 0
        %3828 = vmatpush.bf16.xpose.msra.mxu0 0
        %3829 = vmatpush.bf16.xpose.msra.mxu0 0
        %3830 = vmatpush.bf16.xpose.msra.mxu0 0
        %3831 = vmatpush.bf16.xpose.msra.mxu0 0
        %3832 = vmatpush.bf16.xpose.msra.mxu0 0
        %3833 = vmatpush.bf16.xpose.msra.mxu0 %v3824
        %3834 = vmatmul.bf16.gmra.mxu0 %v3818
        %v3835 = vpop.f32.mrf.mxu0
        %v3836 = vadd.f32 0.0, %v3835
        %v3837 = vpop.f32.mrf.mxu0
        %v3838 = vadd.f32 0.0, %v3837
        %3839 = vdwg.mxu0
        %v3842 = vunpack.c.l.b16 %v3744
        %v3843 = vunpack.c.l.b16 %v3745
        %v3844 = vpack.c.b16 %v3843, %v3842
        %v3848 = vunpack.c.l.b16 %v3760
        %v3849 = vunpack.c.l.b16 %v3761
        %v3850 = vpack.c.b16 %v3849, %v3848
        %3852 = vmatpush.bf16.xpose.msra.mxu0 0
        %3853 = vmatpush.bf16.xpose.msra.mxu0 0
        %3854 = vmatpush.bf16.xpose.msra.mxu0 0
        %3855 = vmatpush.bf16.xpose.msra.mxu0 0
        %3856 = vmatpush.bf16.xpose.msra.mxu0 0
        %3857 = vmatpush.bf16.xpose.msra.mxu0 0
        %3858 = vmatpush.bf16.xpose.msra.mxu0 0
        %3859 = vmatpush.bf16.xpose.msra.mxu0 %v3850
        %3860 = vmatmul.bf16.gmra.mxu0 %v3844
        %v3861 = vpop.f32.mrf.mxu0
        %v3862 = vadd.f32 0.0, %v3861
        %v3863 = vpop.f32.mrf.mxu0
        %v3864 = vadd.f32 0.0, %v3863
        %3865 = vdwg.mxu0
        %v3868 = vunpack.c.l.b16 %v3746
        %v3869 = vunpack.c.l.b16 %v3747
        %v3870 = vpack.c.b16 %v3869, %v3868
        %v3874 = vunpack.c.l.b16 %v3762
        %v3875 = vunpack.c.l.b16 %v3763
        %v3876 = vpack.c.b16 %v3875, %v3874
        %3878 = vmatpush.bf16.xpose.msra.mxu0 0
        %3879 = vmatpush.bf16.xpose.msra.mxu0 0
        %3880 = vmatpush.bf16.xpose.msra.mxu0 0
        %3881 = vmatpush.bf16.xpose.msra.mxu0 0
        %3882 = vmatpush.bf16.xpose.msra.mxu0 0
        %3883 = vmatpush.bf16.xpose.msra.mxu0 0
        %3884 = vmatpush.bf16.xpose.msra.mxu0 0
        %3885 = vmatpush.bf16.xpose.msra.mxu0 %v3876
        %3886 = vmatmul.bf16.gmra.mxu0 %v3870
        %v3887 = vpop.f32.mrf.mxu0
        %v3888 = vadd.f32 0.0, %v3887
        %v3889 = vpop.f32.mrf.mxu0
        %v3890 = vadd.f32 0.0, %v3889
        %3891 = vdwg.mxu0
        %v3894 = vunpack.c.l.b16 %v3748
        %v3895 = vunpack.c.l.b16 %v3749
        %v3896 = vpack.c.b16 %v3895, %v3894
        %v3900 = vunpack.c.l.b16 %v3764
        %v3901 = vunpack.c.l.b16 %v3765
        %v3902 = vpack.c.b16 %v3901, %v3900
        %3904 = vmatpush.bf16.xpose.msra.mxu0 0
        %3905 = vmatpush.bf16.xpose.msra.mxu0 0
        %3906 = vmatpush.bf16.xpose.msra.mxu0 0
        %3907 = vmatpush.bf16.xpose.msra.mxu0 0
        %3908 = vmatpush.bf16.xpose.msra.mxu0 0
        %3909 = vmatpush.bf16.xpose.msra.mxu0 0
        %3910 = vmatpush.bf16.xpose.msra.mxu0 0
        %3911 = vmatpush.bf16.xpose.msra.mxu0 %v3902
        %3912 = vmatmul.bf16.gmra.mxu0 %v3896
        %v3913 = vpop.f32.mrf.mxu0
        %v3914 = vadd.f32 0.0, %v3913
        %v3915 = vpop.f32.mrf.mxu0
        %v3916 = vadd.f32 0.0, %v3915
        %3917 = vdwg.mxu0
        %v3920 = vunpack.c.l.b16 %v3750
        %v3921 = vunpack.c.l.b16 %v3751
        %v3922 = vpack.c.b16 %v3921, %v3920
        %v3926 = vunpack.c.l.b16 %v3766
        %v3927 = vunpack.c.l.b16 %v3767
        %v3928 = vpack.c.b16 %v3927, %v3926
        %3930 = vmatpush.bf16.xpose.msra.mxu0 0
        %3931 = vmatpush.bf16.xpose.msra.mxu0 0
        %3932 = vmatpush.bf16.xpose.msra.mxu0 0
        %3933 = vmatpush.bf16.xpose.msra.mxu0 0
        %3934 = vmatpush.bf16.xpose.msra.mxu0 0
        %3935 = vmatpush.bf16.xpose.msra.mxu0 0
        %3936 = vmatpush.bf16.xpose.msra.mxu0 0
        %3937 = vmatpush.bf16.xpose.msra.mxu0 %v3928
        %3938 = vmatmul.bf16.gmra.mxu0 %v3922
        %v3939 = vpop.f32.mrf.mxu0
        %v3940 = vadd.f32 0.0, %v3939
        %v3941 = vpop.f32.mrf.mxu0
        %v3942 = vadd.f32 0.0, %v3941
        %3943 = vdwg.mxu0
        %v3946 = vunpack.c.l.b16 %v3752
        %v3947 = vunpack.c.l.b16 %v3753
        %v3948 = vpack.c.b16 %v3947, %v3946
        %v3952 = vunpack.c.l.b16 %v3768
        %v3953 = vunpack.c.l.b16 %v3769
        %v3954 = vpack.c.b16 %v3953, %v3952
        %3956 = vmatpush.bf16.xpose.msra.mxu0 0
        %3957 = vmatpush.bf16.xpose.msra.mxu0 0
        %3958 = vmatpush.bf16.xpose.msra.mxu0 0
        %3959 = vmatpush.bf16.xpose.msra.mxu0 0
        %3960 = vmatpush.bf16.xpose.msra.mxu0 0
        %3961 = vmatpush.bf16.xpose.msra.mxu0 0
        %3962 = vmatpush.bf16.xpose.msra.mxu0 0
        %3963 = vmatpush.bf16.xpose.msra.mxu0 %v3954
        %3964 = vmatmul.bf16.gmra.mxu0 %v3948
        %v3965 = vpop.f32.mrf.mxu0
        %v3966 = vadd.f32 0.0, %v3965
        %v3967 = vpop.f32.mrf.mxu0
        %v3968 = vadd.f32 0.0, %v3967
        %3969 = vdwg.mxu0
        %v3972 = vunpack.c.l.b16 %v3754
        %v3973 = vunpack.c.l.b16 %v3755
        %v3974 = vpack.c.b16 %v3973, %v3972
        %v3978 = vunpack.c.l.b16 %v3770
        %v3979 = vunpack.c.l.b16 %v3771
        %v3980 = vpack.c.b16 %v3979, %v3978
        %3982 = vmatpush.bf16.xpose.msra.mxu0 0
        %3983 = vmatpush.bf16.xpose.msra.mxu0 0
        %3984 = vmatpush.bf16.xpose.msra.mxu0 0
        %3985 = vmatpush.bf16.xpose.msra.mxu0 0
        %3986 = vmatpush.bf16.xpose.msra.mxu0 0
        %3987 = vmatpush.bf16.xpose.msra.mxu0 0
        %3988 = vmatpush.bf16.xpose.msra.mxu0 0
        %3989 = vmatpush.bf16.xpose.msra.mxu0 %v3980
        %3990 = vmatmul.bf16.gmra.mxu0 %v3974
        %v3991 = vpop.f32.mrf.mxu0
        %v3992 = vadd.f32 0.0, %v3991
        %v3993 = vpop.f32.mrf.mxu0
        %v3994 = vadd.f32 0.0, %v3993
        %3995 = vdwg.mxu0
        %v3996 = vsel %vm3291, %v3810, -inf
        %3997 = vmax.xlane.f32.xlu0 %v3996
        %v3998 = vpop.xlane.xlu0 %3997
        %v3999 = vsel %vm3291, %v3812, -inf
        %4000 = vmax.xlane.f32.xlu0 %v3999
        %v4001 = vpop.xlane.xlu0 %4000
        %v4002 = vsel %vm3291, %v3836, -inf
        %4003 = vmax.xlane.f32.xlu0 %v4002
        %v4004 = vpop.xlane.xlu0 %4003
        %v4005 = vsel %vm3291, %v3838, -inf
        %4006 = vmax.xlane.f32.xlu0 %v4005
        %v4007 = vpop.xlane.xlu0 %4006
        %v4008 = vsel %vm3291, %v3862, -inf
        %4009 = vmax.xlane.f32.xlu0 %v4008
        %v4010 = vpop.xlane.xlu0 %4009
        %v4011 = vsel %vm3291, %v3864, -inf
        %4012 = vmax.xlane.f32.xlu0 %v4011
        %v4013 = vpop.xlane.xlu0 %4012
        %v4014 = vsel %vm3291, %v3888, -inf
        %4015 = vmax.xlane.f32.xlu0 %v4014
        %v4016 = vpop.xlane.xlu0 %4015
        %v4017 = vsel %vm3291, %v3890, -inf
        %4018 = vmax.xlane.f32.xlu0 %v4017
        %v4019 = vpop.xlane.xlu0 %4018
        %v4020 = vsel %vm3291, %v3914, -inf
        %4021 = vmax.xlane.f32.xlu0 %v4020
        %v4022 = vpop.xlane.xlu0 %4021
        %v4023 = vsel %vm3291, %v3916, -inf
        %4024 = vmax.xlane.f32.xlu0 %v4023
        %v4025 = vpop.xlane.xlu0 %4024
        %v4026 = vsel %vm3291, %v3940, -inf
        %4027 = vmax.xlane.f32.xlu0 %v4026
        %v4028 = vpop.xlane.xlu0 %4027
        %v4029 = vsel %vm3291, %v3942, -inf
        %4030 = vmax.xlane.f32.xlu0 %v4029
        %v4031 = vpop.xlane.xlu0 %4030
        %v4032 = vsel %vm3291, %v3966, -inf
        %4033 = vmax.xlane.f32.xlu0 %v4032
        %v4034 = vpop.xlane.xlu0 %4033
        %v4035 = vsel %vm3291, %v3968, -inf
        %4036 = vmax.xlane.f32.xlu0 %v4035
        %v4037 = vpop.xlane.xlu0 %4036
        %v4038 = vsel %vm3291, %v3992, -inf
        %4039 = vmax.xlane.f32.xlu0 %v4038
        %v4040 = vpop.xlane.xlu0 %4039
        %v4041 = vsel %vm3291, %v3994, -inf
        %4042 = vmax.xlane.f32.xlu0 %v4041
        %v4043 = vpop.xlane.xlu0 %4042
        %v4044 = vsub.f32 %v3810, %v3998
        %v4045 = vsub.f32 %v3812, %v4001
        %v4046 = vsub.f32 %v3836, %v4004
        %v4047 = vsub.f32 %v3838, %v4007
        %v4048 = vsub.f32 %v3862, %v4010
        %v4049 = vsub.f32 %v3864, %v4013
        %v4050 = vsub.f32 %v3888, %v4016
        %v4051 = vsub.f32 %v3890, %v4019
        %v4052 = vsub.f32 %v3914, %v4022
        %v4053 = vsub.f32 %v3916, %v4025
        %v4054 = vsub.f32 %v3940, %v4028
        %v4055 = vsub.f32 %v3942, %v4031
        %v4056 = vsub.f32 %v3966, %v4034
        %v4057 = vsub.f32 %v3968, %v4037
        %v4058 = vsub.f32 %v3992, %v4040
        %v4059 = vsub.f32 %v3994, %v4043
        %v4060 = vmul.f32 %v4044, 1.442695
        %v4061 = vpow.pop %v4060
        %v4062 = vmul.f32 %v4045, 1.442695
        %v4063 = vpow.pop %v4062
        %v4064 = vmul.f32 %v4046, 1.442695
        %v4065 = vpow.pop %v4064
        %v4066 = vmul.f32 %v4047, 1.442695
        %v4067 = vpow.pop %v4066
        %v4068 = vmul.f32 %v4048, 1.442695
        %v4069 = vpow.pop %v4068
        %v4070 = vmul.f32 %v4049, 1.442695
        %v4071 = vpow.pop %v4070
        %v4072 = vmul.f32 %v4050, 1.442695
        %v4073 = vpow.pop %v4072
        %v4074 = vmul.f32 %v4051, 1.442695
        %v4075 = vpow.pop %v4074
        %v4076 = vmul.f32 %v4052, 1.442695
        %v4077 = vpow.pop %v4076
        %v4078 = vmul.f32 %v4053, 1.442695
        %v4079 = vpow.pop %v4078
        %v4080 = vmul.f32 %v4054, 1.442695
        %v4081 = vpow.pop %v4080
        %v4082 = vmul.f32 %v4055, 1.442695
        %v4083 = vpow.pop %v4082
        %v4084 = vmul.f32 %v4056, 1.442695
        %v4085 = vpow.pop %v4084
        %v4086 = vmul.f32 %v4057, 1.442695
        %v4087 = vpow.pop %v4086
        %v4088 = vmul.f32 %v4058, 1.442695
        %v4089 = vpow.pop %v4088
        %v4090 = vmul.f32 %v4059, 1.442695
        %v4091 = vpow.pop %v4090
        %v4092 = vsel %vm3291, %v4061, 0.0
        %4093 = vadd.xlane.f32.xlu0 %v4092
        %v4094 = vpop.xlane.xlu0 %4093
        %v4095 = vsel %vm3291, %v4063, 0.0
        %4096 = vadd.xlane.f32.xlu0 %v4095
        %v4097 = vpop.xlane.xlu0 %4096
        %v4098 = vsel %vm3291, %v4065, 0.0
        %4099 = vadd.xlane.f32.xlu0 %v4098
        %v4100 = vpop.xlane.xlu0 %4099
        %v4101 = vsel %vm3291, %v4067, 0.0
        %4102 = vadd.xlane.f32.xlu0 %v4101
        %v4103 = vpop.xlane.xlu0 %4102
        %v4104 = vsel %vm3291, %v4069, 0.0
        %4105 = vadd.xlane.f32.xlu0 %v4104
        %v4106 = vpop.xlane.xlu0 %4105
        %v4107 = vsel %vm3291, %v4071, 0.0
        %4108 = vadd.xlane.f32.xlu0 %v4107
        %v4109 = vpop.xlane.xlu0 %4108
        %v4110 = vsel %vm3291, %v4073, 0.0
        %4111 = vadd.xlane.f32.xlu0 %v4110
        %v4112 = vpop.xlane.xlu0 %4111
        %v4113 = vsel %vm3291, %v4075, 0.0
        %4114 = vadd.xlane.f32.xlu0 %v4113
        %v4115 = vpop.xlane.xlu0 %4114
        %v4116 = vsel %vm3291, %v4077, 0.0
        %4117 = vadd.xlane.f32.xlu0 %v4116
        %v4118 = vpop.xlane.xlu0 %4117
        %v4119 = vsel %vm3291, %v4079, 0.0
        %4120 = vadd.xlane.f32.xlu0 %v4119
        %v4121 = vpop.xlane.xlu0 %4120
        %v4122 = vsel %vm3291, %v4081, 0.0
        %4123 = vadd.xlane.f32.xlu0 %v4122
        %v4124 = vpop.xlane.xlu0 %4123
        %v4125 = vsel %vm3291, %v4083, 0.0
        %4126 = vadd.xlane.f32.xlu0 %v4125
        %v4127 = vpop.xlane.xlu0 %4126
        %v4128 = vsel %vm3291, %v4085, 0.0
        %4129 = vadd.xlane.f32.xlu0 %v4128
        %v4130 = vpop.xlane.xlu0 %4129
        %v4131 = vsel %vm3291, %v4087, 0.0
        %4132 = vadd.xlane.f32.xlu0 %v4131
        %v4133 = vpop.xlane.xlu0 %4132
        %v4134 = vsel %vm3291, %v4089, 0.0
        %4135 = vadd.xlane.f32.xlu0 %v4134
        %v4136 = vpop.xlane.xlu0 %4135
        %v4137 = vsel %vm3291, %v4091, 0.0
        %4138 = vadd.xlane.f32.xlu0 %v4137
        %v4139 = vpop.xlane.xlu0 %4138
        %v4140 = vrcp.pop %v4094
        %v4141 = vrcp.pop %v4097
        %v4142 = vrcp.pop %v4100
        %v4143 = vrcp.pop %v4103
        %v4144 = vrcp.pop %v4106
        %v4145 = vrcp.pop %v4109
        %v4146 = vrcp.pop %v4112
        %v4147 = vrcp.pop %v4115
        %v4148 = vrcp.pop %v4118
        %v4149 = vrcp.pop %v4121
        %v4150 = vrcp.pop %v4124
        %v4151 = vrcp.pop %v4127
        %v4152 = vrcp.pop %v4130
        %v4153 = vrcp.pop %v4133
        %v4154 = vrcp.pop %v4136
        %v4155 = vrcp.pop %v4139
        %v4156 = vmul.f32 %v4061, %v4140
        %v4157 = vmul.f32 %v4063, %v4141
        %v4158 = vmul.f32 %v4065, %v4142
        %v4159 = vmul.f32 %v4067, %v4143
        %v4160 = vmul.f32 %v4069, %v4144
        %v4161 = vmul.f32 %v4071, %v4145
        %v4162 = vmul.f32 %v4073, %v4146
        %v4163 = vmul.f32 %v4075, %v4147
        %v4164 = vmul.f32 %v4077, %v4148
        %v4165 = vmul.f32 %v4079, %v4149
        %v4166 = vmul.f32 %v4081, %v4150
        %v4167 = vmul.f32 %v4083, %v4151
        %v4168 = vmul.f32 %v4085, %v4152
        %v4169 = vmul.f32 %v4087, %v4153
        %v4170 = vmul.f32 %v4089, %v4154
        %v4171 = vmul.f32 %v4091, %v4155
        %v4172 = vpack.c.bf16 %v4156, %v4156
        %v4173 = vpack.c.bf16 %v4157, %v4157
        %v4174 = vpack.c.bf16 %v4158, %v4158
        %v4175 = vpack.c.bf16 %v4159, %v4159
        %v4176 = vpack.c.bf16 %v4160, %v4160
        %v4177 = vpack.c.bf16 %v4161, %v4161
        %v4178 = vpack.c.bf16 %v4162, %v4162
        %v4179 = vpack.c.bf16 %v4163, %v4163
        %v4180 = vpack.c.bf16 %v4164, %v4164
        %v4181 = vpack.c.bf16 %v4165, %v4165
        %v4182 = vpack.c.bf16 %v4166, %v4166
        %v4183 = vpack.c.bf16 %v4167, %v4167
        %v4184 = vpack.c.bf16 %v4168, %v4168
        %v4185 = vpack.c.bf16 %v4169, %v4169
        %v4186 = vpack.c.bf16 %v4170, %v4170
        %v4187 = vpack.c.bf16 %v4171, %v4171
        %v4190 = vunpack.c.l.b16 %v4172
        %v4191 = vunpack.c.l.b16 %v4173
        %v4192 = vpack.c.b16 %v4191, %v4190
        %v4195 = vunpack.c.l.b16 %v3772
        %v4196 = vunpack.c.l.b16 %v3773
        %v4197 = vpack.c.b16 %v4196, %v4195
        %v4200 = vsel %vm3291, %v4192, 0
        %4202 = vmatpush.bf16.msra.mxu0 0
        %4203 = vmatpush.bf16.msra.mxu0 0
        %4204 = vmatpush.bf16.msra.mxu0 0
        %4205 = vmatpush.bf16.msra.mxu0 0
        %4206 = vmatpush.bf16.msra.mxu0 0
        %4207 = vmatpush.bf16.msra.mxu0 0
        %4208 = vmatpush.bf16.msra.mxu0 0
        %4209 = vmatpush.bf16.msra.mxu0 %v4197
        %4210 = vmatmul.bf16.gmra.mxu0 %v4200
        %v4211 = vpop.f32.mrf.mxu0
        %v4212 = vadd.f32 0.0, %v4211
        %v4213 = vpop.f32.mrf.mxu0
        %v4214 = vadd.f32 0.0, %v4213
        %4215 = vdwg.mxu0
        %v4218 = vunpack.c.l.b16 %v4174
        %v4219 = vunpack.c.l.b16 %v4175
        %v4220 = vpack.c.b16 %v4219, %v4218
        %v4223 = vunpack.c.l.b16 %v3774
        %v4224 = vunpack.c.l.b16 %v3775
        %v4225 = vpack.c.b16 %v4224, %v4223
        %v4228 = vsel %vm3291, %v4220, 0
        %4230 = vmatpush.bf16.msra.mxu0 0
        %4231 = vmatpush.bf16.msra.mxu0 0
        %4232 = vmatpush.bf16.msra.mxu0 0
        %4233 = vmatpush.bf16.msra.mxu0 0
        %4234 = vmatpush.bf16.msra.mxu0 0
        %4235 = vmatpush.bf16.msra.mxu0 0
        %4236 = vmatpush.bf16.msra.mxu0 0
        %4237 = vmatpush.bf16.msra.mxu0 %v4225
        %4238 = vmatmul.bf16.gmra.mxu0 %v4228
        %v4239 = vpop.f32.mrf.mxu0
        %v4240 = vadd.f32 0.0, %v4239
        %v4241 = vpop.f32.mrf.mxu0
        %v4242 = vadd.f32 0.0, %v4241
        %4243 = vdwg.mxu0
        %v4246 = vunpack.c.l.b16 %v4176
        %v4247 = vunpack.c.l.b16 %v4177
        %v4248 = vpack.c.b16 %v4247, %v4246
        %v4251 = vunpack.c.l.b16 %v3776
        %v4252 = vunpack.c.l.b16 %v3777
        %v4253 = vpack.c.b16 %v4252, %v4251
        %v4256 = vsel %vm3291, %v4248, 0
        %4258 = vmatpush.bf16.msra.mxu0 0
        %4259 = vmatpush.bf16.msra.mxu0 0
        %4260 = vmatpush.bf16.msra.mxu0 0
        %4261 = vmatpush.bf16.msra.mxu0 0
        %4262 = vmatpush.bf16.msra.mxu0 0
        %4263 = vmatpush.bf16.msra.mxu0 0
        %4264 = vmatpush.bf16.msra.mxu0 0
        %4265 = vmatpush.bf16.msra.mxu0 %v4253
        %4266 = vmatmul.bf16.gmra.mxu0 %v4256
        %v4267 = vpop.f32.mrf.mxu0
        %v4268 = vadd.f32 0.0, %v4267
        %v4269 = vpop.f32.mrf.mxu0
        %v4270 = vadd.f32 0.0, %v4269
        %4271 = vdwg.mxu0
        %v4274 = vunpack.c.l.b16 %v4178
        %v4275 = vunpack.c.l.b16 %v4179
        %v4276 = vpack.c.b16 %v4275, %v4274
        %v4279 = vunpack.c.l.b16 %v3778
        %v4280 = vunpack.c.l.b16 %v3779
        %v4281 = vpack.c.b16 %v4280, %v4279
        %v4284 = vsel %vm3291, %v4276, 0
        %4286 = vmatpush.bf16.msra.mxu0 0
        %4287 = vmatpush.bf16.msra.mxu0 0
        %4288 = vmatpush.bf16.msra.mxu0 0
        %4289 = vmatpush.bf16.msra.mxu0 0
        %4290 = vmatpush.bf16.msra.mxu0 0
        %4291 = vmatpush.bf16.msra.mxu0 0
        %4292 = vmatpush.bf16.msra.mxu0 0
        %4293 = vmatpush.bf16.msra.mxu0 %v4281
        %4294 = vmatmul.bf16.gmra.mxu0 %v4284
        %v4295 = vpop.f32.mrf.mxu0
        %v4296 = vadd.f32 0.0, %v4295
        %v4297 = vpop.f32.mrf.mxu0
        %v4298 = vadd.f32 0.0, %v4297
        %4299 = vdwg.mxu0
        %v4302 = vunpack.c.l.b16 %v4180
        %v4303 = vunpack.c.l.b16 %v4181
        %v4304 = vpack.c.b16 %v4303, %v4302
        %v4307 = vunpack.c.l.b16 %v3780
        %v4308 = vunpack.c.l.b16 %v3781
        %v4309 = vpack.c.b16 %v4308, %v4307
        %v4312 = vsel %vm3291, %v4304, 0
        %4314 = vmatpush.bf16.msra.mxu0 0
        %4315 = vmatpush.bf16.msra.mxu0 0
        %4316 = vmatpush.bf16.msra.mxu0 0
        %4317 = vmatpush.bf16.msra.mxu0 0
        %4318 = vmatpush.bf16.msra.mxu0 0
        %4319 = vmatpush.bf16.msra.mxu0 0
        %4320 = vmatpush.bf16.msra.mxu0 0
        %4321 = vmatpush.bf16.msra.mxu0 %v4309
        %4322 = vmatmul.bf16.gmra.mxu0 %v4312
        %v4323 = vpop.f32.mrf.mxu0
        %v4324 = vadd.f32 0.0, %v4323
        %v4325 = vpop.f32.mrf.mxu0
        %v4326 = vadd.f32 0.0, %v4325
        %4327 = vdwg.mxu0
        %v4330 = vunpack.c.l.b16 %v4182
        %v4331 = vunpack.c.l.b16 %v4183
        %v4332 = vpack.c.b16 %v4331, %v4330
        %v4335 = vunpack.c.l.b16 %v3782
        %v4336 = vunpack.c.l.b16 %v3783
        %v4337 = vpack.c.b16 %v4336, %v4335
        %v4340 = vsel %vm3291, %v4332, 0
        %4342 = vmatpush.bf16.msra.mxu0 0
        %4343 = vmatpush.bf16.msra.mxu0 0
        %4344 = vmatpush.bf16.msra.mxu0 0
        %4345 = vmatpush.bf16.msra.mxu0 0
        %4346 = vmatpush.bf16.msra.mxu0 0
        %4347 = vmatpush.bf16.msra.mxu0 0
        %4348 = vmatpush.bf16.msra.mxu0 0
        %4349 = vmatpush.bf16.msra.mxu0 %v4337
        %4350 = vmatmul.bf16.gmra.mxu0 %v4340
        %v4351 = vpop.f32.mrf.mxu0
        %v4352 = vadd.f32 0.0, %v4351
        %v4353 = vpop.f32.mrf.mxu0
        %v4354 = vadd.f32 0.0, %v4353
        %4355 = vdwg.mxu0
        %v4358 = vunpack.c.l.b16 %v4184
        %v4359 = vunpack.c.l.b16 %v4185
        %v4360 = vpack.c.b16 %v4359, %v4358
        %v4363 = vunpack.c.l.b16 %v3784
        %v4364 = vunpack.c.l.b16 %v3785
        %v4365 = vpack.c.b16 %v4364, %v4363
        %v4368 = vsel %vm3291, %v4360, 0
        %4370 = vmatpush.bf16.msra.mxu0 0
        %4371 = vmatpush.bf16.msra.mxu0 0
        %4372 = vmatpush.bf16.msra.mxu0 0
        %4373 = vmatpush.bf16.msra.mxu0 0
        %4374 = vmatpush.bf16.msra.mxu0 0
        %4375 = vmatpush.bf16.msra.mxu0 0
        %4376 = vmatpush.bf16.msra.mxu0 0
        %4377 = vmatpush.bf16.msra.mxu0 %v4365
        %4378 = vmatmul.bf16.gmra.mxu0 %v4368
        %v4379 = vpop.f32.mrf.mxu0
        %v4380 = vadd.f32 0.0, %v4379
        %v4381 = vpop.f32.mrf.mxu0
        %v4382 = vadd.f32 0.0, %v4381
        %4383 = vdwg.mxu0
        %v4386 = vunpack.c.l.b16 %v4186
        %v4387 = vunpack.c.l.b16 %v4187
        %v4388 = vpack.c.b16 %v4387, %v4386
        %v4391 = vunpack.c.l.b16 %v3786
        %v4392 = vunpack.c.l.b16 %v3787
        %v4393 = vpack.c.b16 %v4392, %v4391
        %v4396 = vsel %vm3291, %v4388, 0
        %4398 = vmatpush.bf16.msra.mxu0 0
        %4399 = vmatpush.bf16.msra.mxu0 0
        %4400 = vmatpush.bf16.msra.mxu0 0
        %4401 = vmatpush.bf16.msra.mxu0 0
        %4402 = vmatpush.bf16.msra.mxu0 0
        %4403 = vmatpush.bf16.msra.mxu0 0
        %4404 = vmatpush.bf16.msra.mxu0 0
        %4405 = vmatpush.bf16.msra.mxu0 %v4393
        %4406 = vmatmul.bf16.gmra.mxu0 %v4396
        %v4407 = vpop.f32.mrf.mxu0
        %v4408 = vadd.f32 0.0, %v4407
        %v4409 = vpop.f32.mrf.mxu0
        %v4410 = vadd.f32 0.0, %v4409
        %4411 = vdwg.mxu0
        %v4412 = vpack.c.bf16 %v4212, %v4212
        %v4413 = vpack.c.bf16 %v4214, %v4214
        %v4414 = vpack.c.bf16 %v4240, %v4240
        %v4415 = vpack.c.bf16 %v4242, %v4242
        %v4416 = vpack.c.bf16 %v4268, %v4268
        %v4417 = vpack.c.bf16 %v4270, %v4270
        %v4418 = vpack.c.bf16 %v4296, %v4296
        %v4419 = vpack.c.bf16 %v4298, %v4298
        %v4420 = vpack.c.bf16 %v4324, %v4324
        %v4421 = vpack.c.bf16 %v4326, %v4326
        %v4422 = vpack.c.bf16 %v4352, %v4352
        %v4423 = vpack.c.bf16 %v4354, %v4354
        %v4424 = vpack.c.bf16 %v4380, %v4380
        %v4425 = vpack.c.bf16 %v4382, %v4382
        %v4426 = vpack.c.bf16 %v4408, %v4408
        %v4427 = vpack.c.bf16 %v4410, %v4410
        %4428 = vst [vmem:[#allocation2 + $0xc] sm:$0xf] %v4412
        %4429 = vst [vmem:[#allocation2 + $0x1c] sm:$0xf] %v4413
        %4430 = vst [vmem:[#allocation2 + $0x2c] sm:$0xf] %v4414
        %4431 = vst [vmem:[#allocation2 + $0x3c] sm:$0xf] %v4415
        %4432 = vst [vmem:[#allocation2 + $0x4c] sm:$0xf] %v4416
        %4433 = vst [vmem:[#allocation2 + $0x5c] sm:$0xf] %v4417
        %4434 = vst [vmem:[#allocation2 + $0x6c] sm:$0xf] %v4418
        %4435 = vst [vmem:[#allocation2 + $0x7c] sm:$0xf] %v4419
        %4436 = vst [vmem:[#allocation2 + $0x8c] sm:$0xf] %v4420
        %4437 = vst [vmem:[#allocation2 + $0x9c] sm:$0xf] %v4421
        %4438 = vst [vmem:[#allocation2 + $0xac] sm:$0xf] %v4422
        %4439 = vst [vmem:[#allocation2 + $0xbc] sm:$0xf] %v4423
        %4440 = vst [vmem:[#allocation2 + $0xcc] sm:$0xf] %v4424
        %4441 = vst [vmem:[#allocation2 + $0xdc] sm:$0xf] %v4425
        %4442 = vst [vmem:[#allocation2 + $0xec] sm:$0xf] %v4426
        %4443 = vst [vmem:[#allocation2 + $0xfc] sm:$0xf] %v4427
        %v4444 = vld [vmem:[#allocation2] sm:$0xff]
        %v4445 = vld [vmem:[#allocation2 + $0x8] sm:$0xff]
        %v4446 = vld [vmem:[#allocation2 + $0x10] sm:$0xff]
        %v4447 = vld [vmem:[#allocation2 + $0x18] sm:$0xff]
        %v4448 = vld [vmem:[#allocation2 + $0x20] sm:$0xff]
        %v4449 = vld [vmem:[#allocation2 + $0x28] sm:$0xff]
        %v4450 = vld [vmem:[#allocation2 + $0x30] sm:$0xff]
        %v4451 = vld [vmem:[#allocation2 + $0x38] sm:$0xff]
        %v4452 = vld [vmem:[#allocation2 + $0x40] sm:$0xff]
        %v4453 = vld [vmem:[#allocation2 + $0x48] sm:$0xff]
        %v4454 = vld [vmem:[#allocation2 + $0x50] sm:$0xff]
        %v4455 = vld [vmem:[#allocation2 + $0x58] sm:$0xff]
        %v4456 = vld [vmem:[#allocation2 + $0x60] sm:$0xff]
        %v4457 = vld [vmem:[#allocation2 + $0x68] sm:$0xff]
        %v4458 = vld [vmem:[#allocation2 + $0x70] sm:$0xff]
        %v4459 = vld [vmem:[#allocation2 + $0x78] sm:$0xff]
        %v4460 = vld [vmem:[#allocation2 + $0x80] sm:$0xff]
        %v4461 = vld [vmem:[#allocation2 + $0x88] sm:$0xff]
        %v4462 = vld [vmem:[#allocation2 + $0x90] sm:$0xff]
        %v4463 = vld [vmem:[#allocation2 + $0x98] sm:$0xff]
        %v4464 = vld [vmem:[#allocation2 + $0xa0] sm:$0xff]
        %v4465 = vld [vmem:[#allocation2 + $0xa8] sm:$0xff]
        %v4466 = vld [vmem:[#allocation2 + $0xb0] sm:$0xff]
        %v4467 = vld [vmem:[#allocation2 + $0xb8] sm:$0xff]
        %v4468 = vld [vmem:[#allocation2 + $0xc0] sm:$0xff]
        %v4469 = vld [vmem:[#allocation2 + $0xc8] sm:$0xff]
        %v4470 = vld [vmem:[#allocation2 + $0xd0] sm:$0xff]
        %v4471 = vld [vmem:[#allocation2 + $0xd8] sm:$0xff]
        %v4472 = vld [vmem:[#allocation2 + $0xe0] sm:$0xff]
        %v4473 = vld [vmem:[#allocation2 + $0xe8] sm:$0xff]
        %v4474 = vld [vmem:[#allocation2 + $0xf0] sm:$0xff]
        %v4475 = vld [vmem:[#allocation2 + $0xf8] sm:$0xff]
        %v4476 = vld [vmem:[#allocation9] sm:$0xff]
        %v4477 = vld [vmem:[#allocation9 + $0x8] sm:$0xff]
        %v4478 = vld [vmem:[#allocation9 + $0x10] sm:$0xff]
        %v4479 = vld [vmem:[#allocation9 + $0x18] sm:$0xff]
        %v4480 = vld [vmem:[#allocation9 + $0x20] sm:$0xff]
        %v4481 = vld [vmem:[#allocation9 + $0x28] sm:$0xff]
        %v4482 = vld [vmem:[#allocation9 + $0x30] sm:$0xff]
        %v4483 = vld [vmem:[#allocation9 + $0x38] sm:$0xff]
        %v4484 = vld [vmem:[#allocation9 + $0x40] sm:$0xff]
        %v4485 = vld [vmem:[#allocation9 + $0x48] sm:$0xff]
        %v4486 = vld [vmem:[#allocation9 + $0x50] sm:$0xff]
        %v4487 = vld [vmem:[#allocation9 + $0x58] sm:$0xff]
        %v4488 = vld [vmem:[#allocation9 + $0x60] sm:$0xff]
        %v4489 = vld [vmem:[#allocation9 + $0x68] sm:$0xff]
        %v4490 = vld [vmem:[#allocation9 + $0x70] sm:$0xff]
        %v4491 = vld [vmem:[#allocation9 + $0x78] sm:$0xff]
        %v4492 = vld [vmem:[#allocation9 + $0x80] sm:$0xff]
        %v4493 = vld [vmem:[#allocation9 + $0x88] sm:$0xff]
        %v4494 = vld [vmem:[#allocation9 + $0x90] sm:$0xff]
        %v4495 = vld [vmem:[#allocation9 + $0x98] sm:$0xff]
        %v4496 = vld [vmem:[#allocation9 + $0xa0] sm:$0xff]
        %v4497 = vld [vmem:[#allocation9 + $0xa8] sm:$0xff]
        %v4498 = vld [vmem:[#allocation9 + $0xb0] sm:$0xff]
        %v4499 = vld [vmem:[#allocation9 + $0xb8] sm:$0xff]
        %v4500 = vld [vmem:[#allocation9 + $0xc0] sm:$0xff]
        %v4501 = vld [vmem:[#allocation9 + $0xc8] sm:$0xff]
        %v4502 = vld [vmem:[#allocation9 + $0xd0] sm:$0xff]
        %v4503 = vld [vmem:[#allocation9 + $0xd8] sm:$0xff]
        %v4504 = vld [vmem:[#allocation9 + $0xe0] sm:$0xff]
        %v4505 = vld [vmem:[#allocation9 + $0xe8] sm:$0xff]
        %v4506 = vld [vmem:[#allocation9 + $0xf0] sm:$0xff]
        %v4507 = vld [vmem:[#allocation9 + $0xf8] sm:$0xff]
        %v4508 = vld [vmem:[#allocation9 + $0x100] sm:$0xff]
        %v4509 = vld [vmem:[#allocation9 + $0x108] sm:$0xff]
        %v4510 = vld [vmem:[#allocation9 + $0x110] sm:$0xff]
        %v4511 = vld [vmem:[#allocation9 + $0x118] sm:$0xff]
        %v4512 = vld [vmem:[#allocation9 + $0x120] sm:$0xff]
        %v4513 = vld [vmem:[#allocation9 + $0x128] sm:$0xff]
        %v4514 = vld [vmem:[#allocation9 + $0x130] sm:$0xff]
        %v4515 = vld [vmem:[#allocation9 + $0x138] sm:$0xff]
        %v4516 = vld [vmem:[#allocation9 + $0x140] sm:$0xff]
        %v4517 = vld [vmem:[#allocation9 + $0x148] sm:$0xff]
        %v4518 = vld [vmem:[#allocation9 + $0x150] sm:$0xff]
        %v4519 = vld [vmem:[#allocation9 + $0x158] sm:$0xff]
        %v4520 = vld [vmem:[#allocation9 + $0x160] sm:$0xff]
        %v4521 = vld [vmem:[#allocation9 + $0x168] sm:$0xff]
        %v4522 = vld [vmem:[#allocation9 + $0x170] sm:$0xff]
        %v4523 = vld [vmem:[#allocation9 + $0x178] sm:$0xff]
        %v4524 = vld [vmem:[#allocation9 + $0x180] sm:$0xff]
        %v4525 = vld [vmem:[#allocation9 + $0x188] sm:$0xff]
        %v4526 = vld [vmem:[#allocation9 + $0x190] sm:$0xff]
        %v4527 = vld [vmem:[#allocation9 + $0x198] sm:$0xff]
        %v4528 = vld [vmem:[#allocation9 + $0x1a0] sm:$0xff]
        %v4529 = vld [vmem:[#allocation9 + $0x1a8] sm:$0xff]
        %v4530 = vld [vmem:[#allocation9 + $0x1b0] sm:$0xff]
        %v4531 = vld [vmem:[#allocation9 + $0x1b8] sm:$0xff]
        %v4532 = vld [vmem:[#allocation9 + $0x1c0] sm:$0xff]
        %v4533 = vld [vmem:[#allocation9 + $0x1c8] sm:$0xff]
        %v4534 = vld [vmem:[#allocation9 + $0x1d0] sm:$0xff]
        %v4535 = vld [vmem:[#allocation9 + $0x1d8] sm:$0xff]
        %v4536 = vld [vmem:[#allocation9 + $0x1e0] sm:$0xff]
        %v4537 = vld [vmem:[#allocation9 + $0x1e8] sm:$0xff]
        %v4538 = vld [vmem:[#allocation9 + $0x1f0] sm:$0xff]
        %v4539 = vld [vmem:[#allocation9 + $0x1f8] sm:$0xff]
        %v4572 = vunpack.c.l.b16 %v4444
        %v4573 = vunpack.c.h.b16 %v4444
        %v4574 = vunpack.c.l.b16 %v4445
        %v4575 = vunpack.c.h.b16 %v4445
        %v4576 = vunpack.c.l.b16 %v4446
        %v4577 = vunpack.c.h.b16 %v4446
        %v4578 = vunpack.c.l.b16 %v4447
        %v4579 = vunpack.c.h.b16 %v4447
        %v4580 = vunpack.c.l.b16 %v4448
        %v4581 = vunpack.c.h.b16 %v4448
        %v4582 = vunpack.c.l.b16 %v4449
        %v4583 = vunpack.c.h.b16 %v4449
        %v4584 = vunpack.c.l.b16 %v4450
        %v4585 = vunpack.c.h.b16 %v4450
        %v4586 = vunpack.c.l.b16 %v4451
        %v4587 = vunpack.c.h.b16 %v4451
        %v4588 = vunpack.c.l.b16 %v4452
        %v4589 = vunpack.c.h.b16 %v4452
        %v4590 = vunpack.c.l.b16 %v4453
        %v4591 = vunpack.c.h.b16 %v4453
        %v4592 = vunpack.c.l.b16 %v4454
        %v4593 = vunpack.c.h.b16 %v4454
        %v4594 = vunpack.c.l.b16 %v4455
        %v4595 = vunpack.c.h.b16 %v4455
        %v4596 = vunpack.c.l.b16 %v4456
        %v4597 = vunpack.c.h.b16 %v4456
        %v4598 = vunpack.c.l.b16 %v4457
        %v4599 = vunpack.c.h.b16 %v4457
        %v4600 = vunpack.c.l.b16 %v4458
        %v4601 = vunpack.c.h.b16 %v4458
        %v4602 = vunpack.c.l.b16 %v4459
        %v4603 = vunpack.c.h.b16 %v4459
        %v4604 = vunpack.c.l.b16 %v4460
        %v4605 = vunpack.c.h.b16 %v4460
        %v4606 = vunpack.c.l.b16 %v4461
        %v4607 = vunpack.c.h.b16 %v4461
        %v4608 = vunpack.c.l.b16 %v4462
        %v4609 = vunpack.c.h.b16 %v4462
        %v4610 = vunpack.c.l.b16 %v4463
        %v4611 = vunpack.c.h.b16 %v4463
        %v4612 = vunpack.c.l.b16 %v4464
        %v4613 = vunpack.c.h.b16 %v4464
        %v4614 = vunpack.c.l.b16 %v4465
        %v4615 = vunpack.c.h.b16 %v4465
        %v4616 = vunpack.c.l.b16 %v4466
        %v4617 = vunpack.c.h.b16 %v4466
        %v4618 = vunpack.c.l.b16 %v4467
        %v4619 = vunpack.c.h.b16 %v4467
        %v4620 = vunpack.c.l.b16 %v4468
        %v4621 = vunpack.c.h.b16 %v4468
        %v4622 = vunpack.c.l.b16 %v4469
        %v4623 = vunpack.c.h.b16 %v4469
        %v4624 = vunpack.c.l.b16 %v4470
        %v4625 = vunpack.c.h.b16 %v4470
        %v4626 = vunpack.c.l.b16 %v4471
        %v4627 = vunpack.c.h.b16 %v4471
        %v4628 = vunpack.c.l.b16 %v4472
        %v4629 = vunpack.c.h.b16 %v4472
        %v4630 = vunpack.c.l.b16 %v4473
        %v4631 = vunpack.c.h.b16 %v4473
        %v4632 = vunpack.c.l.b16 %v4474
        %v4633 = vunpack.c.h.b16 %v4474
        %v4634 = vunpack.c.l.b16 %v4475
        %v4635 = vunpack.c.h.b16 %v4475
        %v4636 = vpack.c.b16 %v4576, %v4572
        %v4637 = vpack.c.b16 %v4577, %v4573
        %v4638 = vpack.c.b16 %v4578, %v4574
        %v4639 = vpack.c.b16 %v4579, %v4575
        %v4640 = vpack.c.b16 %v4584, %v4580
        %v4641 = vpack.c.b16 %v4585, %v4581
        %v4642 = vpack.c.b16 %v4586, %v4582
        %v4643 = vpack.c.b16 %v4587, %v4583
        %v4644 = vpack.c.b16 %v4592, %v4588
        %v4645 = vpack.c.b16 %v4593, %v4589
        %v4646 = vpack.c.b16 %v4594, %v4590
        %v4647 = vpack.c.b16 %v4595, %v4591
        %v4648 = vpack.c.b16 %v4600, %v4596
        %v4649 = vpack.c.b16 %v4601, %v4597
        %v4650 = vpack.c.b16 %v4602, %v4598
        %v4651 = vpack.c.b16 %v4603, %v4599
        %v4652 = vpack.c.b16 %v4608, %v4604
        %v4653 = vpack.c.b16 %v4609, %v4605
        %v4654 = vpack.c.b16 %v4610, %v4606
        %v4655 = vpack.c.b16 %v4611, %v4607
        %v4656 = vpack.c.b16 %v4616, %v4612
        %v4657 = vpack.c.b16 %v4617, %v4613
        %v4658 = vpack.c.b16 %v4618, %v4614
        %v4659 = vpack.c.b16 %v4619, %v4615
        %v4660 = vpack.c.b16 %v4624, %v4620
        %v4661 = vpack.c.b16 %v4625, %v4621
        %v4662 = vpack.c.b16 %v4626, %v4622
        %v4663 = vpack.c.b16 %v4627, %v4623
        %v4664 = vpack.c.b16 %v4632, %v4628
        %v4665 = vpack.c.b16 %v4633, %v4629
        %v4666 = vpack.c.b16 %v4634, %v4630
        %v4667 = vpack.c.b16 %v4635, %v4631
        %v4764 = vunpack.c.l.b16 %v4476
        %v4765 = vunpack.c.h.b16 %v4476
        %v4766 = vunpack.c.l.b16 %v4477
        %v4767 = vunpack.c.h.b16 %v4477
        %v4768 = vunpack.c.l.b16 %v4478
        %v4769 = vunpack.c.h.b16 %v4478
        %v4770 = vunpack.c.l.b16 %v4479
        %v4771 = vunpack.c.h.b16 %v4479
        %v4772 = vunpack.c.l.b16 %v4480
        %v4773 = vunpack.c.h.b16 %v4480
        %v4774 = vunpack.c.l.b16 %v4481
        %v4775 = vunpack.c.h.b16 %v4481
        %v4776 = vunpack.c.l.b16 %v4482
        %v4777 = vunpack.c.h.b16 %v4482
        %v4778 = vunpack.c.l.b16 %v4483
        %v4779 = vunpack.c.h.b16 %v4483
        %v4780 = vunpack.c.l.b16 %v4484
        %v4781 = vunpack.c.h.b16 %v4484
        %v4782 = vunpack.c.l.b16 %v4485
        %v4783 = vunpack.c.h.b16 %v4485
        %v4784 = vunpack.c.l.b16 %v4486
        %v4785 = vunpack.c.h.b16 %v4486
        %v4786 = vunpack.c.l.b16 %v4487
        %v4787 = vunpack.c.h.b16 %v4487
        %v4788 = vunpack.c.l.b16 %v4488
        %v4789 = vunpack.c.h.b16 %v4488
        %v4790 = vunpack.c.l.b16 %v4489
        %v4791 = vunpack.c.h.b16 %v4489
        %v4792 = vunpack.c.l.b16 %v4490
        %v4793 = vunpack.c.h.b16 %v4490
        %v4794 = vunpack.c.l.b16 %v4491
        %v4795 = vunpack.c.h.b16 %v4491
        %v4796 = vunpack.c.l.b16 %v4492
        %v4797 = vunpack.c.h.b16 %v4492
        %v4798 = vunpack.c.l.b16 %v4493
        %v4799 = vunpack.c.h.b16 %v4493
        %v4800 = vunpack.c.l.b16 %v4494
        %v4801 = vunpack.c.h.b16 %v4494
        %v4802 = vunpack.c.l.b16 %v4495
        %v4803 = vunpack.c.h.b16 %v4495
        %v4804 = vunpack.c.l.b16 %v4496
        %v4805 = vunpack.c.h.b16 %v4496
        %v4806 = vunpack.c.l.b16 %v4497
        %v4807 = vunpack.c.h.b16 %v4497
        %v4808 = vunpack.c.l.b16 %v4498
        %v4809 = vunpack.c.h.b16 %v4498
        %v4810 = vunpack.c.l.b16 %v4499
        %v4811 = vunpack.c.h.b16 %v4499
        %v4812 = vunpack.c.l.b16 %v4500
        %v4813 = vunpack.c.h.b16 %v4500
        %v4814 = vunpack.c.l.b16 %v4501
        %v4815 = vunpack.c.h.b16 %v4501
        %v4816 = vunpack.c.l.b16 %v4502
        %v4817 = vunpack.c.h.b16 %v4502
        %v4818 = vunpack.c.l.b16 %v4503
        %v4819 = vunpack.c.h.b16 %v4503
        %v4820 = vunpack.c.l.b16 %v4504
        %v4821 = vunpack.c.h.b16 %v4504
        %v4822 = vunpack.c.l.b16 %v4505
        %v4823 = vunpack.c.h.b16 %v4505
        %v4824 = vunpack.c.l.b16 %v4506
        %v4825 = vunpack.c.h.b16 %v4506
        %v4826 = vunpack.c.l.b16 %v4507
        %v4827 = vunpack.c.h.b16 %v4507
        %v4828 = vunpack.c.l.b16 %v4508
        %v4829 = vunpack.c.h.b16 %v4508
        %v4830 = vunpack.c.l.b16 %v4509
        %v4831 = vunpack.c.h.b16 %v4509
        %v4832 = vunpack.c.l.b16 %v4510
        %v4833 = vunpack.c.h.b16 %v4510
        %v4834 = vunpack.c.l.b16 %v4511
        %v4835 = vunpack.c.h.b16 %v4511
        %v4836 = vunpack.c.l.b16 %v4512
        %v4837 = vunpack.c.h.b16 %v4512
        %v4838 = vunpack.c.l.b16 %v4513
        %v4839 = vunpack.c.h.b16 %v4513
        %v4840 = vunpack.c.l.b16 %v4514
        %v4841 = vunpack.c.h.b16 %v4514
        %v4842 = vunpack.c.l.b16 %v4515
        %v4843 = vunpack.c.h.b16 %v4515
        %v4844 = vunpack.c.l.b16 %v4516
        %v4845 = vunpack.c.h.b16 %v4516
        %v4846 = vunpack.c.l.b16 %v4517
        %v4847 = vunpack.c.h.b16 %v4517
        %v4848 = vunpack.c.l.b16 %v4518
        %v4849 = vunpack.c.h.b16 %v4518
        %v4850 = vunpack.c.l.b16 %v4519
        %v4851 = vunpack.c.h.b16 %v4519
        %v4852 = vunpack.c.l.b16 %v4520
        %v4853 = vunpack.c.h.b16 %v4520
        %v4854 = vunpack.c.l.b16 %v4521
        %v4855 = vunpack.c.h.b16 %v4521
        %v4856 = vunpack.c.l.b16 %v4522
        %v4857 = vunpack.c.h.b16 %v4522
        %v4858 = vunpack.c.l.b16 %v4523
        %v4859 = vunpack.c.h.b16 %v4523
        %v4860 = vunpack.c.l.b16 %v4524
        %v4861 = vunpack.c.h.b16 %v4524
        %v4862 = vunpack.c.l.b16 %v4525
        %v4863 = vunpack.c.h.b16 %v4525
        %v4864 = vunpack.c.l.b16 %v4526
        %v4865 = vunpack.c.h.b16 %v4526
        %v4866 = vunpack.c.l.b16 %v4527
        %v4867 = vunpack.c.h.b16 %v4527
        %v4868 = vunpack.c.l.b16 %v4528
        %v4869 = vunpack.c.h.b16 %v4528
        %v4870 = vunpack.c.l.b16 %v4529
        %v4871 = vunpack.c.h.b16 %v4529
        %v4872 = vunpack.c.l.b16 %v4530
        %v4873 = vunpack.c.h.b16 %v4530
        %v4874 = vunpack.c.l.b16 %v4531
        %v4875 = vunpack.c.h.b16 %v4531
        %v4876 = vunpack.c.l.b16 %v4532
        %v4877 = vunpack.c.h.b16 %v4532
        %v4878 = vunpack.c.l.b16 %v4533
        %v4879 = vunpack.c.h.b16 %v4533
        %v4880 = vunpack.c.l.b16 %v4534
        %v4881 = vunpack.c.h.b16 %v4534
        %v4882 = vunpack.c.l.b16 %v4535
        %v4883 = vunpack.c.h.b16 %v4535
        %v4884 = vunpack.c.l.b16 %v4536
        %v4885 = vunpack.c.h.b16 %v4536
        %v4886 = vunpack.c.l.b16 %v4537
        %v4887 = vunpack.c.h.b16 %v4537
        %v4888 = vunpack.c.l.b16 %v4538
        %v4889 = vunpack.c.h.b16 %v4538
        %v4890 = vunpack.c.l.b16 %v4539
        %v4891 = vunpack.c.h.b16 %v4539
        %v4892 = vpack.c.b16 %v4766, %v4764
        %v4893 = vpack.c.b16 %v4767, %v4765
        %v4894 = vpack.c.b16 %v4770, %v4768
        %v4895 = vpack.c.b16 %v4771, %v4769
        %v4896 = vpack.c.b16 %v4774, %v4772
        %v4897 = vpack.c.b16 %v4775, %v4773
        %v4898 = vpack.c.b16 %v4778, %v4776
        %v4899 = vpack.c.b16 %v4779, %v4777
        %v4900 = vpack.c.b16 %v4782, %v4780
        %v4901 = vpack.c.b16 %v4783, %v4781
        %v4902 = vpack.c.b16 %v4786, %v4784
        %v4903 = vpack.c.b16 %v4787, %v4785
        %v4904 = vpack.c.b16 %v4790, %v4788
        %v4905 = vpack.c.b16 %v4791, %v4789
        %v4906 = vpack.c.b16 %v4794, %v4792
        %v4907 = vpack.c.b16 %v4795, %v4793
        %v4908 = vpack.c.b16 %v4798, %v4796
        %v4909 = vpack.c.b16 %v4799, %v4797
        %v4910 = vpack.c.b16 %v4802, %v4800
        %v4911 = vpack.c.b16 %v4803, %v4801
        %v4912 = vpack.c.b16 %v4806, %v4804
        %v4913 = vpack.c.b16 %v4807, %v4805
        %v4914 = vpack.c.b16 %v4810, %v4808
        %v4915 = vpack.c.b16 %v4811, %v4809
        %v4916 = vpack.c.b16 %v4814, %v4812
        %v4917 = vpack.c.b16 %v4815, %v4813
        %v4918 = vpack.c.b16 %v4818, %v4816
        %v4919 = vpack.c.b16 %v4819, %v4817
        %v4920 = vpack.c.b16 %v4822, %v4820
        %v4921 = vpack.c.b16 %v4823, %v4821
        %v4922 = vpack.c.b16 %v4826, %v4824
        %v4923 = vpack.c.b16 %v4827, %v4825
        %v4924 = vpack.c.b16 %v4830, %v4828
        %v4925 = vpack.c.b16 %v4831, %v4829
        %v4926 = vpack.c.b16 %v4834, %v4832
        %v4927 = vpack.c.b16 %v4835, %v4833
        %v4928 = vpack.c.b16 %v4838, %v4836
        %v4929 = vpack.c.b16 %v4839, %v4837
        %v4930 = vpack.c.b16 %v4842, %v4840
        %v4931 = vpack.c.b16 %v4843, %v4841
        %v4932 = vpack.c.b16 %v4846, %v4844
        %v4933 = vpack.c.b16 %v4847, %v4845
        %v4934 = vpack.c.b16 %v4850, %v4848
        %v4935 = vpack.c.b16 %v4851, %v4849
        %v4936 = vpack.c.b16 %v4854, %v4852
        %v4937 = vpack.c.b16 %v4855, %v4853
        %v4938 = vpack.c.b16 %v4858, %v4856
        %v4939 = vpack.c.b16 %v4859, %v4857
        %v4940 = vpack.c.b16 %v4862, %v4860
        %v4941 = vpack.c.b16 %v4863, %v4861
        %v4942 = vpack.c.b16 %v4866, %v4864
        %v4943 = vpack.c.b16 %v4867, %v4865
        %v4944 = vpack.c.b16 %v4870, %v4868
        %v4945 = vpack.c.b16 %v4871, %v4869
        %v4946 = vpack.c.b16 %v4874, %v4872
        %v4947 = vpack.c.b16 %v4875, %v4873
        %v4948 = vpack.c.b16 %v4878, %v4876
        %v4949 = vpack.c.b16 %v4879, %v4877
        %v4950 = vpack.c.b16 %v4882, %v4880
        %v4951 = vpack.c.b16 %v4883, %v4881
        %v4952 = vpack.c.b16 %v4886, %v4884
        %v4953 = vpack.c.b16 %v4887, %v4885
        %v4954 = vpack.c.b16 %v4890, %v4888
        %v4955 = vpack.c.b16 %v4891, %v4889
        %5020 = vmatpush.bf16.msra.mxu0 %v4906
        %5021 = vmatpush.bf16.msra.mxu0 %v4904
        %5022 = vmatpush.bf16.msra.mxu0 %v4902
        %5023 = vmatpush.bf16.msra.mxu0 %v4900
        %5024 = vmatpush.bf16.msra.mxu0 %v4898
        %5025 = vmatpush.bf16.msra.mxu0 %v4896
        %5026 = vmatpush.bf16.msra.mxu0 %v4894
        %5027 = vmatpush.bf16.msra.mxu0 %v4892
        %5028 = vmatmul.bf16.gmra.mxu0 %v4636
        %v5029 = vpop.f32.mrf.mxu0
        %v5030 = vadd.f32 0.0, %v5029
        %v5031 = vpop.f32.mrf.mxu0
        %v5032 = vadd.f32 0.0, %v5031
        %5033 = vmatmul.bf16.gmra.mxu0 %v4640
        %v5034 = vpop.f32.mrf.mxu0
        %v5035 = vadd.f32 0.0, %v5034
        %v5036 = vpop.f32.mrf.mxu0
        %v5037 = vadd.f32 0.0, %v5036
        %5038 = vmatmul.bf16.gmra.mxu0 %v4644
        %v5039 = vpop.f32.mrf.mxu0
        %v5040 = vadd.f32 0.0, %v5039
        %v5041 = vpop.f32.mrf.mxu0
        %v5042 = vadd.f32 0.0, %v5041
        %5043 = vmatmul.bf16.gmra.mxu0 %v4648
        %v5044 = vpop.f32.mrf.mxu0
        %v5045 = vadd.f32 0.0, %v5044
        %v5046 = vpop.f32.mrf.mxu0
        %v5047 = vadd.f32 0.0, %v5046
        %5048 = vmatmul.bf16.gmra.mxu0 %v4652
        %v5049 = vpop.f32.mrf.mxu0
        %v5050 = vadd.f32 0.0, %v5049
        %v5051 = vpop.f32.mrf.mxu0
        %v5052 = vadd.f32 0.0, %v5051
        %5053 = vmatmul.bf16.gmra.mxu0 %v4656
        %v5054 = vpop.f32.mrf.mxu0
        %v5055 = vadd.f32 0.0, %v5054
        %v5056 = vpop.f32.mrf.mxu0
        %v5057 = vadd.f32 0.0, %v5056
        %5058 = vmatmul.bf16.gmra.mxu0 %v4660
        %v5059 = vpop.f32.mrf.mxu0
        %v5060 = vadd.f32 0.0, %v5059
        %v5061 = vpop.f32.mrf.mxu0
        %v5062 = vadd.f32 0.0, %v5061
        %5063 = vmatmul.bf16.gmra.mxu0 %v4664
        %v5064 = vpop.f32.mrf.mxu0
        %v5065 = vadd.f32 0.0, %v5064
        %v5066 = vpop.f32.mrf.mxu0
        %v5067 = vadd.f32 0.0, %v5066
        %5068 = vdwg.mxu0
        %5069 = vmatpush.bf16.msra.mxu0 %v4922
        %5070 = vmatpush.bf16.msra.mxu0 %v4920
        %5071 = vmatpush.bf16.msra.mxu0 %v4918
        %5072 = vmatpush.bf16.msra.mxu0 %v4916
        %5073 = vmatpush.bf16.msra.mxu0 %v4914
        %5074 = vmatpush.bf16.msra.mxu0 %v4912
        %5075 = vmatpush.bf16.msra.mxu0 %v4910
        %5076 = vmatpush.bf16.msra.mxu0 %v4908
        %5077 = vmatmul.bf16.gmra.mxu0 %v4637
        %v5078 = vpop.f32.mrf.mxu0
        %v5079 = vadd.f32 %v5030, %v5078
        %v5080 = vpop.f32.mrf.mxu0
        %v5081 = vadd.f32 %v5032, %v5080
        %5082 = vmatmul.bf16.gmra.mxu0 %v4641
        %v5083 = vpop.f32.mrf.mxu0
        %v5084 = vadd.f32 %v5035, %v5083
        %v5085 = vpop.f32.mrf.mxu0
        %v5086 = vadd.f32 %v5037, %v5085
        %5087 = vmatmul.bf16.gmra.mxu0 %v4645
        %v5088 = vpop.f32.mrf.mxu0
        %v5089 = vadd.f32 %v5040, %v5088
        %v5090 = vpop.f32.mrf.mxu0
        %v5091 = vadd.f32 %v5042, %v5090
        %5092 = vmatmul.bf16.gmra.mxu0 %v4649
        %v5093 = vpop.f32.mrf.mxu0
        %v5094 = vadd.f32 %v5045, %v5093
        %v5095 = vpop.f32.mrf.mxu0
        %v5096 = vadd.f32 %v5047, %v5095
        %5097 = vmatmul.bf16.gmra.mxu0 %v4653
        %v5098 = vpop.f32.mrf.mxu0
        %v5099 = vadd.f32 %v5050, %v5098
        %v5100 = vpop.f32.mrf.mxu0
        %v5101 = vadd.f32 %v5052, %v5100
        %5102 = vmatmul.bf16.gmra.mxu0 %v4657
        %v5103 = vpop.f32.mrf.mxu0
        %v5104 = vadd.f32 %v5055, %v5103
        %v5105 = vpop.f32.mrf.mxu0
        %v5106 = vadd.f32 %v5057, %v5105
        %5107 = vmatmul.bf16.gmra.mxu0 %v4661
        %v5108 = vpop.f32.mrf.mxu0
        %v5109 = vadd.f32 %v5060, %v5108
        %v5110 = vpop.f32.mrf.mxu0
        %v5111 = vadd.f32 %v5062, %v5110
        %5112 = vmatmul.bf16.gmra.mxu0 %v4665
        %v5113 = vpop.f32.mrf.mxu0
        %v5114 = vadd.f32 %v5065, %v5113
        %v5115 = vpop.f32.mrf.mxu0
        %v5116 = vadd.f32 %v5067, %v5115
        %5117 = vdwg.mxu0
        %5118 = vmatpush.bf16.msra.mxu0 %v4938
        %5119 = vmatpush.bf16.msra.mxu0 %v4936
        %5120 = vmatpush.bf16.msra.mxu0 %v4934
        %5121 = vmatpush.bf16.msra.mxu0 %v4932
        %5122 = vmatpush.bf16.msra.mxu0 %v4930
        %5123 = vmatpush.bf16.msra.mxu0 %v4928
        %5124 = vmatpush.bf16.msra.mxu0 %v4926
        %5125 = vmatpush.bf16.msra.mxu0 %v4924
        %5126 = vmatmul.bf16.gmra.mxu0 %v4638
        %v5127 = vpop.f32.mrf.mxu0
        %v5128 = vadd.f32 %v5079, %v5127
        %v5129 = vpop.f32.mrf.mxu0
        %v5130 = vadd.f32 %v5081, %v5129
        %5131 = vmatmul.bf16.gmra.mxu0 %v4642
        %v5132 = vpop.f32.mrf.mxu0
        %v5133 = vadd.f32 %v5084, %v5132
        %v5134 = vpop.f32.mrf.mxu0
        %v5135 = vadd.f32 %v5086, %v5134
        %5136 = vmatmul.bf16.gmra.mxu0 %v4646
        %v5137 = vpop.f32.mrf.mxu0
        %v5138 = vadd.f32 %v5089, %v5137
        %v5139 = vpop.f32.mrf.mxu0
        %v5140 = vadd.f32 %v5091, %v5139
        %5141 = vmatmul.bf16.gmra.mxu0 %v4650
        %v5142 = vpop.f32.mrf.mxu0
        %v5143 = vadd.f32 %v5094, %v5142
        %v5144 = vpop.f32.mrf.mxu0
        %v5145 = vadd.f32 %v5096, %v5144
        %5146 = vmatmul.bf16.gmra.mxu0 %v4654
        %v5147 = vpop.f32.mrf.mxu0
        %v5148 = vadd.f32 %v5099, %v5147
        %v5149 = vpop.f32.mrf.mxu0
        %v5150 = vadd.f32 %v5101, %v5149
        %5151 = vmatmul.bf16.gmra.mxu0 %v4658
        %v5152 = vpop.f32.mrf.mxu0
        %v5153 = vadd.f32 %v5104, %v5152
        %v5154 = vpop.f32.mrf.mxu0
        %v5155 = vadd.f32 %v5106, %v5154
        %5156 = vmatmul.bf16.gmra.mxu0 %v4662
        %v5157 = vpop.f32.mrf.mxu0
        %v5158 = vadd.f32 %v5109, %v5157
        %v5159 = vpop.f32.mrf.mxu0
        %v5160 = vadd.f32 %v5111, %v5159
        %5161 = vmatmul.bf16.gmra.mxu0 %v4666
        %v5162 = vpop.f32.mrf.mxu0
        %v5163 = vadd.f32 %v5114, %v5162
        %v5164 = vpop.f32.mrf.mxu0
        %v5165 = vadd.f32 %v5116, %v5164
        %5166 = vdwg.mxu0
        %5167 = vmatpush.bf16.msra.mxu0 %v4954
        %5168 = vmatpush.bf16.msra.mxu0 %v4952
        %5169 = vmatpush.bf16.msra.mxu0 %v4950
        %5170 = vmatpush.bf16.msra.mxu0 %v4948
        %5171 = vmatpush.bf16.msra.mxu0 %v4946
        %5172 = vmatpush.bf16.msra.mxu0 %v4944
        %5173 = vmatpush.bf16.msra.mxu0 %v4942
        %5174 = vmatpush.bf16.msra.mxu0 %v4940
        %5175 = vmatmul.bf16.gmra.mxu0 %v4639
        %v5176 = vpop.f32.mrf.mxu0
        %v5177 = vadd.f32 %v5128, %v5176
        %v5178 = vpop.f32.mrf.mxu0
        %v5179 = vadd.f32 %v5130, %v5178
        %5180 = vmatmul.bf16.gmra.mxu0 %v4643
        %v5181 = vpop.f32.mrf.mxu0
        %v5182 = vadd.f32 %v5133, %v5181
        %v5183 = vpop.f32.mrf.mxu0
        %v5184 = vadd.f32 %v5135, %v5183
        %5185 = vmatmul.bf16.gmra.mxu0 %v4647
        %v5186 = vpop.f32.mrf.mxu0
        %v5187 = vadd.f32 %v5138, %v5186
        %v5188 = vpop.f32.mrf.mxu0
        %v5189 = vadd.f32 %v5140, %v5188
        %5190 = vmatmul.bf16.gmra.mxu0 %v4651
        %v5191 = vpop.f32.mrf.mxu0
        %v5192 = vadd.f32 %v5143, %v5191
        %v5193 = vpop.f32.mrf.mxu0
        %v5194 = vadd.f32 %v5145, %v5193
        %5195 = vmatmul.bf16.gmra.mxu0 %v4655
        %v5196 = vpop.f32.mrf.mxu0
        %v5197 = vadd.f32 %v5148, %v5196
        %v5198 = vpop.f32.mrf.mxu0
        %v5199 = vadd.f32 %v5150, %v5198
        %5200 = vmatmul.bf16.gmra.mxu0 %v4659
        %v5201 = vpop.f32.mrf.mxu0
        %v5202 = vadd.f32 %v5153, %v5201
        %v5203 = vpop.f32.mrf.mxu0
        %v5204 = vadd.f32 %v5155, %v5203
        %5205 = vmatmul.bf16.gmra.mxu0 %v4663
        %v5206 = vpop.f32.mrf.mxu0
        %v5207 = vadd.f32 %v5158, %v5206
        %v5208 = vpop.f32.mrf.mxu0
        %v5209 = vadd.f32 %v5160, %v5208
        %5210 = vmatmul.bf16.gmra.mxu0 %v4667
        %v5211 = vpop.f32.mrf.mxu0
        %v5212 = vadd.f32 %v5163, %v5211
        %v5213 = vpop.f32.mrf.mxu0
        %v5214 = vadd.f32 %v5165, %v5213
        %5215 = vdwg.mxu0
        %5216 = vmatpush.bf16.msra.mxu0 %v4907
        %5217 = vmatpush.bf16.msra.mxu0 %v4905
        %5218 = vmatpush.bf16.msra.mxu0 %v4903
        %5219 = vmatpush.bf16.msra.mxu0 %v4901
        %5220 = vmatpush.bf16.msra.mxu0 %v4899
        %5221 = vmatpush.bf16.msra.mxu0 %v4897
        %5222 = vmatpush.bf16.msra.mxu0 %v4895
        %5223 = vmatpush.bf16.msra.mxu0 %v4893
        %5224 = vmatmul.bf16.gmra.mxu0 %v4636
        %v5225 = vpop.f32.mrf.mxu0
        %v5226 = vadd.f32 0.0, %v5225
        %v5227 = vpop.f32.mrf.mxu0
        %v5228 = vadd.f32 0.0, %v5227
        %5229 = vmatmul.bf16.gmra.mxu0 %v4640
        %v5230 = vpop.f32.mrf.mxu0
        %v5231 = vadd.f32 0.0, %v5230
        %v5232 = vpop.f32.mrf.mxu0
        %v5233 = vadd.f32 0.0, %v5232
        %5234 = vmatmul.bf16.gmra.mxu0 %v4644
        %v5235 = vpop.f32.mrf.mxu0
        %v5236 = vadd.f32 0.0, %v5235
        %v5237 = vpop.f32.mrf.mxu0
        %v5238 = vadd.f32 0.0, %v5237
        %5239 = vmatmul.bf16.gmra.mxu0 %v4648
        %v5240 = vpop.f32.mrf.mxu0
        %v5241 = vadd.f32 0.0, %v5240
        %v5242 = vpop.f32.mrf.mxu0
        %v5243 = vadd.f32 0.0, %v5242
        %5244 = vmatmul.bf16.gmra.mxu0 %v4652
        %v5245 = vpop.f32.mrf.mxu0
        %v5246 = vadd.f32 0.0, %v5245
        %v5247 = vpop.f32.mrf.mxu0
        %v5248 = vadd.f32 0.0, %v5247
        %5249 = vmatmul.bf16.gmra.mxu0 %v4656
        %v5250 = vpop.f32.mrf.mxu0
        %v5251 = vadd.f32 0.0, %v5250
        %v5252 = vpop.f32.mrf.mxu0
        %v5253 = vadd.f32 0.0, %v5252
        %5254 = vmatmul.bf16.gmra.mxu0 %v4660
        %v5255 = vpop.f32.mrf.mxu0
        %v5256 = vadd.f32 0.0, %v5255
        %v5257 = vpop.f32.mrf.mxu0
        %v5258 = vadd.f32 0.0, %v5257
        %5259 = vmatmul.bf16.gmra.mxu0 %v4664
        %v5260 = vpop.f32.mrf.mxu0
        %v5261 = vadd.f32 0.0, %v5260
        %v5262 = vpop.f32.mrf.mxu0
        %v5263 = vadd.f32 0.0, %v5262
        %5264 = vdwg.mxu0
        %5265 = vmatpush.bf16.msra.mxu0 %v4923
        %5266 = vmatpush.bf16.msra.mxu0 %v4921
        %5267 = vmatpush.bf16.msra.mxu0 %v4919
        %5268 = vmatpush.bf16.msra.mxu0 %v4917
        %5269 = vmatpush.bf16.msra.mxu0 %v4915
        %5270 = vmatpush.bf16.msra.mxu0 %v4913
        %5271 = vmatpush.bf16.msra.mxu0 %v4911
        %5272 = vmatpush.bf16.msra.mxu0 %v4909
        %5273 = vmatmul.bf16.gmra.mxu0 %v4637
        %v5274 = vpop.f32.mrf.mxu0
        %v5275 = vadd.f32 %v5226, %v5274
        %v5276 = vpop.f32.mrf.mxu0
        %v5277 = vadd.f32 %v5228, %v5276
        %5278 = vmatmul.bf16.gmra.mxu0 %v4641
        %v5279 = vpop.f32.mrf.mxu0
        %v5280 = vadd.f32 %v5231, %v5279
        %v5281 = vpop.f32.mrf.mxu0
        %v5282 = vadd.f32 %v5233, %v5281
        %5283 = vmatmul.bf16.gmra.mxu0 %v4645
        %v5284 = vpop.f32.mrf.mxu0
        %v5285 = vadd.f32 %v5236, %v5284
        %v5286 = vpop.f32.mrf.mxu0
        %v5287 = vadd.f32 %v5238, %v5286
        %5288 = vmatmul.bf16.gmra.mxu0 %v4649
        %v5289 = vpop.f32.mrf.mxu0
        %v5290 = vadd.f32 %v5241, %v5289
        %v5291 = vpop.f32.mrf.mxu0
        %v5292 = vadd.f32 %v5243, %v5291
        %5293 = vmatmul.bf16.gmra.mxu0 %v4653
        %v5294 = vpop.f32.mrf.mxu0
        %v5295 = vadd.f32 %v5246, %v5294
        %v5296 = vpop.f32.mrf.mxu0
        %v5297 = vadd.f32 %v5248, %v5296
        %5298 = vmatmul.bf16.gmra.mxu0 %v4657
        %v5299 = vpop.f32.mrf.mxu0
        %v5300 = vadd.f32 %v5251, %v5299
        %v5301 = vpop.f32.mrf.mxu0
        %v5302 = vadd.f32 %v5253, %v5301
        %5303 = vmatmul.bf16.gmra.mxu0 %v4661
        %v5304 = vpop.f32.mrf.mxu0
        %v5305 = vadd.f32 %v5256, %v5304
        %v5306 = vpop.f32.mrf.mxu0
        %v5307 = vadd.f32 %v5258, %v5306
        %5308 = vmatmul.bf16.gmra.mxu0 %v4665
        %v5309 = vpop.f32.mrf.mxu0
        %v5310 = vadd.f32 %v5261, %v5309
        %v5311 = vpop.f32.mrf.mxu0
        %v5312 = vadd.f32 %v5263, %v5311
        %5313 = vdwg.mxu0
        %5314 = vmatpush.bf16.msra.mxu0 %v4939
        %5315 = vmatpush.bf16.msra.mxu0 %v4937
        %5316 = vmatpush.bf16.msra.mxu0 %v4935
        %5317 = vmatpush.bf16.msra.mxu0 %v4933
        %5318 = vmatpush.bf16.msra.mxu0 %v4931
        %5319 = vmatpush.bf16.msra.mxu0 %v4929
        %5320 = vmatpush.bf16.msra.mxu0 %v4927
        %5321 = vmatpush.bf16.msra.mxu0 %v4925
        %5322 = vmatmul.bf16.gmra.mxu0 %v4638
        %v5323 = vpop.f32.mrf.mxu0
        %v5324 = vadd.f32 %v5275, %v5323
        %v5325 = vpop.f32.mrf.mxu0
        %v5326 = vadd.f32 %v5277, %v5325
        %5327 = vmatmul.bf16.gmra.mxu0 %v4642
        %v5328 = vpop.f32.mrf.mxu0
        %v5329 = vadd.f32 %v5280, %v5328
        %v5330 = vpop.f32.mrf.mxu0
        %v5331 = vadd.f32 %v5282, %v5330
        %5332 = vmatmul.bf16.gmra.mxu0 %v4646
        %v5333 = vpop.f32.mrf.mxu0
        %v5334 = vadd.f32 %v5285, %v5333
        %v5335 = vpop.f32.mrf.mxu0
        %v5336 = vadd.f32 %v5287, %v5335
        %5337 = vmatmul.bf16.gmra.mxu0 %v4650
        %v5338 = vpop.f32.mrf.mxu0
        %v5339 = vadd.f32 %v5290, %v5338
        %v5340 = vpop.f32.mrf.mxu0
        %v5341 = vadd.f32 %v5292, %v5340
        %5342 = vmatmul.bf16.gmra.mxu0 %v4654
        %v5343 = vpop.f32.mrf.mxu0
        %v5344 = vadd.f32 %v5295, %v5343
        %v5345 = vpop.f32.mrf.mxu0
        %v5346 = vadd.f32 %v5297, %v5345
        %5347 = vmatmul.bf16.gmra.mxu0 %v4658
        %v5348 = vpop.f32.mrf.mxu0
        %v5349 = vadd.f32 %v5300, %v5348
        %v5350 = vpop.f32.mrf.mxu0
        %v5351 = vadd.f32 %v5302, %v5350
        %5352 = vmatmul.bf16.gmra.mxu0 %v4662
        %v5353 = vpop.f32.mrf.mxu0
        %v5354 = vadd.f32 %v5305, %v5353
        %v5355 = vpop.f32.mrf.mxu0
        %v5356 = vadd.f32 %v5307, %v5355
        %5357 = vmatmul.bf16.gmra.mxu0 %v4666
        %v5358 = vpop.f32.mrf.mxu0
        %v5359 = vadd.f32 %v5310, %v5358
        %v5360 = vpop.f32.mrf.mxu0
        %v5361 = vadd.f32 %v5312, %v5360
        %5362 = vdwg.mxu0
        %5363 = vmatpush.bf16.msra.mxu0 %v4955
        %5364 = vmatpush.bf16.msra.mxu0 %v4953
        %5365 = vmatpush.bf16.msra.mxu0 %v4951
        %5366 = vmatpush.bf16.msra.mxu0 %v4949
        %5367 = vmatpush.bf16.msra.mxu0 %v4947
        %5368 = vmatpush.bf16.msra.mxu0 %v4945
        %5369 = vmatpush.bf16.msra.mxu0 %v4943
        %5370 = vmatpush.bf16.msra.mxu0 %v4941
        %5371 = vmatmul.bf16.gmra.mxu0 %v4639
        %v5372 = vpop.f32.mrf.mxu0
        %v5373 = vadd.f32 %v5324, %v5372
        %v5374 = vpop.f32.mrf.mxu0
        %v5375 = vadd.f32 %v5326, %v5374
        %5376 = vmatmul.bf16.gmra.mxu0 %v4643
        %v5377 = vpop.f32.mrf.mxu0
        %v5378 = vadd.f32 %v5329, %v5377
        %v5379 = vpop.f32.mrf.mxu0
        %v5380 = vadd.f32 %v5331, %v5379
        %5381 = vmatmul.bf16.gmra.mxu0 %v4647
        %v5382 = vpop.f32.mrf.mxu0
        %v5383 = vadd.f32 %v5334, %v5382
        %v5384 = vpop.f32.mrf.mxu0
        %v5385 = vadd.f32 %v5336, %v5384
        %5386 = vmatmul.bf16.gmra.mxu0 %v4651
        %v5387 = vpop.f32.mrf.mxu0
        %v5388 = vadd.f32 %v5339, %v5387
        %v5389 = vpop.f32.mrf.mxu0
        %v5390 = vadd.f32 %v5341, %v5389
        %5391 = vmatmul.bf16.gmra.mxu0 %v4655
        %v5392 = vpop.f32.mrf.mxu0
        %v5393 = vadd.f32 %v5344, %v5392
        %v5394 = vpop.f32.mrf.mxu0
        %v5395 = vadd.f32 %v5346, %v5394
        %5396 = vmatmul.bf16.gmra.mxu0 %v4659
        %v5397 = vpop.f32.mrf.mxu0
        %v5398 = vadd.f32 %v5349, %v5397
        %v5399 = vpop.f32.mrf.mxu0
        %v5400 = vadd.f32 %v5351, %v5399
        %5401 = vmatmul.bf16.gmra.mxu0 %v4663
        %v5402 = vpop.f32.mrf.mxu0
        %v5403 = vadd.f32 %v5354, %v5402
        %v5404 = vpop.f32.mrf.mxu0
        %v5405 = vadd.f32 %v5356, %v5404
        %5406 = vmatmul.bf16.gmra.mxu0 %v4667
        %v5407 = vpop.f32.mrf.mxu0
        %v5408 = vadd.f32 %v5359, %v5407
        %v5409 = vpop.f32.mrf.mxu0
        %v5410 = vadd.f32 %v5361, %v5409
        %5411 = vdwg.mxu0
        %v5412 = vpack.c.bf16 %v5373, %v5177
        %v5413 = vpack.c.bf16 %v5375, %v5179
        %v5414 = vpack.c.bf16 %v5378, %v5182
        %v5415 = vpack.c.bf16 %v5380, %v5184
        %v5416 = vpack.c.bf16 %v5383, %v5187
        %v5417 = vpack.c.bf16 %v5385, %v5189
        %v5418 = vpack.c.bf16 %v5388, %v5192
        %v5419 = vpack.c.bf16 %v5390, %v5194
        %v5420 = vpack.c.bf16 %v5393, %v5197
        %v5421 = vpack.c.bf16 %v5395, %v5199
        %v5422 = vpack.c.bf16 %v5398, %v5202
        %v5423 = vpack.c.bf16 %v5400, %v5204
        %v5424 = vpack.c.bf16 %v5403, %v5207
        %v5425 = vpack.c.bf16 %v5405, %v5209
        %v5426 = vpack.c.bf16 %v5408, %v5212
        %v5427 = vpack.c.bf16 %v5410, %v5214
        %5428 = vst [vmem:[%s266] sm:$0xff] %v5412
        %5429 = vst [vmem:[%s266 + $0x8] sm:$0xff] %v5413
        %5430 = vst [vmem:[%s266 + $0x10] sm:$0xff] %v5414
        %5431 = vst [vmem:[%s266 + $0x18] sm:$0xff] %v5415
        %5432 = vst [vmem:[%s266 + $0x20] sm:$0xff] %v5416
        %5433 = vst [vmem:[%s266 + $0x28] sm:$0xff] %v5417
        %5434 = vst [vmem:[%s266 + $0x30] sm:$0xff] %v5418
        %5435 = vst [vmem:[%s266 + $0x38] sm:$0xff] %v5419
        %5436 = vst [vmem:[%s266 + $0x40] sm:$0xff] %v5420
        %5437 = vst [vmem:[%s266 + $0x48] sm:$0xff] %v5421
        %5438 = vst [vmem:[%s266 + $0x50] sm:$0xff] %v5422
        %5439 = vst [vmem:[%s266 + $0x58] sm:$0xff] %v5423
        %5440 = vst [vmem:[%s266 + $0x60] sm:$0xff] %v5424
        %5441 = vst [vmem:[%s266 + $0x68] sm:$0xff] %v5425
        %5442 = vst [vmem:[%s266 + $0x70] sm:$0xff] %v5426
        %5443 = vst [vmem:[%s266 + $0x78] sm:$0xff] %v5427
        %s5444 = sand.u32 %s120, 1
        %s5445 = scalar_lea.sflag [#allocation5], %s5444
        %s5446 = sand.u32 %s120, 1
        %s5447 = smul.addr %s5446, 128
        %s5448 = scalar_lea.vmem [#allocation11], %s5447
        // Predicated region
        $region53: #{tpu_custom_call.1} parent=35 // pred_check
          %p5449 = pneg %p130
        $region54: #{tpu_custom_call.1} parent=35 // pred_check_branch
          %5451 = sbr.rel (%p5449) target = $region56
        $region55: #{tpu_custom_call.1} parent=35 // pred_region
          %s5452 = smul.u32 8, %s23
          %5454 = vsyncadd %s5445, 0
          %s5455 = smul.addr %s5452, 4
          %s5456 = smul.addr %s5455, 4
          %s5457 = scalar_lea.hbm %s4, %s5456
          %s5458 = sshll.u32 %s5448, 4
          %s5459 = int_to_ptr.vmem [resolvable:$true] %s5458
          %s5460 = sshll.u32 %s5457, 4
          %s5461 = int_to_ptr.hbm [resolvable:$true] %s5460
          %5466 = dma.vmem_to_hbm [thread:$0]  %s5459, 2048, %s5461, %s5445, 128, 128, 8
        $region56: #{tpu_custom_call.1} parent=35 // pred_fallthru
          _
      $region36: #{tpu_custom_call.1} parent=5 // pred_fallthru
        _
      %p5467 = scmp.le.s32.totalorder 2, %s18
      // Predicated region
      $region57: #{tpu_custom_call.1} parent=5 // pred_check
        %p5468 = pneg %p5467
      $region58: #{tpu_custom_call.1} parent=5 // pred_check_branch
        %5470 = sbr.rel (%p5468) target = $region60
      $region59: #{tpu_custom_call.1} parent=5 // pred_region
        %s5471 = ssub.s32 %s18, 2
        // Predicated region
        $region61: #{tpu_custom_call.1} parent=59 // pred_check
          %p5472 = pneg %p136
        $region62: #{tpu_custom_call.1} parent=59 // pred_check_branch
          %5474 = sbr.rel (%p5472) target = $region64
        $region63: #{tpu_custom_call.1} parent=59 // pred_region
          %s5475 = sand.u32 %s121, 1
          %s5476 = scalar_lea.sflag [#allocation5], %s5475
          %s5477 = sand.u32 %s121, 1
          %s5478 = smul.addr %s5477, 128
          %s5479 = scalar_lea.vmem [#allocation11], %s5478
          %5481 = dma.done %s5476, 2048
        $region64: #{tpu_custom_call.1} parent=59 // pred_fallthru
          _
      $region60: #{tpu_custom_call.1} parent=5 // pred_fallthru
        _
    $region6: #{tpu_custom_call.1} parent=1 // loop_footer
      %s22 = sadd.s32 1, %s18
    $region7: #{tpu_custom_call.1} parent=1 // loop_footer_branch
      %17 = sbr.rel target = $region3
    $region8: #{tpu_custom_call.1} parent=1 // loop_exit
      _
    %5482 = vsyncpa [#allocation4], 1
    %s5483 = scalar_lea.sflag [#allocation4], 1
    %5484 = vsyncpa %s5483, 1
    %5485 = vsyncpa [#allocation7], 1
    %5486 = vsyncpa [#allocation10], 1
    %5487 = vsyncpa [#allocation5], 1
    %s5488 = scalar_lea.sflag [#allocation5], 1
    %5489 = vsyncpa %s5488, 1

</llo_original>
